<compile_context>
chip_gen: v6e
topology: v6e:2x2x1
jax: 0.10.0
libtpu: 0.0.40
codegen_flags: <defaults>
</compile_context>

<pallas_src>
import functools

import jax
import jax.numpy as jnp
from jax.experimental import pallas as pl
from jax.experimental.pallas import tpu as pltpu

N_IN = 16
H1 = 128
H2 = 64
N_OUT = N_IN


def dnn_kernel(x_ref, w1_ref, b1_ref, w2_ref, b2_ref, w3_ref, b3_ref, o_ref):
    # Layer 1: cast the f32 x tile to bf16 in-kernel (hidden under the input DMA),
    # (tb, 16) bf16 @ (16, 128) bf16 -> f32 acc; bias + ReLU in f32.
    x = x_ref[...].astype(jnp.bfloat16)
    h1 = jnp.dot(x, w1_ref[...], preferred_element_type=jnp.float32)
    h1 = jnp.maximum(h1 + b1_ref[...], 0.0)

    # Layer 2: (tb, 128) bf16 @ (128, 64) bf16 -> f32 acc; bias + ReLU in f32.
    h2 = jnp.dot(h1.astype(jnp.bfloat16), w2_ref[...],
                 preferred_element_type=jnp.float32)
    h2 = jnp.maximum(h2 + b2_ref[...], 0.0)

    # Output layer: (tb, 64) bf16 @ (64, 16) bf16 -> f32; bias + sigmoid on the
    # 16 real columns only (no lane padding).
    out = jnp.dot(h2.astype(jnp.bfloat16), w3_ref[...],
                  preferred_element_type=jnp.float32)
    o_ref[...] = jax.nn.sigmoid(out + b3_ref[...]).astype(o_ref.dtype)


@functools.partial(jax.jit, static_argnames=("tile_b",))
def dnn_forward(x, w1, b1, w2, b2, w3, b3, *, tile_b=1024):
    """x: (B, 16) float32. Weights are (in, out); biases (1, out). Returns (B, 16) f32.

    tile_b ~1024-4096 amortizes the ~0.35 us/grid-step pipeline overhead on this
    HBM-bound kernel; it is clamped so the grid keeps >= 2 steps (both v7x
    TensorCores get sharded work via the "parallel" axis) and so the tile never
    exceeds the (rounded-up) batch.
    """
    B = x.shape[0]

    # Round requested tile down to a multiple of 8 sublanes; keep >= 2 grid steps
    # when B is large enough (half-batch, rounded up to 8); never below 8.
    half_b = max(8, -(-((B + 1) // 2) // 8) * 8)
    tile_b = max(8, min((tile_b // 8) * 8, half_b))
    grid = (pl.cdiv(B, tile_b),)  # ragged last block handled by Pallas; no jnp.pad

    # Weights/biases are tiny; one-time bf16 cast of weights is negligible.
    w1_bf = w1.astype(jnp.bfloat16)
    w2_bf = w2.astype(jnp.bfloat16)
    w3_bf = w3.astype(jnp.bfloat16)
    b1_f = b1.astype(jnp.float32)
    b2_f = b2.astype(jnp.float32)
    b3_f = b3.astype(jnp.float32)

    # Constant block index -> weights/biases stay resident in VMEM across the grid.
    const = lambda shape: pl.BlockSpec(shape, lambda i: (0, 0))

    flops = 2 * B * (N_IN * H1 + H1 * H2 + H2 * N_OUT)
    bytes_accessed = (
        B * N_IN * 4                                # x (f32, read once in-kernel)
        + (N_IN * H1 + H1 * H2 + H2 * N_OUT) * 2    # weights (bf16)
        + (H1 + H2 + N_OUT) * 4                     # biases (f32)
        + B * N_OUT * 4                             # output (f32, un-padded)
    )
    cost = pl.CostEstimate(flops=flops,
                           transcendentals=B * N_OUT,   # sigmoid on real columns only
                           bytes_accessed=bytes_accessed)

    return pl.pallas_call(
        dnn_kernel,
        out_shape=jax.ShapeDtypeStruct((B, N_OUT), jnp.float32),
        grid=grid,
        in_specs=[
            pl.BlockSpec((tile_b, N_IN), lambda i: (i, 0)),  # x tile (f32)
            const((N_IN, H1)),   # w1
            const((1, H1)),      # b1
            const((H1, H2)),     # w2
            const((1, H2)),      # b2
            const((H2, N_OUT)),  # w3
            const((1, N_OUT)),   # b3
        ],
        out_specs=pl.BlockSpec((tile_b, N_OUT), lambda i: (i, 0)),
        compiler_params=pltpu.CompilerParams(
            dimension_semantics=("parallel",)),
        cost_estimate=cost,
    )(x, w1_bf, b1_f, w2_bf, b2_f, w3_bf, b3_f)


def dnn_reference(x, w1, b1, w2, b2, w3, b3):
    """Pure-JAX reference with the same mixed precision as the kernel
    (bf16 matmul operands, f32 accumulation / activations)."""
    bf = jnp.bfloat16
    h1 = jnp.maximum(
        jnp.dot(x.astype(bf), w1.astype(bf),
                preferred_element_type=jnp.float32) + b1, 0.0)
    h2 = jnp.maximum(
        jnp.dot(h1.astype(bf), w2.astype(bf),
                preferred_element_type=jnp.float32) + b2, 0.0)
    return jax.nn.sigmoid(
        jnp.dot(h2.astype(bf), w3.astype(bf),
                preferred_element_type=jnp.float32) + b3)


if __name__ == "__main__":
    key = jax.random.PRNGKey(0)
    kx, k1, k2, k3, k4, k5, k6 = jax.random.split(key, 7)

    # 2 grid steps at tile_b=1024 -> both v7x TensorCores get work; still tiny overall.
    B = 2048
    x = jax.random.normal(kx, (B, N_IN), dtype=jnp.float32)

    # Deterministic parameter init (Linear weights stored as (in, out)).
    w1 = jax.random.normal(k1, (N_IN, H1), dtype=jnp.float32) * 0.1
    b1 = jax.random.normal(k2, (1, H1), dtype=jnp.float32) * 0.1
    w2 = jax.random.normal(k3, (H1, H2), dtype=jnp.float32) * 0.1
    b2 = jax.random.normal(k4, (1, H2), dtype=jnp.float32) * 0.1
    w3 = jax.random.normal(k5, (H2, N_OUT), dtype=jnp.float32) * 0.1
    b3 = jax.random.normal(k6, (1, N_OUT), dtype=jnp.float32) * 0.1

    out = dnn_forward(x, w1, b1, w2, b2, w3, b3)
    out = jax.block_until_ready(out)

    ref = dnn_reference(x, w1, b1, w2, b2, w3, b3)
    assert out.shape == (B, N_OUT)
    assert jnp.allclose(out, ref, atol=2e-5, rtol=2e-5), float(
        jnp.max(jnp.abs(out - ref)))

    print("KERNEL_OK")
</pallas_src>

<mosaic_0001>
module attributes {stable_mosaic.version = 11 : i64} {
  func.func @dnn_kernel(%arg0: i32, %arg1: memref<1024x16xf32, #tpu.memory_space<vmem>>, %arg2: memref<16x128xbf16, #tpu.memory_space<vmem>>, %arg3: memref<1x128xf32, #tpu.memory_space<vmem>>, %arg4: memref<128x64xbf16, #tpu.memory_space<vmem>>, %arg5: memref<1x64xf32, #tpu.memory_space<vmem>>, %arg6: memref<64x16xbf16, #tpu.memory_space<vmem>>, %arg7: memref<1x16xf32, #tpu.memory_space<vmem>>, %arg8: memref<1024x16xf32, #tpu.memory_space<vmem>>) attributes {dimension_semantics = [#tpu.dimension_semantics<parallel>], iteration_bounds = array<i64: 2>, scalar_prefetch = 0 : i64, scratch_operands = 0 : i64, tpu.core_type = #tpu.core_type<tc>, window_params = [{transform_indices = @transform_0, window_bounds = array<i64: 1024, 16>}, {pipeline_mode = #tpu.pipeline_mode<synchronous>, transform_indices = @transform_1, window_bounds = array<i64: 16, 128>}, {pipeline_mode = #tpu.pipeline_mode<synchronous>, transform_indices = @transform_2, window_bounds = array<i64: 1, 128>}, {pipeline_mode = #tpu.pipeline_mode<synchronous>, transform_indices = @transform_3, window_bounds = array<i64: 128, 64>}, {pipeline_mode = #tpu.pipeline_mode<synchronous>, transform_indices = @transform_4, window_bounds = array<i64: 1, 64>}, {pipeline_mode = #tpu.pipeline_mode<synchronous>, transform_indices = @transform_5, window_bounds = array<i64: 64, 16>}, {pipeline_mode = #tpu.pipeline_mode<synchronous>, transform_indices = @transform_6, window_bounds = array<i64: 1, 16>}, {transform_indices = @transform_7, window_bounds = array<i64: 1024, 16>}]} {
    %c0 = arith.constant 0 : index
    %c0_0 = arith.constant 0 : index
    %0 = vector.load %arg1[%c0, %c0_0] : memref<1024x16xf32, #tpu.memory_space<vmem>>, vector<1024x16xf32>
    %1 = arith.truncf %0 : vector<1024x16xf32> to vector<1024x16xbf16>
    %c0_1 = arith.constant 0 : index
    %c0_2 = arith.constant 0 : index
    %2 = vector.load %arg2[%c0_1, %c0_2] : memref<16x128xbf16, #tpu.memory_space<vmem>>, vector<16x128xbf16>
    %cst = arith.constant dense<0.000000e+00> : vector<1024x128xf32>
    %3 = tpu.matmul %1, %2, %cst {dimension_numbers = #tpu.dot_dimension_numbers<[1], [0], [0], [1], [0, 0, 1, 1], [], []>} : vector<1024x16xbf16>, vector<16x128xbf16>, vector<1024x128xf32> -> vector<1024x128xf32>
    %c0_3 = arith.constant 0 : index
    %c0_4 = arith.constant 0 : index
    %4 = vector.load %arg3[%c0_3, %c0_4] : memref<1x128xf32, #tpu.memory_space<vmem>>, vector<1x128xf32>
    %5 = vector.broadcast %4 : vector<1x128xf32> to vector<1024x128xf32>
    %6 = arith.addf %3, %5 : vector<1024x128xf32>
    %cst_5 = arith.constant 0.000000e+00 : f32
    %7 = vector.broadcast %cst_5 : f32 to vector<1024x128xf32>
    %8 = arith.maximumf %6, %7 : vector<1024x128xf32>
    %9 = arith.truncf %8 : vector<1024x128xf32> to vector<1024x128xbf16>
    %c0_6 = arith.constant 0 : index
    %c0_7 = arith.constant 0 : index
    %10 = vector.load %arg4[%c0_6, %c0_7] : memref<128x64xbf16, #tpu.memory_space<vmem>>, vector<128x64xbf16>
    %cst_8 = arith.constant dense<0.000000e+00> : vector<1024x64xf32>
    %11 = tpu.matmul %9, %10, %cst_8 {dimension_numbers = #tpu.dot_dimension_numbers<[1], [0], [0], [1], [0, 0, 1, 1], [], []>} : vector<1024x128xbf16>, vector<128x64xbf16>, vector<1024x64xf32> -> vector<1024x64xf32>
    %c0_9 = arith.constant 0 : index
    %c0_10 = arith.constant 0 : index
    %12 = vector.load %arg5[%c0_9, %c0_10] : memref<1x64xf32, #tpu.memory_space<vmem>>, vector<1x64xf32>
    %13 = vector.broadcast %12 : vector<1x64xf32> to vector<1024x64xf32>
    %14 = arith.addf %11, %13 : vector<1024x64xf32>
    %cst_11 = arith.constant 0.000000e+00 : f32
    %15 = vector.broadcast %cst_11 : f32 to vector<1024x64xf32>
    %16 = arith.maximumf %14, %15 : vector<1024x64xf32>
    %17 = arith.truncf %16 : vector<1024x64xf32> to vector<1024x64xbf16>
    %c0_12 = arith.constant 0 : index
    %c0_13 = arith.constant 0 : index
    %18 = vector.load %arg6[%c0_12, %c0_13] : memref<64x16xbf16, #tpu.memory_space<vmem>>, vector<64x16xbf16>
    %cst_14 = arith.constant dense<0.000000e+00> : vector<1024x16xf32>
    %19 = tpu.matmul %17, %18, %cst_14 {dimension_numbers = #tpu.dot_dimension_numbers<[1], [0], [0], [1], [0, 0, 1, 1], [], []>} : vector<1024x64xbf16>, vector<64x16xbf16>, vector<1024x16xf32> -> vector<1024x16xf32>
    %c0_15 = arith.constant 0 : index
    %c0_16 = arith.constant 0 : index
    %20 = vector.load %arg7[%c0_15, %c0_16] : memref<1x16xf32, #tpu.memory_space<vmem>>, vector<1x16xf32>
    %21 = vector.broadcast %20 : vector<1x16xf32> to vector<1024x16xf32>
    %22 = arith.addf %19, %21 : vector<1024x16xf32>
    %23 = arith.negf %22 : vector<1024x16xf32>
    %24 = math.exp %23 : vector<1024x16xf32>
    %cst_17 = arith.constant 1.000000e+00 : f32
    %25 = vector.broadcast %cst_17 : f32 to vector<1024x16xf32>
    %26 = arith.addf %25, %24 : vector<1024x16xf32>
    %27 = arith.divf %25, %26 : vector<1024x16xf32>
    %c0_18 = arith.constant 0 : index
    %c0_19 = arith.constant 0 : index
    %28 = vector.load %arg8[%c0_18, %c0_19] : memref<1024x16xf32, #tpu.memory_space<vmem>>, vector<1024x16xf32>
    tpu.vector_store %arg8[%c0_18, %c0_19], %27 {strides = array<i32>} : memref<1024x16xf32, #tpu.memory_space<vmem>>, vector<1024x16xf32>,
    return
  }
  func.func @transform_0(%arg0: i32) -> (i32, i32) {
    %c0_i32 = arith.constant 0 : i32
    %c0_i32_0 = arith.constant 0 : i32
    return %arg0, %c0_i32 : i32, i32
  }
  func.func @transform_1(%arg0: i32) -> (i32, i32) {
    %c0_i32 = arith.constant 0 : i32
    %c0_i32_0 = arith.constant 0 : i32
    %c0_i32_1 = arith.constant 0 : i32
    return %c0_i32, %c0_i32_0 : i32, i32
  }
  func.func @transform_2(%arg0: i32) -> (i32, i32) {
    %c0_i32 = arith.constant 0 : i32
    %c0_i32_0 = arith.constant 0 : i32
    %c0_i32_1 = arith.constant 0 : i32
    return %c0_i32, %c0_i32_0 : i32, i32
  }
  func.func @transform_3(%arg0: i32) -> (i32, i32) {
    %c0_i32 = arith.constant 0 : i32
    %c0_i32_0 = arith.constant 0 : i32
    %c0_i32_1 = arith.constant 0 : i32
    return %c0_i32, %c0_i32_0 : i32, i32
  }
  func.func @transform_4(%arg0: i32) -> (i32, i32) {
    %c0_i32 = arith.constant 0 : i32
    %c0_i32_0 = arith.constant 0 : i32
    %c0_i32_1 = arith.constant 0 : i32
    return %c0_i32, %c0_i32_0 : i32, i32
  }
  func.func @transform_5(%arg0: i32) -> (i32, i32) {
    %c0_i32 = arith.constant 0 : i32
    %c0_i32_0 = arith.constant 0 : i32
    %c0_i32_1 = arith.constant 0 : i32
    return %c0_i32, %c0_i32_0 : i32, i32
  }
  func.func @transform_6(%arg0: i32) -> (i32, i32) {
    %c0_i32 = arith.constant 0 : i32
    %c0_i32_0 = arith.constant 0 : i32
    %c0_i32_1 = arith.constant 0 : i32
    return %c0_i32, %c0_i32_0 : i32, i32
  }
  func.func @transform_7(%arg0: i32) -> (i32, i32) {
    %c0_i32 = arith.constant 0 : i32
    %c0_i32_0 = arith.constant 0 : i32
    return %arg0, %c0_i32 : i32, i32
  }
}

</mosaic_0001>

<llo_original>
// kernel: dnn_forward.1
$region0: #{dnn_forward.1}
  #allocation0 [shape = 'u32[]', space=smem, size = 0x4, offset = 0x4, fixed_abs, tag = 'smem constant byte address 0x4 - core index']
  #allocation1 [shape = 'u32[144,128]{1,0:T(1,128)}', space=vmem, size = 0x12000, scoped, tag = 'internal scratch']
  %s0 = inlined_call_operand.vmem [shape: f32[2048,16], index: 0, kind: input, shape index: {}]
  %s1 = inlined_call_operand.vmem [shape: bf16[16,128], index: 1, kind: input, shape index: {}]
  %s2 = inlined_call_operand.vmem [shape: f32[1,128], index: 2, kind: input, shape index: {}]
  %s3 = inlined_call_operand.vmem [shape: bf16[128,64], index: 3, kind: input, shape index: {}]
  %s4 = inlined_call_operand.vmem [shape: f32[1,64], index: 4, kind: input, shape index: {}]
  %s5 = inlined_call_operand.vmem [shape: bf16[64,16], index: 5, kind: input, shape index: {}]
  %s6 = inlined_call_operand.vmem [shape: f32[1,16], index: 6, kind: input, shape index: {}]
  %s7 = inlined_call_operand.vmem [shape: f32[2048,16], index: 7, kind: output, shape index: {}]
  %s8 = sld [smem:[#allocation0]]
  $region61: #{dnn_forward.1} parent=0
    _
  %s10 = ssub.s32 1, %s8
  %s11 = scalar_select 0, %s10, %s8
  loop: start=0, step=1, limit=4
  $region2: #{dnn_forward.1} parent=0 // loop_pre_header
    _
  $region3: #{dnn_forward.1} parent=0 // loop_header
    %s13 = sphi 0, %s17
    %p14 = scmp.ge.s32.totalorder %s13, 4
    %s23 = sphi 0, %s25
    %s26 = sphi 0, %s23
    %s27 = sphi 0, %s26
    %s43 = sphi 0, %s27
    %s47 = sphi 0, %s47
    %s49 = sphi 0, %s47
    %s50 = sphi 0, %s49
    %s64 = sphi 0, %s50
    %s68 = sphi 0, %s68
    %s70 = sphi 0, %s68
    %s71 = sphi 0, %s70
    %s85 = sphi 0, %s71
    %s89 = sphi 0, %s89
    %s91 = sphi 0, %s89
    %s92 = sphi 0, %s91
    %s106 = sphi 0, %s92
    %s110 = sphi 0, %s110
    %s112 = sphi 0, %s110
    %s113 = sphi 0, %s112
    %s127 = sphi 0, %s113
    %s131 = sphi 0, %s131
    %s133 = sphi 0, %s131
    %s134 = sphi 0, %s133
    %s148 = sphi 0, %s134
    %s152 = sphi 0, %s152
    %s154 = sphi 0, %s152
    %s155 = sphi 0, %s154
    %s169 = sphi 0, %s155
    %s175 = sphi 0, %s177
    %s178 = sphi 0, %s175
    %s179 = sphi 0, %s178
    %s195 = sphi 0, %s179
  $region4: #{dnn_forward.1} parent=0 // loop_header_branch
    %16 = sbr.rel (%p14) target = $region8
  $region5: #{dnn_forward.1} parent=0 // loop_body
    %s18 = ssub.s32 %s13, 1
    %s19 = ssub.s32 %s13, 2
    %s20 = sadd.s32 %s13, 1
    %s21 = ssub.s32 %s13, %s20
    %p22 = scmp.eq.s32.totalorder %s21, 0
    %s24 = sadd.s32 %s23, 1
    %s25 = scalar_select %p22, %s23, %s24
    %p28 = pneg %p22
    %p29 = scmp.eq.s32.totalorder %s13, 1
    %p30 = por %p28, %p29
    %p31 = scmp.ne.s32.totalorder %s23, %s26
    %p32 = scmp.eq.s32.totalorder %s13, 0
    %p33 = por %p31, %p32
    %p34 = scmp.ne.s32.totalorder %s23, %s26
    %p35 = scmp.eq.s32.totalorder %s18, 1
    %p36 = por %p34, %p35
    %p37 = scmp.ne.s32.totalorder %s26, %s27
    %p38 = scmp.eq.s32.totalorder %s18, 0
    %p39 = por %p37, %p38
    %p40 = scmp.ne.s32.totalorder %s26, %s27
    %p41 = scmp.eq.s32.totalorder %s19, 1
    %p42 = por %p40, %p41
    %p44 = scmp.ne.s32.totalorder %s27, %s43
    %p45 = scmp.eq.s32.totalorder %s19, 0
    %p46 = por %p44, %p45
    %s48 = sadd.s32 %s47, 1
    %p51 = scmp.eq.s32.totalorder %s13, 1
    %p52 = scmp.ne.s32.totalorder %s47, %s49
    %p53 = scmp.eq.s32.totalorder %s13, 0
    %p54 = por %p52, %p53
    %p55 = scmp.ne.s32.totalorder %s47, %s49
    %p56 = scmp.eq.s32.totalorder %s18, 1
    %p57 = por %p55, %p56
    %p58 = scmp.ne.s32.totalorder %s49, %s50
    %p59 = scmp.eq.s32.totalorder %s18, 0
    %p60 = por %p58, %p59
    %p61 = scmp.ne.s32.totalorder %s49, %s50
    %p62 = scmp.eq.s32.totalorder %s19, 1
    %p63 = por %p61, %p62
    %p65 = scmp.ne.s32.totalorder %s50, %s64
    %p66 = scmp.eq.s32.totalorder %s19, 0
    %p67 = por %p65, %p66
    %s69 = sadd.s32 %s68, 1
    %p72 = scmp.eq.s32.totalorder %s13, 1
    %p73 = scmp.ne.s32.totalorder %s68, %s70
    %p74 = scmp.eq.s32.totalorder %s13, 0
    %p75 = por %p73, %p74
    %p76 = scmp.ne.s32.totalorder %s68, %s70
    %p77 = scmp.eq.s32.totalorder %s18, 1
    %p78 = por %p76, %p77
    %p79 = scmp.ne.s32.totalorder %s70, %s71
    %p80 = scmp.eq.s32.totalorder %s18, 0
    %p81 = por %p79, %p80
    %p82 = scmp.ne.s32.totalorder %s70, %s71
    %p83 = scmp.eq.s32.totalorder %s19, 1
    %p84 = por %p82, %p83
    %p86 = scmp.ne.s32.totalorder %s71, %s85
    %p87 = scmp.eq.s32.totalorder %s19, 0
    %p88 = por %p86, %p87
    %s90 = sadd.s32 %s89, 1
    %p93 = scmp.eq.s32.totalorder %s13, 1
    %p94 = scmp.ne.s32.totalorder %s89, %s91
    %p95 = scmp.eq.s32.totalorder %s13, 0
    %p96 = por %p94, %p95
    %p97 = scmp.ne.s32.totalorder %s89, %s91
    %p98 = scmp.eq.s32.totalorder %s18, 1
    %p99 = por %p97, %p98
    %p100 = scmp.ne.s32.totalorder %s91, %s92
    %p101 = scmp.eq.s32.totalorder %s18, 0
    %p102 = por %p100, %p101
    %p103 = scmp.ne.s32.totalorder %s91, %s92
    %p104 = scmp.eq.s32.totalorder %s19, 1
    %p105 = por %p103, %p104
    %p107 = scmp.ne.s32.totalorder %s92, %s106
    %p108 = scmp.eq.s32.totalorder %s19, 0
    %p109 = por %p107, %p108
    %s111 = sadd.s32 %s110, 1
    %p114 = scmp.eq.s32.totalorder %s13, 1
    %p115 = scmp.ne.s32.totalorder %s110, %s112
    %p116 = scmp.eq.s32.totalorder %s13, 0
    %p117 = por %p115, %p116
    %p118 = scmp.ne.s32.totalorder %s110, %s112
    %p119 = scmp.eq.s32.totalorder %s18, 1
    %p120 = por %p118, %p119
    %p121 = scmp.ne.s32.totalorder %s112, %s113
    %p122 = scmp.eq.s32.totalorder %s18, 0
    %p123 = por %p121, %p122
    %p124 = scmp.ne.s32.totalorder %s112, %s113
    %p125 = scmp.eq.s32.totalorder %s19, 1
    %p126 = por %p124, %p125
    %p128 = scmp.ne.s32.totalorder %s113, %s127
    %p129 = scmp.eq.s32.totalorder %s19, 0
    %p130 = por %p128, %p129
    %s132 = sadd.s32 %s131, 1
    %p135 = scmp.eq.s32.totalorder %s13, 1
    %p136 = scmp.ne.s32.totalorder %s131, %s133
    %p137 = scmp.eq.s32.totalorder %s13, 0
    %p138 = por %p136, %p137
    %p139 = scmp.ne.s32.totalorder %s131, %s133
    %p140 = scmp.eq.s32.totalorder %s18, 1
    %p141 = por %p139, %p140
    %p142 = scmp.ne.s32.totalorder %s133, %s134
    %p143 = scmp.eq.s32.totalorder %s18, 0
    %p144 = por %p142, %p143
    %p145 = scmp.ne.s32.totalorder %s133, %s134
    %p146 = scmp.eq.s32.totalorder %s19, 1
    %p147 = por %p145, %p146
    %p149 = scmp.ne.s32.totalorder %s134, %s148
    %p150 = scmp.eq.s32.totalorder %s19, 0
    %p151 = por %p149, %p150
    %s153 = sadd.s32 %s152, 1
    %p156 = scmp.eq.s32.totalorder %s13, 1
    %p157 = scmp.ne.s32.totalorder %s152, %s154
    %p158 = scmp.eq.s32.totalorder %s13, 0
    %p159 = por %p157, %p158
    %p160 = scmp.ne.s32.totalorder %s152, %s154
    %p161 = scmp.eq.s32.totalorder %s18, 1
    %p162 = por %p160, %p161
    %p163 = scmp.ne.s32.totalorder %s154, %s155
    %p164 = scmp.eq.s32.totalorder %s18, 0
    %p165 = por %p163, %p164
    %p166 = scmp.ne.s32.totalorder %s154, %s155
    %p167 = scmp.eq.s32.totalorder %s19, 1
    %p168 = por %p166, %p167
    %p170 = scmp.ne.s32.totalorder %s155, %s169
    %p171 = scmp.eq.s32.totalorder %s19, 0
    %p172 = por %p170, %p171
    %s173 = ssub.s32 %s13, %s20
    %p174 = scmp.eq.s32.totalorder %s173, 0
    %s176 = sadd.s32 %s175, 1
    %s177 = scalar_select %p174, %s175, %s176
    %p180 = pneg %p174
    %p181 = scmp.eq.s32.totalorder %s13, 1
    %p182 = por %p180, %p181
    %p183 = scmp.ne.s32.totalorder %s175, %s178
    %p184 = scmp.eq.s32.totalorder %s13, 0
    %p185 = por %p183, %p184
    %p186 = scmp.ne.s32.totalorder %s175, %s178
    %p187 = scmp.eq.s32.totalorder %s18, 1
    %p188 = por %p186, %p187
    %p189 = scmp.ne.s32.totalorder %s178, %s179
    %p190 = scmp.eq.s32.totalorder %s18, 0
    %p191 = por %p189, %p190
    %p192 = scmp.ne.s32.totalorder %s178, %s179
    %p193 = scmp.eq.s32.totalorder %s19, 1
    %p194 = por %p192, %p193
    %p196 = scmp.ne.s32.totalorder %s179, %s195
    %p197 = scmp.eq.s32.totalorder %s19, 0
    %p198 = por %p196, %p197
    %p199 = scmp.le.s32.totalorder 1, %s13
    %p200 = scmp.lt.s32.totalorder %s13, 3
    %p201 = pnand %p199, %p200
    %p202 = pneg %p201
    // Predicated region
    $region9: #{dnn_forward.1} parent=5 // pred_check
      _
    $region10: #{dnn_forward.1} parent=5 // pred_check_branch
      %204 = sbr.rel (%p201) target = $region12
    $region11: #{dnn_forward.1} parent=5 // pred_region
      %s205 = ssub.s32 %s13, 1
      // Predicated region
      $region13: #{dnn_forward.1} parent=11 // pred_check
        %p206 = pneg %p60
      $region14: #{dnn_forward.1} parent=11 // pred_check_branch
        %208 = sbr.rel (%p206) target = $region16
      $region15: #{dnn_forward.1} parent=11 // pred_region
        _
      $region16: #{dnn_forward.1} parent=11 // pred_fallthru
        _
      // Predicated region
      $region17: #{dnn_forward.1} parent=11 // pred_check
        %p209 = pneg %p81
      $region18: #{dnn_forward.1} parent=11 // pred_check_branch
        %211 = sbr.rel (%p209) target = $region20
      $region19: #{dnn_forward.1} parent=11 // pred_region
        _
      $region20: #{dnn_forward.1} parent=11 // pred_fallthru
        _
      // Predicated region
      $region21: #{dnn_forward.1} parent=11 // pred_check
        %p212 = pneg %p102
      $region22: #{dnn_forward.1} parent=11 // pred_check_branch
        %214 = sbr.rel (%p212) target = $region24
      $region23: #{dnn_forward.1} parent=11 // pred_region
        _
      $region24: #{dnn_forward.1} parent=11 // pred_fallthru
        _
      // Predicated region
      $region25: #{dnn_forward.1} parent=11 // pred_check
        %p215 = pneg %p123
      $region26: #{dnn_forward.1} parent=11 // pred_check_branch
        %217 = sbr.rel (%p215) target = $region28
      $region27: #{dnn_forward.1} parent=11 // pred_region
        _
      $region28: #{dnn_forward.1} parent=11 // pred_fallthru
        _
      // Predicated region
      $region29: #{dnn_forward.1} parent=11 // pred_check
        %p218 = pneg %p144
      $region30: #{dnn_forward.1} parent=11 // pred_check_branch
        %220 = sbr.rel (%p218) target = $region32
      $region31: #{dnn_forward.1} parent=11 // pred_region
        _
      $region32: #{dnn_forward.1} parent=11 // pred_fallthru
        _
      // Predicated region
      $region33: #{dnn_forward.1} parent=11 // pred_check
        %p221 = pneg %p165
      $region34: #{dnn_forward.1} parent=11 // pred_check_branch
        %223 = sbr.rel (%p221) target = $region36
      $region35: #{dnn_forward.1} parent=11 // pred_region
        _
      $region36: #{dnn_forward.1} parent=11 // pred_fallthru
        _
    $region12: #{dnn_forward.1} parent=5 // pred_fallthru
      _
    %p224 = scmp.lt.s32.totalorder %s13, 2
    // Predicated region
    $region37: #{dnn_forward.1} parent=5 // pred_check
      %p225 = pneg %p224
    $region38: #{dnn_forward.1} parent=5 // pred_check_branch
      %227 = sbr.rel (%p225) target = $region40
    $region39: #{dnn_forward.1} parent=5 // pred_region
      // Predicated region
      $region41: #{dnn_forward.1} parent=39 // pred_check
        %p228 = pneg %p33
      $region42: #{dnn_forward.1} parent=39 // pred_check_branch
        %230 = sbr.rel (%p228) target = $region44
      $region43: #{dnn_forward.1} parent=39 // pred_region
        %s231 = smul.u32 128, %s13
        %p232 = scmp.lt.s32.totalorder %s231, 255
        %s233 = scalar_select %p232, %s231, 255
        %s234 = smul.addr %s233, 8
        %s235 = scalar_lea.vmem %s0, %s234
        %s236 = smul.u32 128, %s13
      $region44: #{dnn_forward.1} parent=39 // pred_fallthru
        _
    $region40: #{dnn_forward.1} parent=5 // pred_fallthru
      _
    %p237 = scmp.le.s32.totalorder 1, %s13
    %p238 = scmp.lt.s32.totalorder %s13, 3
    %p239 = pnand %p237, %p238
    %p240 = pneg %p239
    // Predicated region
    $region45: #{dnn_forward.1} parent=5 // pred_check
      _
    $region46: #{dnn_forward.1} parent=5 // pred_check_branch
      %242 = sbr.rel (%p239) target = $region48
    $region47: #{dnn_forward.1} parent=5 // pred_region
      %s243 = ssub.s32 %s13, 1
      %s244 = smul.u32 128, %s18
      %p245 = scmp.lt.s32.totalorder %s244, 255
      %s246 = scalar_select %p245, %s244, 255
      %s247 = smul.addr %s246, 8
      %s248 = scalar_lea.vmem %s0, %s247
      %p249 = pneg %p39
      %p250 = pneg %p36
      %p251 = pneg %p60
      %p252 = pneg %p57
      %p253 = pneg %p81
      %p254 = pneg %p78
      %p255 = pneg %p102
      %p256 = pneg %p99
      %p257 = pneg %p123
      %p258 = pneg %p120
      %p259 = pneg %p144
      %p260 = pneg %p141
      %p261 = pneg %p165
      %p262 = pneg %p162
      %p263 = pneg %p191
      %p264 = pneg %p188
      %s265 = smul.u32 128, %s18
      %p266 = scmp.lt.s32.totalorder %s265, 255
      %s267 = scalar_select %p266, %s265, 255
      %s268 = smul.addr %s267, 8
      %s269 = scalar_lea.vmem %s7, %s268
      %s270 = smul.u32 128, %s18
      %p271 = scmp.lt.s32.totalorder %s270, 255
      %s272 = scalar_select %p271, %s270, 255
      %s273 = smul.addr %s272, 8
      %s274 = scalar_lea.vmem %s0, %s273
      %s275 = smul.u32 128, %s18
      %s276 = smul.u32 128, %s18
      %p277 = scmp.lt.s32.totalorder %s276, 255
      %s278 = scalar_select %p277, %s276, 255
      %s279 = smul.addr %s278, 8
      %s280 = scalar_lea.vmem %s7, %s279
      %s281 = smul.u32 128, %s18
      %v283 = vld [vmem:[%s274] sm:$0xff]
      %v284 = vld [vmem:[%s274 + $0x8] sm:$0xff]
      %v285 = vld [vmem:[%s274 + $0x10] sm:$0xff]
      %v286 = vld [vmem:[%s274 + $0x18] sm:$0xff]
      %v287 = vld [vmem:[%s274 + $0x20] sm:$0xff]
      %v288 = vld [vmem:[%s274 + $0x28] sm:$0xff]
      %v289 = vld [vmem:[%s274 + $0x30] sm:$0xff]
      %v290 = vld [vmem:[%s274 + $0x38] sm:$0xff]
      %v291 = vld [vmem:[%s274 + $0x40] sm:$0xff]
      %v292 = vld [vmem:[%s274 + $0x48] sm:$0xff]
      %v293 = vld [vmem:[%s274 + $0x50] sm:$0xff]
      %v294 = vld [vmem:[%s274 + $0x58] sm:$0xff]
      %v295 = vld [vmem:[%s274 + $0x60] sm:$0xff]
      %v296 = vld [vmem:[%s274 + $0x68] sm:$0xff]
      %v297 = vld [vmem:[%s274 + $0x70] sm:$0xff]
      %v298 = vld [vmem:[%s274 + $0x78] sm:$0xff]
      %v299 = vld [vmem:[%s274 + $0x80] sm:$0xff]
      %v300 = vld [vmem:[%s274 + $0x88] sm:$0xff]
      %v301 = vld [vmem:[%s274 + $0x90] sm:$0xff]
      %v302 = vld [vmem:[%s274 + $0x98] sm:$0xff]
      %v303 = vld [vmem:[%s274 + $0xa0] sm:$0xff]
      %v304 = vld [vmem:[%s274 + $0xa8] sm:$0xff]
      %v305 = vld [vmem:[%s274 + $0xb0] sm:$0xff]
      %v306 = vld [vmem:[%s274 + $0xb8] sm:$0xff]
      %v307 = vld [vmem:[%s274 + $0xc0] sm:$0xff]
      %v308 = vld [vmem:[%s274 + $0xc8] sm:$0xff]
      %v309 = vld [vmem:[%s274 + $0xd0] sm:$0xff]
      %v310 = vld [vmem:[%s274 + $0xd8] sm:$0xff]
      %v311 = vld [vmem:[%s274 + $0xe0] sm:$0xff]
      %v312 = vld [vmem:[%s274 + $0xe8] sm:$0xff]
      %v313 = vld [vmem:[%s274 + $0xf0] sm:$0xff]
      %v314 = vld [vmem:[%s274 + $0xf8] sm:$0xff]
      %v315 = vld [vmem:[%s274 + $0x100] sm:$0xff]
      %v316 = vld [vmem:[%s274 + $0x108] sm:$0xff]
      %v317 = vld [vmem:[%s274 + $0x110] sm:$0xff]
      %v318 = vld [vmem:[%s274 + $0x118] sm:$0xff]
      %v319 = vld [vmem:[%s274 + $0x120] sm:$0xff]
      %v320 = vld [vmem:[%s274 + $0x128] sm:$0xff]
      %v321 = vld [vmem:[%s274 + $0x130] sm:$0xff]
      %v322 = vld [vmem:[%s274 + $0x138] sm:$0xff]
      %v323 = vld [vmem:[%s274 + $0x140] sm:$0xff]
      %v324 = vld [vmem:[%s274 + $0x148] sm:$0xff]
      %v325 = vld [vmem:[%s274 + $0x150] sm:$0xff]
      %v326 = vld [vmem:[%s274 + $0x158] sm:$0xff]
      %v327 = vld [vmem:[%s274 + $0x160] sm:$0xff]
      %v328 = vld [vmem:[%s274 + $0x168] sm:$0xff]
      %v329 = vld [vmem:[%s274 + $0x170] sm:$0xff]
      %v330 = vld [vmem:[%s274 + $0x178] sm:$0xff]
      %v331 = vld [vmem:[%s274 + $0x180] sm:$0xff]
      %v332 = vld [vmem:[%s274 + $0x188] sm:$0xff]
      %v333 = vld [vmem:[%s274 + $0x190] sm:$0xff]
      %v334 = vld [vmem:[%s274 + $0x198] sm:$0xff]
      %v335 = vld [vmem:[%s274 + $0x1a0] sm:$0xff]
      %v336 = vld [vmem:[%s274 + $0x1a8] sm:$0xff]
      %v337 = vld [vmem:[%s274 + $0x1b0] sm:$0xff]
      %v338 = vld [vmem:[%s274 + $0x1b8] sm:$0xff]
      %v339 = vld [vmem:[%s274 + $0x1c0] sm:$0xff]
      %v340 = vld [vmem:[%s274 + $0x1c8] sm:$0xff]
      %v341 = vld [vmem:[%s274 + $0x1d0] sm:$0xff]
      %v342 = vld [vmem:[%s274 + $0x1d8] sm:$0xff]
      %v343 = vld [vmem:[%s274 + $0x1e0] sm:$0xff]
      %v344 = vld [vmem:[%s274 + $0x1e8] sm:$0xff]
      %v345 = vld [vmem:[%s274 + $0x1f0] sm:$0xff]
      %v346 = vld [vmem:[%s274 + $0x1f8] sm:$0xff]
      %v347 = vld [vmem:[%s274 + $0x200] sm:$0xff]
      %v348 = vld [vmem:[%s274 + $0x208] sm:$0xff]
      %v349 = vld [vmem:[%s274 + $0x210] sm:$0xff]
      %v350 = vld [vmem:[%s274 + $0x218] sm:$0xff]
      %v351 = vld [vmem:[%s274 + $0x220] sm:$0xff]
      %v352 = vld [vmem:[%s274 + $0x228] sm:$0xff]
      %v353 = vld [vmem:[%s274 + $0x230] sm:$0xff]
      %v354 = vld [vmem:[%s274 + $0x238] sm:$0xff]
      %v355 = vld [vmem:[%s274 + $0x240] sm:$0xff]
      %v356 = vld [vmem:[%s274 + $0x248] sm:$0xff]
      %v357 = vld [vmem:[%s274 + $0x250] sm:$0xff]
      %v358 = vld [vmem:[%s274 + $0x258] sm:$0xff]
      %v359 = vld [vmem:[%s274 + $0x260] sm:$0xff]
      %v360 = vld [vmem:[%s274 + $0x268] sm:$0xff]
      %v361 = vld [vmem:[%s274 + $0x270] sm:$0xff]
      %v362 = vld [vmem:[%s274 + $0x278] sm:$0xff]
      %v363 = vld [vmem:[%s274 + $0x280] sm:$0xff]
      %v364 = vld [vmem:[%s274 + $0x288] sm:$0xff]
      %v365 = vld [vmem:[%s274 + $0x290] sm:$0xff]
      %v366 = vld [vmem:[%s274 + $0x298] sm:$0xff]
      %v367 = vld [vmem:[%s274 + $0x2a0] sm:$0xff]
      %v368 = vld [vmem:[%s274 + $0x2a8] sm:$0xff]
      %v369 = vld [vmem:[%s274 + $0x2b0] sm:$0xff]
      %v370 = vld [vmem:[%s274 + $0x2b8] sm:$0xff]
      %v371 = vld [vmem:[%s274 + $0x2c0] sm:$0xff]
      %v372 = vld [vmem:[%s274 + $0x2c8] sm:$0xff]
      %v373 = vld [vmem:[%s274 + $0x2d0] sm:$0xff]
      %v374 = vld [vmem:[%s274 + $0x2d8] sm:$0xff]
      %v375 = vld [vmem:[%s274 + $0x2e0] sm:$0xff]
      %v376 = vld [vmem:[%s274 + $0x2e8] sm:$0xff]
      %v377 = vld [vmem:[%s274 + $0x2f0] sm:$0xff]
      %v378 = vld [vmem:[%s274 + $0x2f8] sm:$0xff]
      %v379 = vld [vmem:[%s274 + $0x300] sm:$0xff]
      %v380 = vld [vmem:[%s274 + $0x308] sm:$0xff]
      %v381 = vld [vmem:[%s274 + $0x310] sm:$0xff]
      %v382 = vld [vmem:[%s274 + $0x318] sm:$0xff]
      %v383 = vld [vmem:[%s274 + $0x320] sm:$0xff]
      %v384 = vld [vmem:[%s274 + $0x328] sm:$0xff]
      %v385 = vld [vmem:[%s274 + $0x330] sm:$0xff]
      %v386 = vld [vmem:[%s274 + $0x338] sm:$0xff]
      %v387 = vld [vmem:[%s274 + $0x340] sm:$0xff]
      %v388 = vld [vmem:[%s274 + $0x348] sm:$0xff]
      %v389 = vld [vmem:[%s274 + $0x350] sm:$0xff]
      %v390 = vld [vmem:[%s274 + $0x358] sm:$0xff]
      %v391 = vld [vmem:[%s274 + $0x360] sm:$0xff]
      %v392 = vld [vmem:[%s274 + $0x368] sm:$0xff]
      %v393 = vld [vmem:[%s274 + $0x370] sm:$0xff]
      %v394 = vld [vmem:[%s274 + $0x378] sm:$0xff]
      %v395 = vld [vmem:[%s274 + $0x380] sm:$0xff]
      %v396 = vld [vmem:[%s274 + $0x388] sm:$0xff]
      %v397 = vld [vmem:[%s274 + $0x390] sm:$0xff]
      %v398 = vld [vmem:[%s274 + $0x398] sm:$0xff]
      %v399 = vld [vmem:[%s274 + $0x3a0] sm:$0xff]
      %v400 = vld [vmem:[%s274 + $0x3a8] sm:$0xff]
      %v401 = vld [vmem:[%s274 + $0x3b0] sm:$0xff]
      %v402 = vld [vmem:[%s274 + $0x3b8] sm:$0xff]
      %v403 = vld [vmem:[%s274 + $0x3c0] sm:$0xff]
      %v404 = vld [vmem:[%s274 + $0x3c8] sm:$0xff]
      %v405 = vld [vmem:[%s274 + $0x3d0] sm:$0xff]
      %v406 = vld [vmem:[%s274 + $0x3d8] sm:$0xff]
      %v407 = vld [vmem:[%s274 + $0x3e0] sm:$0xff]
      %v408 = vld [vmem:[%s274 + $0x3e8] sm:$0xff]
      %v409 = vld [vmem:[%s274 + $0x3f0] sm:$0xff]
      %v410 = vld [vmem:[%s274 + $0x3f8] sm:$0xff]
      %v411 = vpack.c.bf16 %v284, %v283
      %v412 = vpack.c.bf16 %v286, %v285
      %v413 = vpack.c.bf16 %v288, %v287
      %v414 = vpack.c.bf16 %v290, %v289
      %v415 = vpack.c.bf16 %v292, %v291
      %v416 = vpack.c.bf16 %v294, %v293
      %v417 = vpack.c.bf16 %v296, %v295
      %v418 = vpack.c.bf16 %v298, %v297
      %v419 = vpack.c.bf16 %v300, %v299
      %v420 = vpack.c.bf16 %v302, %v301
      %v421 = vpack.c.bf16 %v304, %v303
      %v422 = vpack.c.bf16 %v306, %v305
      %v423 = vpack.c.bf16 %v308, %v307
      %v424 = vpack.c.bf16 %v310, %v309
      %v425 = vpack.c.bf16 %v312, %v311
      %v426 = vpack.c.bf16 %v314, %v313
      %v427 = vpack.c.bf16 %v316, %v315
      %v428 = vpack.c.bf16 %v318, %v317
      %v429 = vpack.c.bf16 %v320, %v319
      %v430 = vpack.c.bf16 %v322, %v321
      %v431 = vpack.c.bf16 %v324, %v323
      %v432 = vpack.c.bf16 %v326, %v325
      %v433 = vpack.c.bf16 %v328, %v327
      %v434 = vpack.c.bf16 %v330, %v329
      %v435 = vpack.c.bf16 %v332, %v331
      %v436 = vpack.c.bf16 %v334, %v333
      %v437 = vpack.c.bf16 %v336, %v335
      %v438 = vpack.c.bf16 %v338, %v337
      %v439 = vpack.c.bf16 %v340, %v339
      %v440 = vpack.c.bf16 %v342, %v341
      %v441 = vpack.c.bf16 %v344, %v343
      %v442 = vpack.c.bf16 %v346, %v345
      %v443 = vpack.c.bf16 %v348, %v347
      %v444 = vpack.c.bf16 %v350, %v349
      %v445 = vpack.c.bf16 %v352, %v351
      %v446 = vpack.c.bf16 %v354, %v353
      %v447 = vpack.c.bf16 %v356, %v355
      %v448 = vpack.c.bf16 %v358, %v357
      %v449 = vpack.c.bf16 %v360, %v359
      %v450 = vpack.c.bf16 %v362, %v361
      %v451 = vpack.c.bf16 %v364, %v363
      %v452 = vpack.c.bf16 %v366, %v365
      %v453 = vpack.c.bf16 %v368, %v367
      %v454 = vpack.c.bf16 %v370, %v369
      %v455 = vpack.c.bf16 %v372, %v371
      %v456 = vpack.c.bf16 %v374, %v373
      %v457 = vpack.c.bf16 %v376, %v375
      %v458 = vpack.c.bf16 %v378, %v377
      %v459 = vpack.c.bf16 %v380, %v379
      %v460 = vpack.c.bf16 %v382, %v381
      %v461 = vpack.c.bf16 %v384, %v383
      %v462 = vpack.c.bf16 %v386, %v385
      %v463 = vpack.c.bf16 %v388, %v387
      %v464 = vpack.c.bf16 %v390, %v389
      %v465 = vpack.c.bf16 %v392, %v391
      %v466 = vpack.c.bf16 %v394, %v393
      %v467 = vpack.c.bf16 %v396, %v395
      %v468 = vpack.c.bf16 %v398, %v397
      %v469 = vpack.c.bf16 %v400, %v399
      %v470 = vpack.c.bf16 %v402, %v401
      %v471 = vpack.c.bf16 %v404, %v403
      %v472 = vpack.c.bf16 %v406, %v405
      %v473 = vpack.c.bf16 %v408, %v407
      %v474 = vpack.c.bf16 %v410, %v409
      %v475 = vld [vmem:[%s1] sm:$0xf]
      %v476 = vld [vmem:[%s1 + $0x4] sm:$0xf]
      %v477 = vld [vmem:[%s2] sm:$0x1]
      %v479 = vlaneseq
      %v480 = vshrl.u32 %v479, 7
      %v481 = vsub.s32 0, %v480
      %v482 = vrot.slane %v477, %v481
      %v486 = vunpack.c.l.b16 %v475
      %v487 = vunpack.c.l.b16 %v476
      %v488 = vpack.c.b16 %v487, %v486
      %vm490 = vcmask 130048
      %v492 = vsel %vm490, %v411, 0
      %v495 = vsel %vm490, %v412, 0
      %v498 = vsel %vm490, %v413, 0
      %v501 = vsel %vm490, %v414, 0
      %v504 = vsel %vm490, %v415, 0
      %v507 = vsel %vm490, %v416, 0
      %v510 = vsel %vm490, %v417, 0
      %v513 = vsel %vm490, %v418, 0
      %v516 = vsel %vm490, %v419, 0
      %v519 = vsel %vm490, %v420, 0
      %v522 = vsel %vm490, %v421, 0
      %v525 = vsel %vm490, %v422, 0
      %v528 = vsel %vm490, %v423, 0
      %v531 = vsel %vm490, %v424, 0
      %v534 = vsel %vm490, %v425, 0
      %v537 = vsel %vm490, %v426, 0
      %v540 = vsel %vm490, %v427, 0
      %v543 = vsel %vm490, %v428, 0
      %v546 = vsel %vm490, %v429, 0
      %v549 = vsel %vm490, %v430, 0
      %v552 = vsel %vm490, %v431, 0
      %v555 = vsel %vm490, %v432, 0
      %v558 = vsel %vm490, %v433, 0
      %v561 = vsel %vm490, %v434, 0
      %v564 = vsel %vm490, %v435, 0
      %v567 = vsel %vm490, %v436, 0
      %v570 = vsel %vm490, %v437, 0
      %v573 = vsel %vm490, %v438, 0
      %v576 = vsel %vm490, %v439, 0
      %v579 = vsel %vm490, %v440, 0
      %v582 = vsel %vm490, %v441, 0
      %v585 = vsel %vm490, %v442, 0
      %v588 = vsel %vm490, %v443, 0
      %v591 = vsel %vm490, %v444, 0
      %v594 = vsel %vm490, %v445, 0
      %v597 = vsel %vm490, %v446, 0
      %v600 = vsel %vm490, %v447, 0
      %v603 = vsel %vm490, %v448, 0
      %v606 = vsel %vm490, %v449, 0
      %v609 = vsel %vm490, %v450, 0
      %v612 = vsel %vm490, %v451, 0
      %v615 = vsel %vm490, %v452, 0
      %v618 = vsel %vm490, %v453, 0
      %v621 = vsel %vm490, %v454, 0
      %v624 = vsel %vm490, %v455, 0
      %v627 = vsel %vm490, %v456, 0
      %v630 = vsel %vm490, %v457, 0
      %v633 = vsel %vm490, %v458, 0
      %v636 = vsel %vm490, %v459, 0
      %v639 = vsel %vm490, %v460, 0
      %v642 = vsel %vm490, %v461, 0
      %v645 = vsel %vm490, %v462, 0
      %v648 = vsel %vm490, %v463, 0
      %v651 = vsel %vm490, %v464, 0
      %v654 = vsel %vm490, %v465, 0
      %v657 = vsel %vm490, %v466, 0
      %v660 = vsel %vm490, %v467, 0
      %v663 = vsel %vm490, %v468, 0
      %v666 = vsel %vm490, %v469, 0
      %v669 = vsel %vm490, %v470, 0
      %v672 = vsel %vm490, %v471, 0
      %v675 = vsel %vm490, %v472, 0
      %v678 = vsel %vm490, %v473, 0
      %v681 = vsel %vm490, %v474, 0
      %683 = vmatprep.subr.bf16.mxu0 0
      %684 = vmatpush1.bf16.msra.mxu0 0
      %685 = vmatprep.subr.bf16.mxu0 0
      %686 = vmatpush1.bf16.msra.mxu0 0
      %687 = vmatprep.subr.bf16.mxu0 0
      %688 = vmatpush1.bf16.msra.mxu0 0
      %689 = vmatprep.subr.bf16.mxu0 0
      %690 = vmatpush1.bf16.msra.mxu0 0
      %691 = vmatprep.subr.bf16.mxu0 0
      %692 = vmatpush1.bf16.msra.mxu0 0
      %693 = vmatprep.subr.bf16.mxu0 0
      %694 = vmatpush1.bf16.msra.mxu0 0
      %695 = vmatprep.subr.bf16.mxu0 0
      %696 = vmatpush1.bf16.msra.mxu0 0
      %697 = vmatprep.subr.bf16.mxu0 0
      %698 = vmatpush1.bf16.msra.mxu0 %v488
      %699 = vmatprep.subr.bf16.mxu0 0
      %700 = vmatpush2.bf16.msra.mxu0 0
      %701 = vmatprep.subr.bf16.mxu0 0
      %702 = vmatpush2.bf16.msra.mxu0 0
      %703 = vmatprep.subr.bf16.mxu0 0
      %704 = vmatpush2.bf16.msra.mxu0 0
      %705 = vmatprep.subr.bf16.mxu0 0
      %706 = vmatpush2.bf16.msra.mxu0 0
      %707 = vmatprep.subr.bf16.mxu0 0
      %708 = vmatpush2.bf16.msra.mxu0 0
      %709 = vmatprep.subr.bf16.mxu0 0
      %710 = vmatpush2.bf16.msra.mxu0 0
      %711 = vmatprep.subr.bf16.mxu0 0
      %712 = vmatpush2.bf16.msra.mxu0 0
      %713 = vmatprep.subr.bf16.mxu0 0
      %714 = vmatpush2.bf16.msra.mxu0 0
      %715 = vmatprep.mubr.bf16.mxu0 0
      %716 = vmatmul.mubr.bf16.gmra.mxu0 %v492
      %v717 = vpop.f32.mrf.mxu0
      %v718 = vadd.f32 %v482, %v717
      %v719 = vpop.f32.mrf.mxu0
      %v720 = vpop.f32.mrf.mxu0
      %v721 = vadd.f32 %v482, %v720
      %v722 = vpop.f32.mrf.mxu0
      %723 = vmatprep.mubr.bf16.mxu0 0
      %724 = vmatmul.mubr.bf16.gmra.mxu0 %v495
      %v725 = vpop.f32.mrf.mxu0
      %v726 = vadd.f32 %v482, %v725
      %v727 = vpop.f32.mrf.mxu0
      %v728 = vpop.f32.mrf.mxu0
      %v729 = vadd.f32 %v482, %v728
      %v730 = vpop.f32.mrf.mxu0
      %731 = vmatprep.mubr.bf16.mxu0 0
      %732 = vmatmul.mubr.bf16.gmra.mxu0 %v498
      %v733 = vpop.f32.mrf.mxu0
      %v734 = vadd.f32 %v482, %v733
      %v735 = vpop.f32.mrf.mxu0
      %v736 = vpop.f32.mrf.mxu0
      %v737 = vadd.f32 %v482, %v736
      %v738 = vpop.f32.mrf.mxu0
      %739 = vmatprep.mubr.bf16.mxu0 0
      %740 = vmatmul.mubr.bf16.gmra.mxu0 %v501
      %v741 = vpop.f32.mrf.mxu0
      %v742 = vadd.f32 %v482, %v741
      %v743 = vpop.f32.mrf.mxu0
      %v744 = vpop.f32.mrf.mxu0
      %v745 = vadd.f32 %v482, %v744
      %v746 = vpop.f32.mrf.mxu0
      %747 = vmatprep.mubr.bf16.mxu0 0
      %748 = vmatmul.mubr.bf16.gmra.mxu0 %v504
      %v749 = vpop.f32.mrf.mxu0
      %v750 = vadd.f32 %v482, %v749
      %v751 = vpop.f32.mrf.mxu0
      %v752 = vpop.f32.mrf.mxu0
      %v753 = vadd.f32 %v482, %v752
      %v754 = vpop.f32.mrf.mxu0
      %755 = vmatprep.mubr.bf16.mxu0 0
      %756 = vmatmul.mubr.bf16.gmra.mxu0 %v507
      %v757 = vpop.f32.mrf.mxu0
      %v758 = vadd.f32 %v482, %v757
      %v759 = vpop.f32.mrf.mxu0
      %v760 = vpop.f32.mrf.mxu0
      %v761 = vadd.f32 %v482, %v760
      %v762 = vpop.f32.mrf.mxu0
      %763 = vmatprep.mubr.bf16.mxu0 0
      %764 = vmatmul.mubr.bf16.gmra.mxu0 %v510
      %v765 = vpop.f32.mrf.mxu0
      %v766 = vadd.f32 %v482, %v765
      %v767 = vpop.f32.mrf.mxu0
      %v768 = vpop.f32.mrf.mxu0
      %v769 = vadd.f32 %v482, %v768
      %v770 = vpop.f32.mrf.mxu0
      %771 = vmatprep.mubr.bf16.mxu0 0
      %772 = vmatmul.mubr.bf16.gmra.mxu0 %v513
      %v773 = vpop.f32.mrf.mxu0
      %v774 = vadd.f32 %v482, %v773
      %v775 = vpop.f32.mrf.mxu0
      %v776 = vpop.f32.mrf.mxu0
      %v777 = vadd.f32 %v482, %v776
      %v778 = vpop.f32.mrf.mxu0
      %779 = vmatprep.mubr.bf16.mxu0 0
      %780 = vmatmul.mubr.bf16.gmra.mxu0 %v516
      %v781 = vpop.f32.mrf.mxu0
      %v782 = vadd.f32 %v482, %v781
      %v783 = vpop.f32.mrf.mxu0
      %v784 = vpop.f32.mrf.mxu0
      %v785 = vadd.f32 %v482, %v784
      %v786 = vpop.f32.mrf.mxu0
      %787 = vmatprep.mubr.bf16.mxu0 0
      %788 = vmatmul.mubr.bf16.gmra.mxu0 %v519
      %v789 = vpop.f32.mrf.mxu0
      %v790 = vadd.f32 %v482, %v789
      %v791 = vpop.f32.mrf.mxu0
      %v792 = vpop.f32.mrf.mxu0
      %v793 = vadd.f32 %v482, %v792
      %v794 = vpop.f32.mrf.mxu0
      %795 = vmatprep.mubr.bf16.mxu0 0
      %796 = vmatmul.mubr.bf16.gmra.mxu0 %v522
      %v797 = vpop.f32.mrf.mxu0
      %v798 = vadd.f32 %v482, %v797
      %v799 = vpop.f32.mrf.mxu0
      %v800 = vpop.f32.mrf.mxu0
      %v801 = vadd.f32 %v482, %v800
      %v802 = vpop.f32.mrf.mxu0
      %803 = vmatprep.mubr.bf16.mxu0 0
      %804 = vmatmul.mubr.bf16.gmra.mxu0 %v525
      %v805 = vpop.f32.mrf.mxu0
      %v806 = vadd.f32 %v482, %v805
      %v807 = vpop.f32.mrf.mxu0
      %v808 = vpop.f32.mrf.mxu0
      %v809 = vadd.f32 %v482, %v808
      %v810 = vpop.f32.mrf.mxu0
      %811 = vmatprep.mubr.bf16.mxu0 0
      %812 = vmatmul.mubr.bf16.gmra.mxu0 %v528
      %v813 = vpop.f32.mrf.mxu0
      %v814 = vadd.f32 %v482, %v813
      %v815 = vpop.f32.mrf.mxu0
      %v816 = vpop.f32.mrf.mxu0
      %v817 = vadd.f32 %v482, %v816
      %v818 = vpop.f32.mrf.mxu0
      %819 = vmatprep.mubr.bf16.mxu0 0
      %820 = vmatmul.mubr.bf16.gmra.mxu0 %v531
      %v821 = vpop.f32.mrf.mxu0
      %v822 = vadd.f32 %v482, %v821
      %v823 = vpop.f32.mrf.mxu0
      %v824 = vpop.f32.mrf.mxu0
      %v825 = vadd.f32 %v482, %v824
      %v826 = vpop.f32.mrf.mxu0
      %827 = vmatprep.mubr.bf16.mxu0 0
      %828 = vmatmul.mubr.bf16.gmra.mxu0 %v534
      %v829 = vpop.f32.mrf.mxu0
      %v830 = vadd.f32 %v482, %v829
      %v831 = vpop.f32.mrf.mxu0
      %v832 = vpop.f32.mrf.mxu0
      %v833 = vadd.f32 %v482, %v832
      %v834 = vpop.f32.mrf.mxu0
      %835 = vmatprep.mubr.bf16.mxu0 0
      %836 = vmatmul.mubr.bf16.gmra.mxu0 %v537
      %v837 = vpop.f32.mrf.mxu0
      %v838 = vadd.f32 %v482, %v837
      %v839 = vpop.f32.mrf.mxu0
      %v840 = vpop.f32.mrf.mxu0
      %v841 = vadd.f32 %v482, %v840
      %v842 = vpop.f32.mrf.mxu0
      %843 = vmatprep.mubr.bf16.mxu0 0
      %844 = vmatmul.mubr.bf16.gmra.mxu0 %v540
      %v845 = vpop.f32.mrf.mxu0
      %v846 = vadd.f32 %v482, %v845
      %v847 = vpop.f32.mrf.mxu0
      %v848 = vpop.f32.mrf.mxu0
      %v849 = vadd.f32 %v482, %v848
      %v850 = vpop.f32.mrf.mxu0
      %851 = vmatprep.mubr.bf16.mxu0 0
      %852 = vmatmul.mubr.bf16.gmra.mxu0 %v543
      %v853 = vpop.f32.mrf.mxu0
      %v854 = vadd.f32 %v482, %v853
      %v855 = vpop.f32.mrf.mxu0
      %v856 = vpop.f32.mrf.mxu0
      %v857 = vadd.f32 %v482, %v856
      %v858 = vpop.f32.mrf.mxu0
      %859 = vmatprep.mubr.bf16.mxu0 0
      %860 = vmatmul.mubr.bf16.gmra.mxu0 %v546
      %v861 = vpop.f32.mrf.mxu0
      %v862 = vadd.f32 %v482, %v861
      %v863 = vpop.f32.mrf.mxu0
      %v864 = vpop.f32.mrf.mxu0
      %v865 = vadd.f32 %v482, %v864
      %v866 = vpop.f32.mrf.mxu0
      %867 = vmatprep.mubr.bf16.mxu0 0
      %868 = vmatmul.mubr.bf16.gmra.mxu0 %v549
      %v869 = vpop.f32.mrf.mxu0
      %v870 = vadd.f32 %v482, %v869
      %v871 = vpop.f32.mrf.mxu0
      %v872 = vpop.f32.mrf.mxu0
      %v873 = vadd.f32 %v482, %v872
      %v874 = vpop.f32.mrf.mxu0
      %875 = vmatprep.mubr.bf16.mxu0 0
      %876 = vmatmul.mubr.bf16.gmra.mxu0 %v552
      %v877 = vpop.f32.mrf.mxu0
      %v878 = vadd.f32 %v482, %v877
      %v879 = vpop.f32.mrf.mxu0
      %v880 = vpop.f32.mrf.mxu0
      %v881 = vadd.f32 %v482, %v880
      %v882 = vpop.f32.mrf.mxu0
      %883 = vmatprep.mubr.bf16.mxu0 0
      %884 = vmatmul.mubr.bf16.gmra.mxu0 %v555
      %v885 = vpop.f32.mrf.mxu0
      %v886 = vadd.f32 %v482, %v885
      %v887 = vpop.f32.mrf.mxu0
      %v888 = vpop.f32.mrf.mxu0
      %v889 = vadd.f32 %v482, %v888
      %v890 = vpop.f32.mrf.mxu0
      %891 = vmatprep.mubr.bf16.mxu0 0
      %892 = vmatmul.mubr.bf16.gmra.mxu0 %v558
      %v893 = vpop.f32.mrf.mxu0
      %v894 = vadd.f32 %v482, %v893
      %v895 = vpop.f32.mrf.mxu0
      %v896 = vpop.f32.mrf.mxu0
      %v897 = vadd.f32 %v482, %v896
      %v898 = vpop.f32.mrf.mxu0
      %899 = vmatprep.mubr.bf16.mxu0 0
      %900 = vmatmul.mubr.bf16.gmra.mxu0 %v561
      %v901 = vpop.f32.mrf.mxu0
      %v902 = vadd.f32 %v482, %v901
      %v903 = vpop.f32.mrf.mxu0
      %v904 = vpop.f32.mrf.mxu0
      %v905 = vadd.f32 %v482, %v904
      %v906 = vpop.f32.mrf.mxu0
      %907 = vmatprep.mubr.bf16.mxu0 0
      %908 = vmatmul.mubr.bf16.gmra.mxu0 %v564
      %v909 = vpop.f32.mrf.mxu0
      %v910 = vadd.f32 %v482, %v909
      %v911 = vpop.f32.mrf.mxu0
      %v912 = vpop.f32.mrf.mxu0
      %v913 = vadd.f32 %v482, %v912
      %v914 = vpop.f32.mrf.mxu0
      %915 = vmatprep.mubr.bf16.mxu0 0
      %916 = vmatmul.mubr.bf16.gmra.mxu0 %v567
      %v917 = vpop.f32.mrf.mxu0
      %v918 = vadd.f32 %v482, %v917
      %v919 = vpop.f32.mrf.mxu0
      %v920 = vpop.f32.mrf.mxu0
      %v921 = vadd.f32 %v482, %v920
      %v922 = vpop.f32.mrf.mxu0
      %923 = vmatprep.mubr.bf16.mxu0 0
      %924 = vmatmul.mubr.bf16.gmra.mxu0 %v570
      %v925 = vpop.f32.mrf.mxu0
      %v926 = vadd.f32 %v482, %v925
      %v927 = vpop.f32.mrf.mxu0
      %v928 = vpop.f32.mrf.mxu0
      %v929 = vadd.f32 %v482, %v928
      %v930 = vpop.f32.mrf.mxu0
      %931 = vmatprep.mubr.bf16.mxu0 0
      %932 = vmatmul.mubr.bf16.gmra.mxu0 %v573
      %v933 = vpop.f32.mrf.mxu0
      %v934 = vadd.f32 %v482, %v933
      %v935 = vpop.f32.mrf.mxu0
      %v936 = vpop.f32.mrf.mxu0
      %v937 = vadd.f32 %v482, %v936
      %v938 = vpop.f32.mrf.mxu0
      %939 = vmatprep.mubr.bf16.mxu0 0
      %940 = vmatmul.mubr.bf16.gmra.mxu0 %v576
      %v941 = vpop.f32.mrf.mxu0
      %v942 = vadd.f32 %v482, %v941
      %v943 = vpop.f32.mrf.mxu0
      %v944 = vpop.f32.mrf.mxu0
      %v945 = vadd.f32 %v482, %v944
      %v946 = vpop.f32.mrf.mxu0
      %947 = vmatprep.mubr.bf16.mxu0 0
      %948 = vmatmul.mubr.bf16.gmra.mxu0 %v579
      %v949 = vpop.f32.mrf.mxu0
      %v950 = vadd.f32 %v482, %v949
      %v951 = vpop.f32.mrf.mxu0
      %v952 = vpop.f32.mrf.mxu0
      %v953 = vadd.f32 %v482, %v952
      %v954 = vpop.f32.mrf.mxu0
      %955 = vmatprep.mubr.bf16.mxu0 0
      %956 = vmatmul.mubr.bf16.gmra.mxu0 %v582
      %v957 = vpop.f32.mrf.mxu0
      %v958 = vadd.f32 %v482, %v957
      %v959 = vpop.f32.mrf.mxu0
      %v960 = vpop.f32.mrf.mxu0
      %v961 = vadd.f32 %v482, %v960
      %v962 = vpop.f32.mrf.mxu0
      %963 = vmatprep.mubr.bf16.mxu0 0
      %964 = vmatmul.mubr.bf16.gmra.mxu0 %v585
      %v965 = vpop.f32.mrf.mxu0
      %v966 = vadd.f32 %v482, %v965
      %v967 = vpop.f32.mrf.mxu0
      %v968 = vpop.f32.mrf.mxu0
      %v969 = vadd.f32 %v482, %v968
      %v970 = vpop.f32.mrf.mxu0
      %971 = vmatprep.mubr.bf16.mxu0 0
      %972 = vmatmul.mubr.bf16.gmra.mxu0 %v588
      %v973 = vpop.f32.mrf.mxu0
      %v974 = vadd.f32 %v482, %v973
      %v975 = vpop.f32.mrf.mxu0
      %v976 = vpop.f32.mrf.mxu0
      %v977 = vadd.f32 %v482, %v976
      %v978 = vpop.f32.mrf.mxu0
      %979 = vmatprep.mubr.bf16.mxu0 0
      %980 = vmatmul.mubr.bf16.gmra.mxu0 %v591
      %v981 = vpop.f32.mrf.mxu0
      %v982 = vadd.f32 %v482, %v981
      %v983 = vpop.f32.mrf.mxu0
      %v984 = vpop.f32.mrf.mxu0
      %v985 = vadd.f32 %v482, %v984
      %v986 = vpop.f32.mrf.mxu0
      %987 = vmatprep.mubr.bf16.mxu0 0
      %988 = vmatmul.mubr.bf16.gmra.mxu0 %v594
      %v989 = vpop.f32.mrf.mxu0
      %v990 = vadd.f32 %v482, %v989
      %v991 = vpop.f32.mrf.mxu0
      %v992 = vpop.f32.mrf.mxu0
      %v993 = vadd.f32 %v482, %v992
      %v994 = vpop.f32.mrf.mxu0
      %995 = vmatprep.mubr.bf16.mxu0 0
      %996 = vmatmul.mubr.bf16.gmra.mxu0 %v597
      %v997 = vpop.f32.mrf.mxu0
      %v998 = vadd.f32 %v482, %v997
      %v999 = vpop.f32.mrf.mxu0
      %v1000 = vpop.f32.mrf.mxu0
      %v1001 = vadd.f32 %v482, %v1000
      %v1002 = vpop.f32.mrf.mxu0
      %1003 = vmatprep.mubr.bf16.mxu0 0
      %1004 = vmatmul.mubr.bf16.gmra.mxu0 %v600
      %v1005 = vpop.f32.mrf.mxu0
      %v1006 = vadd.f32 %v482, %v1005
      %v1007 = vpop.f32.mrf.mxu0
      %v1008 = vpop.f32.mrf.mxu0
      %v1009 = vadd.f32 %v482, %v1008
      %v1010 = vpop.f32.mrf.mxu0
      %1011 = vmatprep.mubr.bf16.mxu0 0
      %1012 = vmatmul.mubr.bf16.gmra.mxu0 %v603
      %v1013 = vpop.f32.mrf.mxu0
      %v1014 = vadd.f32 %v482, %v1013
      %v1015 = vpop.f32.mrf.mxu0
      %v1016 = vpop.f32.mrf.mxu0
      %v1017 = vadd.f32 %v482, %v1016
      %v1018 = vpop.f32.mrf.mxu0
      %1019 = vmatprep.mubr.bf16.mxu0 0
      %1020 = vmatmul.mubr.bf16.gmra.mxu0 %v606
      %v1021 = vpop.f32.mrf.mxu0
      %v1022 = vadd.f32 %v482, %v1021
      %v1023 = vpop.f32.mrf.mxu0
      %v1024 = vpop.f32.mrf.mxu0
      %v1025 = vadd.f32 %v482, %v1024
      %v1026 = vpop.f32.mrf.mxu0
      %1027 = vmatprep.mubr.bf16.mxu0 0
      %1028 = vmatmul.mubr.bf16.gmra.mxu0 %v609
      %v1029 = vpop.f32.mrf.mxu0
      %v1030 = vadd.f32 %v482, %v1029
      %v1031 = vpop.f32.mrf.mxu0
      %v1032 = vpop.f32.mrf.mxu0
      %v1033 = vadd.f32 %v482, %v1032
      %v1034 = vpop.f32.mrf.mxu0
      %1035 = vmatprep.mubr.bf16.mxu0 0
      %1036 = vmatmul.mubr.bf16.gmra.mxu0 %v612
      %v1037 = vpop.f32.mrf.mxu0
      %v1038 = vadd.f32 %v482, %v1037
      %v1039 = vpop.f32.mrf.mxu0
      %v1040 = vpop.f32.mrf.mxu0
      %v1041 = vadd.f32 %v482, %v1040
      %v1042 = vpop.f32.mrf.mxu0
      %1043 = vmatprep.mubr.bf16.mxu0 0
      %1044 = vmatmul.mubr.bf16.gmra.mxu0 %v615
      %v1045 = vpop.f32.mrf.mxu0
      %v1046 = vadd.f32 %v482, %v1045
      %v1047 = vpop.f32.mrf.mxu0
      %v1048 = vpop.f32.mrf.mxu0
      %v1049 = vadd.f32 %v482, %v1048
      %v1050 = vpop.f32.mrf.mxu0
      %1051 = vmatprep.mubr.bf16.mxu0 0
      %1052 = vmatmul.mubr.bf16.gmra.mxu0 %v618
      %v1053 = vpop.f32.mrf.mxu0
      %v1054 = vadd.f32 %v482, %v1053
      %v1055 = vpop.f32.mrf.mxu0
      %v1056 = vpop.f32.mrf.mxu0
      %v1057 = vadd.f32 %v482, %v1056
      %v1058 = vpop.f32.mrf.mxu0
      %1059 = vmatprep.mubr.bf16.mxu0 0
      %1060 = vmatmul.mubr.bf16.gmra.mxu0 %v621
      %v1061 = vpop.f32.mrf.mxu0
      %v1062 = vadd.f32 %v482, %v1061
      %v1063 = vpop.f32.mrf.mxu0
      %v1064 = vpop.f32.mrf.mxu0
      %v1065 = vadd.f32 %v482, %v1064
      %v1066 = vpop.f32.mrf.mxu0
      %1067 = vmatprep.mubr.bf16.mxu0 0
      %1068 = vmatmul.mubr.bf16.gmra.mxu0 %v624
      %v1069 = vpop.f32.mrf.mxu0
      %v1070 = vadd.f32 %v482, %v1069
      %v1071 = vpop.f32.mrf.mxu0
      %v1072 = vpop.f32.mrf.mxu0
      %v1073 = vadd.f32 %v482, %v1072
      %v1074 = vpop.f32.mrf.mxu0
      %1075 = vmatprep.mubr.bf16.mxu0 0
      %1076 = vmatmul.mubr.bf16.gmra.mxu0 %v627
      %v1077 = vpop.f32.mrf.mxu0
      %v1078 = vadd.f32 %v482, %v1077
      %v1079 = vpop.f32.mrf.mxu0
      %v1080 = vpop.f32.mrf.mxu0
      %v1081 = vadd.f32 %v482, %v1080
      %v1082 = vpop.f32.mrf.mxu0
      %1083 = vmatprep.mubr.bf16.mxu0 0
      %1084 = vmatmul.mubr.bf16.gmra.mxu0 %v630
      %v1085 = vpop.f32.mrf.mxu0
      %v1086 = vadd.f32 %v482, %v1085
      %v1087 = vpop.f32.mrf.mxu0
      %v1088 = vpop.f32.mrf.mxu0
      %v1089 = vadd.f32 %v482, %v1088
      %v1090 = vpop.f32.mrf.mxu0
      %1091 = vmatprep.mubr.bf16.mxu0 0
      %1092 = vmatmul.mubr.bf16.gmra.mxu0 %v633
      %v1093 = vpop.f32.mrf.mxu0
      %v1094 = vadd.f32 %v482, %v1093
      %v1095 = vpop.f32.mrf.mxu0
      %v1096 = vpop.f32.mrf.mxu0
      %v1097 = vadd.f32 %v482, %v1096
      %v1098 = vpop.f32.mrf.mxu0
      %1099 = vmatprep.mubr.bf16.mxu0 0
      %1100 = vmatmul.mubr.bf16.gmra.mxu0 %v636
      %v1101 = vpop.f32.mrf.mxu0
      %v1102 = vadd.f32 %v482, %v1101
      %v1103 = vpop.f32.mrf.mxu0
      %v1104 = vpop.f32.mrf.mxu0
      %v1105 = vadd.f32 %v482, %v1104
      %v1106 = vpop.f32.mrf.mxu0
      %1107 = vmatprep.mubr.bf16.mxu0 0
      %1108 = vmatmul.mubr.bf16.gmra.mxu0 %v639
      %v1109 = vpop.f32.mrf.mxu0
      %v1110 = vadd.f32 %v482, %v1109
      %v1111 = vpop.f32.mrf.mxu0
      %v1112 = vpop.f32.mrf.mxu0
      %v1113 = vadd.f32 %v482, %v1112
      %v1114 = vpop.f32.mrf.mxu0
      %1115 = vmatprep.mubr.bf16.mxu0 0
      %1116 = vmatmul.mubr.bf16.gmra.mxu0 %v642
      %v1117 = vpop.f32.mrf.mxu0
      %v1118 = vadd.f32 %v482, %v1117
      %v1119 = vpop.f32.mrf.mxu0
      %v1120 = vpop.f32.mrf.mxu0
      %v1121 = vadd.f32 %v482, %v1120
      %v1122 = vpop.f32.mrf.mxu0
      %1123 = vmatprep.mubr.bf16.mxu0 0
      %1124 = vmatmul.mubr.bf16.gmra.mxu0 %v645
      %v1125 = vpop.f32.mrf.mxu0
      %v1126 = vadd.f32 %v482, %v1125
      %v1127 = vpop.f32.mrf.mxu0
      %v1128 = vpop.f32.mrf.mxu0
      %v1129 = vadd.f32 %v482, %v1128
      %v1130 = vpop.f32.mrf.mxu0
      %1131 = vmatprep.mubr.bf16.mxu0 0
      %1132 = vmatmul.mubr.bf16.gmra.mxu0 %v648
      %v1133 = vpop.f32.mrf.mxu0
      %v1134 = vadd.f32 %v482, %v1133
      %v1135 = vpop.f32.mrf.mxu0
      %v1136 = vpop.f32.mrf.mxu0
      %v1137 = vadd.f32 %v482, %v1136
      %v1138 = vpop.f32.mrf.mxu0
      %1139 = vmatprep.mubr.bf16.mxu0 0
      %1140 = vmatmul.mubr.bf16.gmra.mxu0 %v651
      %v1141 = vpop.f32.mrf.mxu0
      %v1142 = vadd.f32 %v482, %v1141
      %v1143 = vpop.f32.mrf.mxu0
      %v1144 = vpop.f32.mrf.mxu0
      %v1145 = vadd.f32 %v482, %v1144
      %v1146 = vpop.f32.mrf.mxu0
      %1147 = vmatprep.mubr.bf16.mxu0 0
      %1148 = vmatmul.mubr.bf16.gmra.mxu0 %v654
      %v1149 = vpop.f32.mrf.mxu0
      %v1150 = vadd.f32 %v482, %v1149
      %v1151 = vpop.f32.mrf.mxu0
      %v1152 = vpop.f32.mrf.mxu0
      %v1153 = vadd.f32 %v482, %v1152
      %v1154 = vpop.f32.mrf.mxu0
      %1155 = vmatprep.mubr.bf16.mxu0 0
      %1156 = vmatmul.mubr.bf16.gmra.mxu0 %v657
      %v1157 = vpop.f32.mrf.mxu0
      %v1158 = vadd.f32 %v482, %v1157
      %v1159 = vpop.f32.mrf.mxu0
      %v1160 = vpop.f32.mrf.mxu0
      %v1161 = vadd.f32 %v482, %v1160
      %v1162 = vpop.f32.mrf.mxu0
      %1163 = vmatprep.mubr.bf16.mxu0 0
      %1164 = vmatmul.mubr.bf16.gmra.mxu0 %v660
      %v1165 = vpop.f32.mrf.mxu0
      %v1166 = vadd.f32 %v482, %v1165
      %v1167 = vpop.f32.mrf.mxu0
      %v1168 = vpop.f32.mrf.mxu0
      %v1169 = vadd.f32 %v482, %v1168
      %v1170 = vpop.f32.mrf.mxu0
      %1171 = vmatprep.mubr.bf16.mxu0 0
      %1172 = vmatmul.mubr.bf16.gmra.mxu0 %v663
      %v1173 = vpop.f32.mrf.mxu0
      %v1174 = vadd.f32 %v482, %v1173
      %v1175 = vpop.f32.mrf.mxu0
      %v1176 = vpop.f32.mrf.mxu0
      %v1177 = vadd.f32 %v482, %v1176
      %v1178 = vpop.f32.mrf.mxu0
      %1179 = vmatprep.mubr.bf16.mxu0 0
      %1180 = vmatmul.mubr.bf16.gmra.mxu0 %v666
      %v1181 = vpop.f32.mrf.mxu0
      %v1182 = vadd.f32 %v482, %v1181
      %v1183 = vpop.f32.mrf.mxu0
      %v1184 = vpop.f32.mrf.mxu0
      %v1185 = vadd.f32 %v482, %v1184
      %v1186 = vpop.f32.mrf.mxu0
      %1187 = vmatprep.mubr.bf16.mxu0 0
      %1188 = vmatmul.mubr.bf16.gmra.mxu0 %v669
      %v1189 = vpop.f32.mrf.mxu0
      %v1190 = vadd.f32 %v482, %v1189
      %v1191 = vpop.f32.mrf.mxu0
      %v1192 = vpop.f32.mrf.mxu0
      %v1193 = vadd.f32 %v482, %v1192
      %v1194 = vpop.f32.mrf.mxu0
      %1195 = vmatprep.mubr.bf16.mxu0 0
      %1196 = vmatmul.mubr.bf16.gmra.mxu0 %v672
      %v1197 = vpop.f32.mrf.mxu0
      %v1198 = vadd.f32 %v482, %v1197
      %v1199 = vpop.f32.mrf.mxu0
      %v1200 = vpop.f32.mrf.mxu0
      %v1201 = vadd.f32 %v482, %v1200
      %v1202 = vpop.f32.mrf.mxu0
      %1203 = vmatprep.mubr.bf16.mxu0 0
      %1204 = vmatmul.mubr.bf16.gmra.mxu0 %v675
      %v1205 = vpop.f32.mrf.mxu0
      %v1206 = vadd.f32 %v482, %v1205
      %v1207 = vpop.f32.mrf.mxu0
      %v1208 = vpop.f32.mrf.mxu0
      %v1209 = vadd.f32 %v482, %v1208
      %v1210 = vpop.f32.mrf.mxu0
      %1211 = vmatprep.mubr.bf16.mxu0 0
      %1212 = vmatmul.mubr.bf16.gmra.mxu0 %v678
      %v1213 = vpop.f32.mrf.mxu0
      %v1214 = vadd.f32 %v482, %v1213
      %v1215 = vpop.f32.mrf.mxu0
      %v1216 = vpop.f32.mrf.mxu0
      %v1217 = vadd.f32 %v482, %v1216
      %v1218 = vpop.f32.mrf.mxu0
      %1219 = vmatprep.mubr.bf16.mxu0 0
      %1220 = vmatmul.mubr.bf16.gmra.mxu0 %v681
      %v1221 = vpop.f32.mrf.mxu0
      %v1222 = vadd.f32 %v482, %v1221
      %v1223 = vpop.f32.mrf.mxu0
      %v1224 = vpop.f32.mrf.mxu0
      %v1225 = vadd.f32 %v482, %v1224
      %v1226 = vpop.f32.mrf.mxu0
      %1227 = vdwg.mxu0
      %v1228 = vmax.f32 %v718, 0.0
      %v1229 = vmax.f32 %v721, 0.0
      %v1230 = vmax.f32 %v726, 0.0
      %v1231 = vmax.f32 %v729, 0.0
      %v1232 = vmax.f32 %v734, 0.0
      %v1233 = vmax.f32 %v737, 0.0
      %v1234 = vmax.f32 %v742, 0.0
      %v1235 = vmax.f32 %v745, 0.0
      %v1236 = vmax.f32 %v750, 0.0
      %v1237 = vmax.f32 %v753, 0.0
      %v1238 = vmax.f32 %v758, 0.0
      %v1239 = vmax.f32 %v761, 0.0
      %v1240 = vmax.f32 %v766, 0.0
      %v1241 = vmax.f32 %v769, 0.0
      %v1242 = vmax.f32 %v774, 0.0
      %v1243 = vmax.f32 %v777, 0.0
      %v1244 = vmax.f32 %v782, 0.0
      %v1245 = vmax.f32 %v785, 0.0
      %v1246 = vmax.f32 %v790, 0.0
      %v1247 = vmax.f32 %v793, 0.0
      %v1248 = vmax.f32 %v798, 0.0
      %v1249 = vmax.f32 %v801, 0.0
      %v1250 = vmax.f32 %v806, 0.0
      %v1251 = vmax.f32 %v809, 0.0
      %v1252 = vmax.f32 %v814, 0.0
      %v1253 = vmax.f32 %v817, 0.0
      %v1254 = vmax.f32 %v822, 0.0
      %v1255 = vmax.f32 %v825, 0.0
      %v1256 = vmax.f32 %v830, 0.0
      %v1257 = vmax.f32 %v833, 0.0
      %v1258 = vmax.f32 %v838, 0.0
      %v1259 = vmax.f32 %v841, 0.0
      %v1260 = vmax.f32 %v846, 0.0
      %v1261 = vmax.f32 %v849, 0.0
      %v1262 = vmax.f32 %v854, 0.0
      %v1263 = vmax.f32 %v857, 0.0
      %v1264 = vmax.f32 %v862, 0.0
      %v1265 = vmax.f32 %v865, 0.0
      %v1266 = vmax.f32 %v870, 0.0
      %v1267 = vmax.f32 %v873, 0.0
      %v1268 = vmax.f32 %v878, 0.0
      %v1269 = vmax.f32 %v881, 0.0
      %v1270 = vmax.f32 %v886, 0.0
      %v1271 = vmax.f32 %v889, 0.0
      %v1272 = vmax.f32 %v894, 0.0
      %v1273 = vmax.f32 %v897, 0.0
      %v1274 = vmax.f32 %v902, 0.0
      %v1275 = vmax.f32 %v905, 0.0
      %v1276 = vmax.f32 %v910, 0.0
      %v1277 = vmax.f32 %v913, 0.0
      %v1278 = vmax.f32 %v918, 0.0
      %v1279 = vmax.f32 %v921, 0.0
      %v1280 = vmax.f32 %v926, 0.0
      %v1281 = vmax.f32 %v929, 0.0
      %v1282 = vmax.f32 %v934, 0.0
      %v1283 = vmax.f32 %v937, 0.0
      %v1284 = vmax.f32 %v942, 0.0
      %v1285 = vmax.f32 %v945, 0.0
      %v1286 = vmax.f32 %v950, 0.0
      %v1287 = vmax.f32 %v953, 0.0
      %v1288 = vmax.f32 %v958, 0.0
      %v1289 = vmax.f32 %v961, 0.0
      %v1290 = vmax.f32 %v966, 0.0
      %v1291 = vmax.f32 %v969, 0.0
      %v1292 = vmax.f32 %v974, 0.0
      %v1293 = vmax.f32 %v977, 0.0
      %v1294 = vmax.f32 %v982, 0.0
      %v1295 = vmax.f32 %v985, 0.0
      %v1296 = vmax.f32 %v990, 0.0
      %v1297 = vmax.f32 %v993, 0.0
      %v1298 = vmax.f32 %v998, 0.0
      %v1299 = vmax.f32 %v1001, 0.0
      %v1300 = vmax.f32 %v1006, 0.0
      %v1301 = vmax.f32 %v1009, 0.0
      %v1302 = vmax.f32 %v1014, 0.0
      %v1303 = vmax.f32 %v1017, 0.0
      %v1304 = vmax.f32 %v1022, 0.0
      %v1305 = vmax.f32 %v1025, 0.0
      %v1306 = vmax.f32 %v1030, 0.0
      %v1307 = vmax.f32 %v1033, 0.0
      %v1308 = vmax.f32 %v1038, 0.0
      %v1309 = vmax.f32 %v1041, 0.0
      %v1310 = vmax.f32 %v1046, 0.0
      %v1311 = vmax.f32 %v1049, 0.0
      %v1312 = vmax.f32 %v1054, 0.0
      %v1313 = vmax.f32 %v1057, 0.0
      %v1314 = vmax.f32 %v1062, 0.0
      %v1315 = vmax.f32 %v1065, 0.0
      %v1316 = vmax.f32 %v1070, 0.0
      %v1317 = vmax.f32 %v1073, 0.0
      %v1318 = vmax.f32 %v1078, 0.0
      %v1319 = vmax.f32 %v1081, 0.0
      %v1320 = vmax.f32 %v1086, 0.0
      %v1321 = vmax.f32 %v1089, 0.0
      %v1322 = vmax.f32 %v1094, 0.0
      %v1323 = vmax.f32 %v1097, 0.0
      %v1324 = vmax.f32 %v1102, 0.0
      %v1325 = vmax.f32 %v1105, 0.0
      %v1326 = vmax.f32 %v1110, 0.0
      %v1327 = vmax.f32 %v1113, 0.0
      %v1328 = vmax.f32 %v1118, 0.0
      %v1329 = vmax.f32 %v1121, 0.0
      %v1330 = vmax.f32 %v1126, 0.0
      %v1331 = vmax.f32 %v1129, 0.0
      %v1332 = vmax.f32 %v1134, 0.0
      %v1333 = vmax.f32 %v1137, 0.0
      %v1334 = vmax.f32 %v1142, 0.0
      %v1335 = vmax.f32 %v1145, 0.0
      %v1336 = vmax.f32 %v1150, 0.0
      %v1337 = vmax.f32 %v1153, 0.0
      %v1338 = vmax.f32 %v1158, 0.0
      %v1339 = vmax.f32 %v1161, 0.0
      %v1340 = vmax.f32 %v1166, 0.0
      %v1341 = vmax.f32 %v1169, 0.0
      %v1342 = vmax.f32 %v1174, 0.0
      %v1343 = vmax.f32 %v1177, 0.0
      %v1344 = vmax.f32 %v1182, 0.0
      %v1345 = vmax.f32 %v1185, 0.0
      %v1346 = vmax.f32 %v1190, 0.0
      %v1347 = vmax.f32 %v1193, 0.0
      %v1348 = vmax.f32 %v1198, 0.0
      %v1349 = vmax.f32 %v1201, 0.0
      %v1350 = vmax.f32 %v1206, 0.0
      %v1351 = vmax.f32 %v1209, 0.0
      %v1352 = vmax.f32 %v1214, 0.0
      %v1353 = vmax.f32 %v1217, 0.0
      %v1354 = vmax.f32 %v1222, 0.0
      %v1355 = vmax.f32 %v1225, 0.0
      %v1356 = vpack.c.bf16 %v1229, %v1228
      %v1357 = vpack.c.bf16 %v1231, %v1230
      %v1358 = vpack.c.bf16 %v1233, %v1232
      %v1359 = vpack.c.bf16 %v1235, %v1234
      %v1360 = vpack.c.bf16 %v1237, %v1236
      %v1361 = vpack.c.bf16 %v1239, %v1238
      %v1362 = vpack.c.bf16 %v1241, %v1240
      %v1363 = vpack.c.bf16 %v1243, %v1242
      %v1364 = vpack.c.bf16 %v1245, %v1244
      %v1365 = vpack.c.bf16 %v1247, %v1246
      %v1366 = vpack.c.bf16 %v1249, %v1248
      %v1367 = vpack.c.bf16 %v1251, %v1250
      %v1368 = vpack.c.bf16 %v1253, %v1252
      %v1369 = vpack.c.bf16 %v1255, %v1254
      %v1370 = vpack.c.bf16 %v1257, %v1256
      %v1371 = vpack.c.bf16 %v1259, %v1258
      %v1372 = vpack.c.bf16 %v1261, %v1260
      %v1373 = vpack.c.bf16 %v1263, %v1262
      %v1374 = vpack.c.bf16 %v1265, %v1264
      %v1375 = vpack.c.bf16 %v1267, %v1266
      %v1376 = vpack.c.bf16 %v1269, %v1268
      %v1377 = vpack.c.bf16 %v1271, %v1270
      %v1378 = vpack.c.bf16 %v1273, %v1272
      %v1379 = vpack.c.bf16 %v1275, %v1274
      %v1380 = vpack.c.bf16 %v1277, %v1276
      %v1381 = vpack.c.bf16 %v1279, %v1278
      %v1382 = vpack.c.bf16 %v1281, %v1280
      %v1383 = vpack.c.bf16 %v1283, %v1282
      %v1384 = vpack.c.bf16 %v1285, %v1284
      %v1385 = vpack.c.bf16 %v1287, %v1286
      %v1386 = vpack.c.bf16 %v1289, %v1288
      %v1387 = vpack.c.bf16 %v1291, %v1290
      %v1388 = vpack.c.bf16 %v1293, %v1292
      %v1389 = vpack.c.bf16 %v1295, %v1294
      %v1390 = vpack.c.bf16 %v1297, %v1296
      %v1391 = vpack.c.bf16 %v1299, %v1298
      %v1392 = vpack.c.bf16 %v1301, %v1300
      %v1393 = vpack.c.bf16 %v1303, %v1302
      %v1394 = vpack.c.bf16 %v1305, %v1304
      %v1395 = vpack.c.bf16 %v1307, %v1306
      %v1396 = vpack.c.bf16 %v1309, %v1308
      %v1397 = vpack.c.bf16 %v1311, %v1310
      %v1398 = vpack.c.bf16 %v1313, %v1312
      %v1399 = vpack.c.bf16 %v1315, %v1314
      %v1400 = vpack.c.bf16 %v1317, %v1316
      %v1401 = vpack.c.bf16 %v1319, %v1318
      %v1402 = vpack.c.bf16 %v1321, %v1320
      %v1403 = vpack.c.bf16 %v1323, %v1322
      %v1404 = vpack.c.bf16 %v1325, %v1324
      %v1405 = vpack.c.bf16 %v1327, %v1326
      %v1406 = vpack.c.bf16 %v1329, %v1328
      %v1407 = vpack.c.bf16 %v1331, %v1330
      %v1408 = vpack.c.bf16 %v1333, %v1332
      %v1409 = vpack.c.bf16 %v1335, %v1334
      %v1410 = vpack.c.bf16 %v1337, %v1336
      %v1411 = vpack.c.bf16 %v1339, %v1338
      %v1412 = vpack.c.bf16 %v1341, %v1340
      %v1413 = vpack.c.bf16 %v1343, %v1342
      %v1414 = vpack.c.bf16 %v1345, %v1344
      %v1415 = vpack.c.bf16 %v1347, %v1346
      %v1416 = vpack.c.bf16 %v1349, %v1348
      %v1417 = vpack.c.bf16 %v1351, %v1350
      %v1418 = vpack.c.bf16 %v1353, %v1352
      %v1419 = vpack.c.bf16 %v1355, %v1354
      %v1420 = vld [vmem:[%s3] sm:$0xf]
      %v1421 = vld [vmem:[%s3 + $0x4] sm:$0xf]
      %v1422 = vld [vmem:[%s3 + $0x8] sm:$0xf]
      %v1423 = vld [vmem:[%s3 + $0xc] sm:$0xf]
      %v1424 = vld [vmem:[%s3 + $0x10] sm:$0xf]
      %v1425 = vld [vmem:[%s3 + $0x14] sm:$0xf]
      %v1426 = vld [vmem:[%s3 + $0x18] sm:$0xf]
      %v1427 = vld [vmem:[%s3 + $0x1c] sm:$0xf]
      %v1428 = vld [vmem:[%s3 + $0x20] sm:$0xf]
      %v1429 = vld [vmem:[%s3 + $0x24] sm:$0xf]
      %v1430 = vld [vmem:[%s3 + $0x28] sm:$0xf]
      %v1431 = vld [vmem:[%s3 + $0x2c] sm:$0xf]
      %v1432 = vld [vmem:[%s3 + $0x30] sm:$0xf]
      %v1433 = vld [vmem:[%s3 + $0x34] sm:$0xf]
      %v1434 = vld [vmem:[%s3 + $0x38] sm:$0xf]
      %v1435 = vld [vmem:[%s3 + $0x3c] sm:$0xf]
      %v1436 = vld [vmem:[%s4] sm:$0x1]
      %v1438 = vlaneseq
      %v1439 = vshrl.u32 %v1438, 7
      %v1440 = vsub.s32 0, %v1439
      %v1441 = vrot.slane %v1436, %v1440
      %v1459 = vunpack.c.l.b16 %v1420
      %v1460 = vunpack.c.l.b16 %v1421
      %v1461 = vunpack.c.l.b16 %v1422
      %v1462 = vunpack.c.l.b16 %v1423
      %v1463 = vunpack.c.l.b16 %v1424
      %v1464 = vunpack.c.l.b16 %v1425
      %v1465 = vunpack.c.l.b16 %v1426
      %v1466 = vunpack.c.l.b16 %v1427
      %v1467 = vunpack.c.l.b16 %v1428
      %v1468 = vunpack.c.l.b16 %v1429
      %v1469 = vunpack.c.l.b16 %v1430
      %v1470 = vunpack.c.l.b16 %v1431
      %v1471 = vunpack.c.l.b16 %v1432
      %v1472 = vunpack.c.l.b16 %v1433
      %v1473 = vunpack.c.l.b16 %v1434
      %v1474 = vunpack.c.l.b16 %v1435
      %v1475 = vpack.c.b16 %v1460, %v1459
      %v1476 = vpack.c.b16 %v1462, %v1461
      %v1477 = vpack.c.b16 %v1464, %v1463
      %v1478 = vpack.c.b16 %v1466, %v1465
      %v1479 = vpack.c.b16 %v1468, %v1467
      %v1480 = vpack.c.b16 %v1470, %v1469
      %v1481 = vpack.c.b16 %v1472, %v1471
      %v1482 = vpack.c.b16 %v1474, %v1473
      %1491 = vmatprep.subr.bf16.mxu0 0
      %1492 = vmatpush1.bf16.msra.mxu0 %v1482
      %1493 = vmatprep.subr.bf16.mxu0 0
      %1494 = vmatpush1.bf16.msra.mxu0 %v1481
      %1495 = vmatprep.subr.bf16.mxu0 0
      %1496 = vmatpush1.bf16.msra.mxu0 %v1480
      %1497 = vmatprep.subr.bf16.mxu0 0
      %1498 = vmatpush1.bf16.msra.mxu0 %v1479
      %1499 = vmatprep.subr.bf16.mxu0 0
      %1500 = vmatpush1.bf16.msra.mxu0 %v1478
      %1501 = vmatprep.subr.bf16.mxu0 0
      %1502 = vmatpush1.bf16.msra.mxu0 %v1477
      %1503 = vmatprep.subr.bf16.mxu0 0
      %1504 = vmatpush1.bf16.msra.mxu0 %v1476
      %1505 = vmatprep.subr.bf16.mxu0 0
      %1506 = vmatpush1.bf16.msra.mxu0 %v1475
      %1507 = vmatprep.subr.bf16.mxu0 0
      %1508 = vmatpush2.bf16.msra.mxu0 0
      %1509 = vmatprep.subr.bf16.mxu0 0
      %1510 = vmatpush2.bf16.msra.mxu0 0
      %1511 = vmatprep.subr.bf16.mxu0 0
      %1512 = vmatpush2.bf16.msra.mxu0 0
      %1513 = vmatprep.subr.bf16.mxu0 0
      %1514 = vmatpush2.bf16.msra.mxu0 0
      %1515 = vmatprep.subr.bf16.mxu0 0
      %1516 = vmatpush2.bf16.msra.mxu0 0
      %1517 = vmatprep.subr.bf16.mxu0 0
      %1518 = vmatpush2.bf16.msra.mxu0 0
      %1519 = vmatprep.subr.bf16.mxu0 0
      %1520 = vmatpush2.bf16.msra.mxu0 0
      %1521 = vmatprep.subr.bf16.mxu0 0
      %1522 = vmatpush2.bf16.msra.mxu0 0
      %1523 = vmatprep.mubr.bf16.mxu0 0
      %1524 = vmatmul.mubr.bf16.gmra.mxu0 %v1356
      %v1525 = vpop.f32.mrf.mxu0
      %v1526 = vadd.f32 %v1441, %v1525
      %v1527 = vpop.f32.mrf.mxu0
      %v1528 = vpop.f32.mrf.mxu0
      %v1529 = vadd.f32 %v1441, %v1528
      %v1530 = vpop.f32.mrf.mxu0
      %1531 = vmatprep.mubr.bf16.mxu0 0
      %1532 = vmatmul.mubr.bf16.gmra.mxu0 %v1357
      %v1533 = vpop.f32.mrf.mxu0
      %v1534 = vadd.f32 %v1441, %v1533
      %v1535 = vpop.f32.mrf.mxu0
      %v1536 = vpop.f32.mrf.mxu0
      %v1537 = vadd.f32 %v1441, %v1536
      %v1538 = vpop.f32.mrf.mxu0
      %1539 = vmatprep.mubr.bf16.mxu0 0
      %1540 = vmatmul.mubr.bf16.gmra.mxu0 %v1358
      %v1541 = vpop.f32.mrf.mxu0
      %v1542 = vadd.f32 %v1441, %v1541
      %v1543 = vpop.f32.mrf.mxu0
      %v1544 = vpop.f32.mrf.mxu0
      %v1545 = vadd.f32 %v1441, %v1544
      %v1546 = vpop.f32.mrf.mxu0
      %1547 = vmatprep.mubr.bf16.mxu0 0
      %1548 = vmatmul.mubr.bf16.gmra.mxu0 %v1359
      %v1549 = vpop.f32.mrf.mxu0
      %v1550 = vadd.f32 %v1441, %v1549
      %v1551 = vpop.f32.mrf.mxu0
      %v1552 = vpop.f32.mrf.mxu0
      %v1553 = vadd.f32 %v1441, %v1552
      %v1554 = vpop.f32.mrf.mxu0
      %1555 = vmatprep.mubr.bf16.mxu0 0
      %1556 = vmatmul.mubr.bf16.gmra.mxu0 %v1360
      %v1557 = vpop.f32.mrf.mxu0
      %v1558 = vadd.f32 %v1441, %v1557
      %v1559 = vpop.f32.mrf.mxu0
      %v1560 = vpop.f32.mrf.mxu0
      %v1561 = vadd.f32 %v1441, %v1560
      %v1562 = vpop.f32.mrf.mxu0
      %1563 = vmatprep.mubr.bf16.mxu0 0
      %1564 = vmatmul.mubr.bf16.gmra.mxu0 %v1361
      %v1565 = vpop.f32.mrf.mxu0
      %v1566 = vadd.f32 %v1441, %v1565
      %v1567 = vpop.f32.mrf.mxu0
      %v1568 = vpop.f32.mrf.mxu0
      %v1569 = vadd.f32 %v1441, %v1568
      %v1570 = vpop.f32.mrf.mxu0
      %1571 = vmatprep.mubr.bf16.mxu0 0
      %1572 = vmatmul.mubr.bf16.gmra.mxu0 %v1362
      %v1573 = vpop.f32.mrf.mxu0
      %v1574 = vadd.f32 %v1441, %v1573
      %v1575 = vpop.f32.mrf.mxu0
      %v1576 = vpop.f32.mrf.mxu0
      %v1577 = vadd.f32 %v1441, %v1576
      %v1578 = vpop.f32.mrf.mxu0
      %1579 = vmatprep.mubr.bf16.mxu0 0
      %1580 = vmatmul.mubr.bf16.gmra.mxu0 %v1363
      %v1581 = vpop.f32.mrf.mxu0
      %v1582 = vadd.f32 %v1441, %v1581
      %v1583 = vpop.f32.mrf.mxu0
      %v1584 = vpop.f32.mrf.mxu0
      %v1585 = vadd.f32 %v1441, %v1584
      %v1586 = vpop.f32.mrf.mxu0
      %1587 = vmatprep.mubr.bf16.mxu0 0
      %1588 = vmatmul.mubr.bf16.gmra.mxu0 %v1364
      %v1589 = vpop.f32.mrf.mxu0
      %v1590 = vadd.f32 %v1441, %v1589
      %v1591 = vpop.f32.mrf.mxu0
      %v1592 = vpop.f32.mrf.mxu0
      %v1593 = vadd.f32 %v1441, %v1592
      %v1594 = vpop.f32.mrf.mxu0
      %1595 = vmatprep.mubr.bf16.mxu0 0
      %1596 = vmatmul.mubr.bf16.gmra.mxu0 %v1365
      %v1597 = vpop.f32.mrf.mxu0
      %v1598 = vadd.f32 %v1441, %v1597
      %v1599 = vpop.f32.mrf.mxu0
      %v1600 = vpop.f32.mrf.mxu0
      %v1601 = vadd.f32 %v1441, %v1600
      %v1602 = vpop.f32.mrf.mxu0
      %1603 = vmatprep.mubr.bf16.mxu0 0
      %1604 = vmatmul.mubr.bf16.gmra.mxu0 %v1366
      %v1605 = vpop.f32.mrf.mxu0
      %v1606 = vadd.f32 %v1441, %v1605
      %v1607 = vpop.f32.mrf.mxu0
      %v1608 = vpop.f32.mrf.mxu0
      %v1609 = vadd.f32 %v1441, %v1608
      %v1610 = vpop.f32.mrf.mxu0
      %1611 = vmatprep.mubr.bf16.mxu0 0
      %1612 = vmatmul.mubr.bf16.gmra.mxu0 %v1367
      %v1613 = vpop.f32.mrf.mxu0
      %v1614 = vadd.f32 %v1441, %v1613
      %v1615 = vpop.f32.mrf.mxu0
      %v1616 = vpop.f32.mrf.mxu0
      %v1617 = vadd.f32 %v1441, %v1616
      %v1618 = vpop.f32.mrf.mxu0
      %1619 = vmatprep.mubr.bf16.mxu0 0
      %1620 = vmatmul.mubr.bf16.gmra.mxu0 %v1368
      %v1621 = vpop.f32.mrf.mxu0
      %v1622 = vadd.f32 %v1441, %v1621
      %v1623 = vpop.f32.mrf.mxu0
      %v1624 = vpop.f32.mrf.mxu0
      %v1625 = vadd.f32 %v1441, %v1624
      %v1626 = vpop.f32.mrf.mxu0
      %1627 = vmatprep.mubr.bf16.mxu0 0
      %1628 = vmatmul.mubr.bf16.gmra.mxu0 %v1369
      %v1629 = vpop.f32.mrf.mxu0
      %v1630 = vadd.f32 %v1441, %v1629
      %v1631 = vpop.f32.mrf.mxu0
      %v1632 = vpop.f32.mrf.mxu0
      %v1633 = vadd.f32 %v1441, %v1632
      %v1634 = vpop.f32.mrf.mxu0
      %1635 = vmatprep.mubr.bf16.mxu0 0
      %1636 = vmatmul.mubr.bf16.gmra.mxu0 %v1370
      %v1637 = vpop.f32.mrf.mxu0
      %v1638 = vadd.f32 %v1441, %v1637
      %v1639 = vpop.f32.mrf.mxu0
      %v1640 = vpop.f32.mrf.mxu0
      %v1641 = vadd.f32 %v1441, %v1640
      %v1642 = vpop.f32.mrf.mxu0
      %1643 = vmatprep.mubr.bf16.mxu0 0
      %1644 = vmatmul.mubr.bf16.gmra.mxu0 %v1371
      %v1645 = vpop.f32.mrf.mxu0
      %v1646 = vadd.f32 %v1441, %v1645
      %v1647 = vpop.f32.mrf.mxu0
      %v1648 = vpop.f32.mrf.mxu0
      %v1649 = vadd.f32 %v1441, %v1648
      %v1650 = vpop.f32.mrf.mxu0
      %1651 = vmatprep.mubr.bf16.mxu0 0
      %1652 = vmatmul.mubr.bf16.gmra.mxu0 %v1372
      %v1653 = vpop.f32.mrf.mxu0
      %v1654 = vadd.f32 %v1441, %v1653
      %v1655 = vpop.f32.mrf.mxu0
      %v1656 = vpop.f32.mrf.mxu0
      %v1657 = vadd.f32 %v1441, %v1656
      %v1658 = vpop.f32.mrf.mxu0
      %1659 = vmatprep.mubr.bf16.mxu0 0
      %1660 = vmatmul.mubr.bf16.gmra.mxu0 %v1373
      %v1661 = vpop.f32.mrf.mxu0
      %v1662 = vadd.f32 %v1441, %v1661
      %v1663 = vpop.f32.mrf.mxu0
      %v1664 = vpop.f32.mrf.mxu0
      %v1665 = vadd.f32 %v1441, %v1664
      %v1666 = vpop.f32.mrf.mxu0
      %1667 = vmatprep.mubr.bf16.mxu0 0
      %1668 = vmatmul.mubr.bf16.gmra.mxu0 %v1374
      %v1669 = vpop.f32.mrf.mxu0
      %v1670 = vadd.f32 %v1441, %v1669
      %v1671 = vpop.f32.mrf.mxu0
      %v1672 = vpop.f32.mrf.mxu0
      %v1673 = vadd.f32 %v1441, %v1672
      %v1674 = vpop.f32.mrf.mxu0
      %1675 = vmatprep.mubr.bf16.mxu0 0
      %1676 = vmatmul.mubr.bf16.gmra.mxu0 %v1375
      %v1677 = vpop.f32.mrf.mxu0
      %v1678 = vadd.f32 %v1441, %v1677
      %v1679 = vpop.f32.mrf.mxu0
      %v1680 = vpop.f32.mrf.mxu0
      %v1681 = vadd.f32 %v1441, %v1680
      %v1682 = vpop.f32.mrf.mxu0
      %1683 = vmatprep.mubr.bf16.mxu0 0
      %1684 = vmatmul.mubr.bf16.gmra.mxu0 %v1376
      %v1685 = vpop.f32.mrf.mxu0
      %v1686 = vadd.f32 %v1441, %v1685
      %v1687 = vpop.f32.mrf.mxu0
      %v1688 = vpop.f32.mrf.mxu0
      %v1689 = vadd.f32 %v1441, %v1688
      %v1690 = vpop.f32.mrf.mxu0
      %1691 = vmatprep.mubr.bf16.mxu0 0
      %1692 = vmatmul.mubr.bf16.gmra.mxu0 %v1377
      %v1693 = vpop.f32.mrf.mxu0
      %v1694 = vadd.f32 %v1441, %v1693
      %v1695 = vpop.f32.mrf.mxu0
      %v1696 = vpop.f32.mrf.mxu0
      %v1697 = vadd.f32 %v1441, %v1696
      %v1698 = vpop.f32.mrf.mxu0
      %1699 = vmatprep.mubr.bf16.mxu0 0
      %1700 = vmatmul.mubr.bf16.gmra.mxu0 %v1378
      %v1701 = vpop.f32.mrf.mxu0
      %v1702 = vadd.f32 %v1441, %v1701
      %v1703 = vpop.f32.mrf.mxu0
      %v1704 = vpop.f32.mrf.mxu0
      %v1705 = vadd.f32 %v1441, %v1704
      %v1706 = vpop.f32.mrf.mxu0
      %1707 = vmatprep.mubr.bf16.mxu0 0
      %1708 = vmatmul.mubr.bf16.gmra.mxu0 %v1379
      %v1709 = vpop.f32.mrf.mxu0
      %v1710 = vadd.f32 %v1441, %v1709
      %v1711 = vpop.f32.mrf.mxu0
      %v1712 = vpop.f32.mrf.mxu0
      %v1713 = vadd.f32 %v1441, %v1712
      %v1714 = vpop.f32.mrf.mxu0
      %1715 = vmatprep.mubr.bf16.mxu0 0
      %1716 = vmatmul.mubr.bf16.gmra.mxu0 %v1380
      %v1717 = vpop.f32.mrf.mxu0
      %v1718 = vadd.f32 %v1441, %v1717
      %v1719 = vpop.f32.mrf.mxu0
      %v1720 = vpop.f32.mrf.mxu0
      %v1721 = vadd.f32 %v1441, %v1720
      %v1722 = vpop.f32.mrf.mxu0
      %1723 = vmatprep.mubr.bf16.mxu0 0
      %1724 = vmatmul.mubr.bf16.gmra.mxu0 %v1381
      %v1725 = vpop.f32.mrf.mxu0
      %v1726 = vadd.f32 %v1441, %v1725
      %v1727 = vpop.f32.mrf.mxu0
      %v1728 = vpop.f32.mrf.mxu0
      %v1729 = vadd.f32 %v1441, %v1728
      %v1730 = vpop.f32.mrf.mxu0
      %1731 = vmatprep.mubr.bf16.mxu0 0
      %1732 = vmatmul.mubr.bf16.gmra.mxu0 %v1382
      %v1733 = vpop.f32.mrf.mxu0
      %v1734 = vadd.f32 %v1441, %v1733
      %v1735 = vpop.f32.mrf.mxu0
      %v1736 = vpop.f32.mrf.mxu0
      %v1737 = vadd.f32 %v1441, %v1736
      %v1738 = vpop.f32.mrf.mxu0
      %1739 = vmatprep.mubr.bf16.mxu0 0
      %1740 = vmatmul.mubr.bf16.gmra.mxu0 %v1383
      %v1741 = vpop.f32.mrf.mxu0
      %v1742 = vadd.f32 %v1441, %v1741
      %v1743 = vpop.f32.mrf.mxu0
      %v1744 = vpop.f32.mrf.mxu0
      %v1745 = vadd.f32 %v1441, %v1744
      %v1746 = vpop.f32.mrf.mxu0
      %1747 = vmatprep.mubr.bf16.mxu0 0
      %1748 = vmatmul.mubr.bf16.gmra.mxu0 %v1384
      %v1749 = vpop.f32.mrf.mxu0
      %v1750 = vadd.f32 %v1441, %v1749
      %v1751 = vpop.f32.mrf.mxu0
      %v1752 = vpop.f32.mrf.mxu0
      %v1753 = vadd.f32 %v1441, %v1752
      %v1754 = vpop.f32.mrf.mxu0
      %1755 = vmatprep.mubr.bf16.mxu0 0
      %1756 = vmatmul.mubr.bf16.gmra.mxu0 %v1385
      %v1757 = vpop.f32.mrf.mxu0
      %v1758 = vadd.f32 %v1441, %v1757
      %v1759 = vpop.f32.mrf.mxu0
      %v1760 = vpop.f32.mrf.mxu0
      %v1761 = vadd.f32 %v1441, %v1760
      %v1762 = vpop.f32.mrf.mxu0
      %1763 = vmatprep.mubr.bf16.mxu0 0
      %1764 = vmatmul.mubr.bf16.gmra.mxu0 %v1386
      %v1765 = vpop.f32.mrf.mxu0
      %v1766 = vadd.f32 %v1441, %v1765
      %v1767 = vpop.f32.mrf.mxu0
      %v1768 = vpop.f32.mrf.mxu0
      %v1769 = vadd.f32 %v1441, %v1768
      %v1770 = vpop.f32.mrf.mxu0
      %1771 = vmatprep.mubr.bf16.mxu0 0
      %1772 = vmatmul.mubr.bf16.gmra.mxu0 %v1387
      %v1773 = vpop.f32.mrf.mxu0
      %v1774 = vadd.f32 %v1441, %v1773
      %v1775 = vpop.f32.mrf.mxu0
      %v1776 = vpop.f32.mrf.mxu0
      %v1777 = vadd.f32 %v1441, %v1776
      %v1778 = vpop.f32.mrf.mxu0
      %1779 = vmatprep.mubr.bf16.mxu0 0
      %1780 = vmatmul.mubr.bf16.gmra.mxu0 %v1388
      %v1781 = vpop.f32.mrf.mxu0
      %v1782 = vadd.f32 %v1441, %v1781
      %v1783 = vpop.f32.mrf.mxu0
      %v1784 = vpop.f32.mrf.mxu0
      %v1785 = vadd.f32 %v1441, %v1784
      %v1786 = vpop.f32.mrf.mxu0
      %1787 = vmatprep.mubr.bf16.mxu0 0
      %1788 = vmatmul.mubr.bf16.gmra.mxu0 %v1389
      %v1789 = vpop.f32.mrf.mxu0
      %v1790 = vadd.f32 %v1441, %v1789
      %v1791 = vpop.f32.mrf.mxu0
      %v1792 = vpop.f32.mrf.mxu0
      %v1793 = vadd.f32 %v1441, %v1792
      %v1794 = vpop.f32.mrf.mxu0
      %1795 = vmatprep.mubr.bf16.mxu0 0
      %1796 = vmatmul.mubr.bf16.gmra.mxu0 %v1390
      %v1797 = vpop.f32.mrf.mxu0
      %v1798 = vadd.f32 %v1441, %v1797
      %v1799 = vpop.f32.mrf.mxu0
      %v1800 = vpop.f32.mrf.mxu0
      %v1801 = vadd.f32 %v1441, %v1800
      %v1802 = vpop.f32.mrf.mxu0
      %1803 = vmatprep.mubr.bf16.mxu0 0
      %1804 = vmatmul.mubr.bf16.gmra.mxu0 %v1391
      %v1805 = vpop.f32.mrf.mxu0
      %v1806 = vadd.f32 %v1441, %v1805
      %v1807 = vpop.f32.mrf.mxu0
      %v1808 = vpop.f32.mrf.mxu0
      %v1809 = vadd.f32 %v1441, %v1808
      %v1810 = vpop.f32.mrf.mxu0
      %1811 = vmatprep.mubr.bf16.mxu0 0
      %1812 = vmatmul.mubr.bf16.gmra.mxu0 %v1392
      %v1813 = vpop.f32.mrf.mxu0
      %v1814 = vadd.f32 %v1441, %v1813
      %v1815 = vpop.f32.mrf.mxu0
      %v1816 = vpop.f32.mrf.mxu0
      %v1817 = vadd.f32 %v1441, %v1816
      %v1818 = vpop.f32.mrf.mxu0
      %1819 = vmatprep.mubr.bf16.mxu0 0
      %1820 = vmatmul.mubr.bf16.gmra.mxu0 %v1393
      %v1821 = vpop.f32.mrf.mxu0
      %v1822 = vadd.f32 %v1441, %v1821
      %v1823 = vpop.f32.mrf.mxu0
      %v1824 = vpop.f32.mrf.mxu0
      %v1825 = vadd.f32 %v1441, %v1824
      %v1826 = vpop.f32.mrf.mxu0
      %1827 = vmatprep.mubr.bf16.mxu0 0
      %1828 = vmatmul.mubr.bf16.gmra.mxu0 %v1394
      %v1829 = vpop.f32.mrf.mxu0
      %v1830 = vadd.f32 %v1441, %v1829
      %v1831 = vpop.f32.mrf.mxu0
      %v1832 = vpop.f32.mrf.mxu0
      %v1833 = vadd.f32 %v1441, %v1832
      %v1834 = vpop.f32.mrf.mxu0
      %1835 = vmatprep.mubr.bf16.mxu0 0
      %1836 = vmatmul.mubr.bf16.gmra.mxu0 %v1395
      %v1837 = vpop.f32.mrf.mxu0
      %v1838 = vadd.f32 %v1441, %v1837
      %v1839 = vpop.f32.mrf.mxu0
      %v1840 = vpop.f32.mrf.mxu0
      %v1841 = vadd.f32 %v1441, %v1840
      %v1842 = vpop.f32.mrf.mxu0
      %1843 = vmatprep.mubr.bf16.mxu0 0
      %1844 = vmatmul.mubr.bf16.gmra.mxu0 %v1396
      %v1845 = vpop.f32.mrf.mxu0
      %v1846 = vadd.f32 %v1441, %v1845
      %v1847 = vpop.f32.mrf.mxu0
      %v1848 = vpop.f32.mrf.mxu0
      %v1849 = vadd.f32 %v1441, %v1848
      %v1850 = vpop.f32.mrf.mxu0
      %1851 = vmatprep.mubr.bf16.mxu0 0
      %1852 = vmatmul.mubr.bf16.gmra.mxu0 %v1397
      %v1853 = vpop.f32.mrf.mxu0
      %v1854 = vadd.f32 %v1441, %v1853
      %v1855 = vpop.f32.mrf.mxu0
      %v1856 = vpop.f32.mrf.mxu0
      %v1857 = vadd.f32 %v1441, %v1856
      %v1858 = vpop.f32.mrf.mxu0
      %1859 = vmatprep.mubr.bf16.mxu0 0
      %1860 = vmatmul.mubr.bf16.gmra.mxu0 %v1398
      %v1861 = vpop.f32.mrf.mxu0
      %v1862 = vadd.f32 %v1441, %v1861
      %v1863 = vpop.f32.mrf.mxu0
      %v1864 = vpop.f32.mrf.mxu0
      %v1865 = vadd.f32 %v1441, %v1864
      %v1866 = vpop.f32.mrf.mxu0
      %1867 = vmatprep.mubr.bf16.mxu0 0
      %1868 = vmatmul.mubr.bf16.gmra.mxu0 %v1399
      %v1869 = vpop.f32.mrf.mxu0
      %v1870 = vadd.f32 %v1441, %v1869
      %v1871 = vpop.f32.mrf.mxu0
      %v1872 = vpop.f32.mrf.mxu0
      %v1873 = vadd.f32 %v1441, %v1872
      %v1874 = vpop.f32.mrf.mxu0
      %1875 = vmatprep.mubr.bf16.mxu0 0
      %1876 = vmatmul.mubr.bf16.gmra.mxu0 %v1400
      %v1877 = vpop.f32.mrf.mxu0
      %v1878 = vadd.f32 %v1441, %v1877
      %v1879 = vpop.f32.mrf.mxu0
      %v1880 = vpop.f32.mrf.mxu0
      %v1881 = vadd.f32 %v1441, %v1880
      %v1882 = vpop.f32.mrf.mxu0
      %1883 = vmatprep.mubr.bf16.mxu0 0
      %1884 = vmatmul.mubr.bf16.gmra.mxu0 %v1401
      %v1885 = vpop.f32.mrf.mxu0
      %v1886 = vadd.f32 %v1441, %v1885
      %v1887 = vpop.f32.mrf.mxu0
      %v1888 = vpop.f32.mrf.mxu0
      %v1889 = vadd.f32 %v1441, %v1888
      %v1890 = vpop.f32.mrf.mxu0
      %1891 = vmatprep.mubr.bf16.mxu0 0
      %1892 = vmatmul.mubr.bf16.gmra.mxu0 %v1402
      %v1893 = vpop.f32.mrf.mxu0
      %v1894 = vadd.f32 %v1441, %v1893
      %v1895 = vpop.f32.mrf.mxu0
      %v1896 = vpop.f32.mrf.mxu0
      %v1897 = vadd.f32 %v1441, %v1896
      %v1898 = vpop.f32.mrf.mxu0
      %1899 = vmatprep.mubr.bf16.mxu0 0
      %1900 = vmatmul.mubr.bf16.gmra.mxu0 %v1403
      %v1901 = vpop.f32.mrf.mxu0
      %v1902 = vadd.f32 %v1441, %v1901
      %v1903 = vpop.f32.mrf.mxu0
      %v1904 = vpop.f32.mrf.mxu0
      %v1905 = vadd.f32 %v1441, %v1904
      %v1906 = vpop.f32.mrf.mxu0
      %1907 = vmatprep.mubr.bf16.mxu0 0
      %1908 = vmatmul.mubr.bf16.gmra.mxu0 %v1404
      %v1909 = vpop.f32.mrf.mxu0
      %v1910 = vadd.f32 %v1441, %v1909
      %v1911 = vpop.f32.mrf.mxu0
      %v1912 = vpop.f32.mrf.mxu0
      %v1913 = vadd.f32 %v1441, %v1912
      %v1914 = vpop.f32.mrf.mxu0
      %1915 = vmatprep.mubr.bf16.mxu0 0
      %1916 = vmatmul.mubr.bf16.gmra.mxu0 %v1405
      %v1917 = vpop.f32.mrf.mxu0
      %v1918 = vadd.f32 %v1441, %v1917
      %v1919 = vpop.f32.mrf.mxu0
      %v1920 = vpop.f32.mrf.mxu0
      %v1921 = vadd.f32 %v1441, %v1920
      %v1922 = vpop.f32.mrf.mxu0
      %1923 = vmatprep.mubr.bf16.mxu0 0
      %1924 = vmatmul.mubr.bf16.gmra.mxu0 %v1406
      %v1925 = vpop.f32.mrf.mxu0
      %v1926 = vadd.f32 %v1441, %v1925
      %v1927 = vpop.f32.mrf.mxu0
      %v1928 = vpop.f32.mrf.mxu0
      %v1929 = vadd.f32 %v1441, %v1928
      %v1930 = vpop.f32.mrf.mxu0
      %1931 = vmatprep.mubr.bf16.mxu0 0
      %1932 = vmatmul.mubr.bf16.gmra.mxu0 %v1407
      %v1933 = vpop.f32.mrf.mxu0
      %v1934 = vadd.f32 %v1441, %v1933
      %v1935 = vpop.f32.mrf.mxu0
      %v1936 = vpop.f32.mrf.mxu0
      %v1937 = vadd.f32 %v1441, %v1936
      %v1938 = vpop.f32.mrf.mxu0
      %1939 = vmatprep.mubr.bf16.mxu0 0
      %1940 = vmatmul.mubr.bf16.gmra.mxu0 %v1408
      %v1941 = vpop.f32.mrf.mxu0
      %v1942 = vadd.f32 %v1441, %v1941
      %v1943 = vpop.f32.mrf.mxu0
      %v1944 = vpop.f32.mrf.mxu0
      %v1945 = vadd.f32 %v1441, %v1944
      %v1946 = vpop.f32.mrf.mxu0
      %1947 = vmatprep.mubr.bf16.mxu0 0
      %1948 = vmatmul.mubr.bf16.gmra.mxu0 %v1409
      %v1949 = vpop.f32.mrf.mxu0
      %v1950 = vadd.f32 %v1441, %v1949
      %v1951 = vpop.f32.mrf.mxu0
      %v1952 = vpop.f32.mrf.mxu0
      %v1953 = vadd.f32 %v1441, %v1952
      %v1954 = vpop.f32.mrf.mxu0
      %1955 = vmatprep.mubr.bf16.mxu0 0
      %1956 = vmatmul.mubr.bf16.gmra.mxu0 %v1410
      %v1957 = vpop.f32.mrf.mxu0
      %v1958 = vadd.f32 %v1441, %v1957
      %v1959 = vpop.f32.mrf.mxu0
      %v1960 = vpop.f32.mrf.mxu0
      %v1961 = vadd.f32 %v1441, %v1960
      %v1962 = vpop.f32.mrf.mxu0
      %1963 = vmatprep.mubr.bf16.mxu0 0
      %1964 = vmatmul.mubr.bf16.gmra.mxu0 %v1411
      %v1965 = vpop.f32.mrf.mxu0
      %v1966 = vadd.f32 %v1441, %v1965
      %v1967 = vpop.f32.mrf.mxu0
      %v1968 = vpop.f32.mrf.mxu0
      %v1969 = vadd.f32 %v1441, %v1968
      %v1970 = vpop.f32.mrf.mxu0
      %1971 = vmatprep.mubr.bf16.mxu0 0
      %1972 = vmatmul.mubr.bf16.gmra.mxu0 %v1412
      %v1973 = vpop.f32.mrf.mxu0
      %v1974 = vadd.f32 %v1441, %v1973
      %v1975 = vpop.f32.mrf.mxu0
      %v1976 = vpop.f32.mrf.mxu0
      %v1977 = vadd.f32 %v1441, %v1976
      %v1978 = vpop.f32.mrf.mxu0
      %1979 = vmatprep.mubr.bf16.mxu0 0
      %1980 = vmatmul.mubr.bf16.gmra.mxu0 %v1413
      %v1981 = vpop.f32.mrf.mxu0
      %v1982 = vadd.f32 %v1441, %v1981
      %v1983 = vpop.f32.mrf.mxu0
      %v1984 = vpop.f32.mrf.mxu0
      %v1985 = vadd.f32 %v1441, %v1984
      %v1986 = vpop.f32.mrf.mxu0
      %1987 = vmatprep.mubr.bf16.mxu0 0
      %1988 = vmatmul.mubr.bf16.gmra.mxu0 %v1414
      %v1989 = vpop.f32.mrf.mxu0
      %v1990 = vadd.f32 %v1441, %v1989
      %v1991 = vpop.f32.mrf.mxu0
      %v1992 = vpop.f32.mrf.mxu0
      %v1993 = vadd.f32 %v1441, %v1992
      %v1994 = vpop.f32.mrf.mxu0
      %1995 = vmatprep.mubr.bf16.mxu0 0
      %1996 = vmatmul.mubr.bf16.gmra.mxu0 %v1415
      %v1997 = vpop.f32.mrf.mxu0
      %v1998 = vadd.f32 %v1441, %v1997
      %v1999 = vpop.f32.mrf.mxu0
      %v2000 = vpop.f32.mrf.mxu0
      %v2001 = vadd.f32 %v1441, %v2000
      %v2002 = vpop.f32.mrf.mxu0
      %2003 = vmatprep.mubr.bf16.mxu0 0
      %2004 = vmatmul.mubr.bf16.gmra.mxu0 %v1416
      %v2005 = vpop.f32.mrf.mxu0
      %v2006 = vadd.f32 %v1441, %v2005
      %v2007 = vpop.f32.mrf.mxu0
      %v2008 = vpop.f32.mrf.mxu0
      %v2009 = vadd.f32 %v1441, %v2008
      %v2010 = vpop.f32.mrf.mxu0
      %2011 = vmatprep.mubr.bf16.mxu0 0
      %2012 = vmatmul.mubr.bf16.gmra.mxu0 %v1417
      %v2013 = vpop.f32.mrf.mxu0
      %v2014 = vadd.f32 %v1441, %v2013
      %v2015 = vpop.f32.mrf.mxu0
      %v2016 = vpop.f32.mrf.mxu0
      %v2017 = vadd.f32 %v1441, %v2016
      %v2018 = vpop.f32.mrf.mxu0
      %2019 = vmatprep.mubr.bf16.mxu0 0
      %2020 = vmatmul.mubr.bf16.gmra.mxu0 %v1418
      %v2021 = vpop.f32.mrf.mxu0
      %v2022 = vadd.f32 %v1441, %v2021
      %v2023 = vpop.f32.mrf.mxu0
      %v2024 = vpop.f32.mrf.mxu0
      %v2025 = vadd.f32 %v1441, %v2024
      %v2026 = vpop.f32.mrf.mxu0
      %2027 = vmatprep.mubr.bf16.mxu0 0
      %2028 = vmatmul.mubr.bf16.gmra.mxu0 %v1419
      %v2029 = vpop.f32.mrf.mxu0
      %v2030 = vadd.f32 %v1441, %v2029
      %v2031 = vpop.f32.mrf.mxu0
      %v2032 = vpop.f32.mrf.mxu0
      %v2033 = vadd.f32 %v1441, %v2032
      %v2034 = vpop.f32.mrf.mxu0
      %2035 = vdwg.mxu0
      %v2036 = vmax.f32 %v1526, 0.0
      %v2037 = vmax.f32 %v1529, 0.0
      %v2038 = vmax.f32 %v1534, 0.0
      %v2039 = vmax.f32 %v1537, 0.0
      %v2040 = vmax.f32 %v1542, 0.0
      %v2041 = vmax.f32 %v1545, 0.0
      %v2042 = vmax.f32 %v1550, 0.0
      %v2043 = vmax.f32 %v1553, 0.0
      %v2044 = vmax.f32 %v1558, 0.0
      %v2045 = vmax.f32 %v1561, 0.0
      %v2046 = vmax.f32 %v1566, 0.0
      %v2047 = vmax.f32 %v1569, 0.0
      %v2048 = vmax.f32 %v1574, 0.0
      %v2049 = vmax.f32 %v1577, 0.0
      %v2050 = vmax.f32 %v1582, 0.0
      %v2051 = vmax.f32 %v1585, 0.0
      %v2052 = vmax.f32 %v1590, 0.0
      %v2053 = vmax.f32 %v1593, 0.0
      %v2054 = vmax.f32 %v1598, 0.0
      %v2055 = vmax.f32 %v1601, 0.0
      %v2056 = vmax.f32 %v1606, 0.0
      %v2057 = vmax.f32 %v1609, 0.0
      %v2058 = vmax.f32 %v1614, 0.0
      %v2059 = vmax.f32 %v1617, 0.0
      %v2060 = vmax.f32 %v1622, 0.0
      %v2061 = vmax.f32 %v1625, 0.0
      %v2062 = vmax.f32 %v1630, 0.0
      %v2063 = vmax.f32 %v1633, 0.0
      %v2064 = vmax.f32 %v1638, 0.0
      %v2065 = vmax.f32 %v1641, 0.0
      %v2066 = vmax.f32 %v1646, 0.0
      %v2067 = vmax.f32 %v1649, 0.0
      %v2068 = vmax.f32 %v1654, 0.0
      %v2069 = vmax.f32 %v1657, 0.0
      %v2070 = vmax.f32 %v1662, 0.0
      %v2071 = vmax.f32 %v1665, 0.0
      %v2072 = vmax.f32 %v1670, 0.0
      %v2073 = vmax.f32 %v1673, 0.0
      %v2074 = vmax.f32 %v1678, 0.0
      %v2075 = vmax.f32 %v1681, 0.0
      %v2076 = vmax.f32 %v1686, 0.0
      %v2077 = vmax.f32 %v1689, 0.0
      %v2078 = vmax.f32 %v1694, 0.0
      %v2079 = vmax.f32 %v1697, 0.0
      %v2080 = vmax.f32 %v1702, 0.0
      %v2081 = vmax.f32 %v1705, 0.0
      %v2082 = vmax.f32 %v1710, 0.0
      %v2083 = vmax.f32 %v1713, 0.0
      %v2084 = vmax.f32 %v1718, 0.0
      %v2085 = vmax.f32 %v1721, 0.0
      %v2086 = vmax.f32 %v1726, 0.0
      %v2087 = vmax.f32 %v1729, 0.0
      %v2088 = vmax.f32 %v1734, 0.0
      %v2089 = vmax.f32 %v1737, 0.0
      %v2090 = vmax.f32 %v1742, 0.0
      %v2091 = vmax.f32 %v1745, 0.0
      %v2092 = vmax.f32 %v1750, 0.0
      %v2093 = vmax.f32 %v1753, 0.0
      %v2094 = vmax.f32 %v1758, 0.0
      %v2095 = vmax.f32 %v1761, 0.0
      %v2096 = vmax.f32 %v1766, 0.0
      %v2097 = vmax.f32 %v1769, 0.0
      %v2098 = vmax.f32 %v1774, 0.0
      %v2099 = vmax.f32 %v1777, 0.0
      %v2100 = vmax.f32 %v1782, 0.0
      %v2101 = vmax.f32 %v1785, 0.0
      %v2102 = vmax.f32 %v1790, 0.0
      %v2103 = vmax.f32 %v1793, 0.0
      %v2104 = vmax.f32 %v1798, 0.0
      %v2105 = vmax.f32 %v1801, 0.0
      %v2106 = vmax.f32 %v1806, 0.0
      %v2107 = vmax.f32 %v1809, 0.0
      %v2108 = vmax.f32 %v1814, 0.0
      %v2109 = vmax.f32 %v1817, 0.0
      %v2110 = vmax.f32 %v1822, 0.0
      %v2111 = vmax.f32 %v1825, 0.0
      %v2112 = vmax.f32 %v1830, 0.0
      %v2113 = vmax.f32 %v1833, 0.0
      %v2114 = vmax.f32 %v1838, 0.0
      %v2115 = vmax.f32 %v1841, 0.0
      %v2116 = vmax.f32 %v1846, 0.0
      %v2117 = vmax.f32 %v1849, 0.0
      %v2118 = vmax.f32 %v1854, 0.0
      %v2119 = vmax.f32 %v1857, 0.0
      %v2120 = vmax.f32 %v1862, 0.0
      %v2121 = vmax.f32 %v1865, 0.0
      %v2122 = vmax.f32 %v1870, 0.0
      %v2123 = vmax.f32 %v1873, 0.0
      %v2124 = vmax.f32 %v1878, 0.0
      %v2125 = vmax.f32 %v1881, 0.0
      %v2126 = vmax.f32 %v1886, 0.0
      %v2127 = vmax.f32 %v1889, 0.0
      %v2128 = vmax.f32 %v1894, 0.0
      %v2129 = vmax.f32 %v1897, 0.0
      %v2130 = vmax.f32 %v1902, 0.0
      %v2131 = vmax.f32 %v1905, 0.0
      %v2132 = vmax.f32 %v1910, 0.0
      %v2133 = vmax.f32 %v1913, 0.0
      %v2134 = vmax.f32 %v1918, 0.0
      %v2135 = vmax.f32 %v1921, 0.0
      %v2136 = vmax.f32 %v1926, 0.0
      %v2137 = vmax.f32 %v1929, 0.0
      %v2138 = vmax.f32 %v1934, 0.0
      %v2139 = vmax.f32 %v1937, 0.0
      %v2140 = vmax.f32 %v1942, 0.0
      %v2141 = vmax.f32 %v1945, 0.0
      %v2142 = vmax.f32 %v1950, 0.0
      %v2143 = vmax.f32 %v1953, 0.0
      %v2144 = vmax.f32 %v1958, 0.0
      %v2145 = vmax.f32 %v1961, 0.0
      %v2146 = vmax.f32 %v1966, 0.0
      %v2147 = vmax.f32 %v1969, 0.0
      %v2148 = vmax.f32 %v1974, 0.0
      %v2149 = vmax.f32 %v1977, 0.0
      %v2150 = vmax.f32 %v1982, 0.0
      %v2151 = vmax.f32 %v1985, 0.0
      %v2152 = vmax.f32 %v1990, 0.0
      %v2153 = vmax.f32 %v1993, 0.0
      %v2154 = vmax.f32 %v1998, 0.0
      %v2155 = vmax.f32 %v2001, 0.0
      %v2156 = vmax.f32 %v2006, 0.0
      %v2157 = vmax.f32 %v2009, 0.0
      %v2158 = vmax.f32 %v2014, 0.0
      %v2159 = vmax.f32 %v2017, 0.0
      %v2160 = vmax.f32 %v2022, 0.0
      %v2161 = vmax.f32 %v2025, 0.0
      %v2162 = vmax.f32 %v2030, 0.0
      %v2163 = vmax.f32 %v2033, 0.0
      %v2164 = vpack.c.bf16 %v2037, %v2036
      %v2165 = vpack.c.bf16 %v2039, %v2038
      %v2166 = vpack.c.bf16 %v2041, %v2040
      %v2167 = vpack.c.bf16 %v2043, %v2042
      %v2168 = vpack.c.bf16 %v2045, %v2044
      %v2169 = vpack.c.bf16 %v2047, %v2046
      %v2170 = vpack.c.bf16 %v2049, %v2048
      %v2171 = vpack.c.bf16 %v2051, %v2050
      %v2172 = vpack.c.bf16 %v2053, %v2052
      %v2173 = vpack.c.bf16 %v2055, %v2054
      %v2174 = vpack.c.bf16 %v2057, %v2056
      %v2175 = vpack.c.bf16 %v2059, %v2058
      %v2176 = vpack.c.bf16 %v2061, %v2060
      %v2177 = vpack.c.bf16 %v2063, %v2062
      %v2178 = vpack.c.bf16 %v2065, %v2064
      %v2179 = vpack.c.bf16 %v2067, %v2066
      %v2180 = vpack.c.bf16 %v2069, %v2068
      %v2181 = vpack.c.bf16 %v2071, %v2070
      %v2182 = vpack.c.bf16 %v2073, %v2072
      %v2183 = vpack.c.bf16 %v2075, %v2074
      %v2184 = vpack.c.bf16 %v2077, %v2076
      %v2185 = vpack.c.bf16 %v2079, %v2078
      %v2186 = vpack.c.bf16 %v2081, %v2080
      %v2187 = vpack.c.bf16 %v2083, %v2082
      %v2188 = vpack.c.bf16 %v2085, %v2084
      %v2189 = vpack.c.bf16 %v2087, %v2086
      %v2190 = vpack.c.bf16 %v2089, %v2088
      %v2191 = vpack.c.bf16 %v2091, %v2090
      %v2192 = vpack.c.bf16 %v2093, %v2092
      %v2193 = vpack.c.bf16 %v2095, %v2094
      %v2194 = vpack.c.bf16 %v2097, %v2096
      %v2195 = vpack.c.bf16 %v2099, %v2098
      %v2196 = vpack.c.bf16 %v2101, %v2100
      %v2197 = vpack.c.bf16 %v2103, %v2102
      %v2198 = vpack.c.bf16 %v2105, %v2104
      %v2199 = vpack.c.bf16 %v2107, %v2106
      %v2200 = vpack.c.bf16 %v2109, %v2108
      %v2201 = vpack.c.bf16 %v2111, %v2110
      %v2202 = vpack.c.bf16 %v2113, %v2112
      %v2203 = vpack.c.bf16 %v2115, %v2114
      %v2204 = vpack.c.bf16 %v2117, %v2116
      %v2205 = vpack.c.bf16 %v2119, %v2118
      %v2206 = vpack.c.bf16 %v2121, %v2120
      %v2207 = vpack.c.bf16 %v2123, %v2122
      %v2208 = vpack.c.bf16 %v2125, %v2124
      %v2209 = vpack.c.bf16 %v2127, %v2126
      %v2210 = vpack.c.bf16 %v2129, %v2128
      %v2211 = vpack.c.bf16 %v2131, %v2130
      %v2212 = vpack.c.bf16 %v2133, %v2132
      %v2213 = vpack.c.bf16 %v2135, %v2134
      %v2214 = vpack.c.bf16 %v2137, %v2136
      %v2215 = vpack.c.bf16 %v2139, %v2138
      %v2216 = vpack.c.bf16 %v2141, %v2140
      %v2217 = vpack.c.bf16 %v2143, %v2142
      %v2218 = vpack.c.bf16 %v2145, %v2144
      %v2219 = vpack.c.bf16 %v2147, %v2146
      %v2220 = vpack.c.bf16 %v2149, %v2148
      %v2221 = vpack.c.bf16 %v2151, %v2150
      %v2222 = vpack.c.bf16 %v2153, %v2152
      %v2223 = vpack.c.bf16 %v2155, %v2154
      %v2224 = vpack.c.bf16 %v2157, %v2156
      %v2225 = vpack.c.bf16 %v2159, %v2158
      %v2226 = vpack.c.bf16 %v2161, %v2160
      %v2227 = vpack.c.bf16 %v2163, %v2162
      %v2228 = vld [vmem:[%s5] sm:$0xf]
      %v2229 = vld [vmem:[%s5 + $0x4] sm:$0xf]
      %v2230 = vld [vmem:[%s5 + $0x8] sm:$0xf]
      %v2231 = vld [vmem:[%s5 + $0xc] sm:$0xf]
      %v2232 = vld [vmem:[%s5 + $0x10] sm:$0xf]
      %v2233 = vld [vmem:[%s5 + $0x14] sm:$0xf]
      %v2234 = vld [vmem:[%s5 + $0x18] sm:$0xf]
      %v2235 = vld [vmem:[%s5 + $0x1c] sm:$0xf]
      %v2236 = vld [vmem:[%s6] sm:$0x1]
      %v2238 = vlaneseq
      %v2239 = vshrl.u32 %v2238, 7
      %v2240 = vsub.s32 0, %v2239
      %v2241 = vrot.slane %v2236, %v2240
      %v2251 = vunpack.c.l.b16 %v2228
      %v2252 = vunpack.c.l.b16 %v2229
      %v2253 = vunpack.c.l.b16 %v2230
      %v2254 = vunpack.c.l.b16 %v2231
      %v2255 = vunpack.c.l.b16 %v2232
      %v2256 = vunpack.c.l.b16 %v2233
      %v2257 = vunpack.c.l.b16 %v2234
      %v2258 = vunpack.c.l.b16 %v2235
      %v2259 = vpack.c.b16 %v2252, %v2251
      %v2260 = vpack.c.b16 %v2254, %v2253
      %v2261 = vpack.c.b16 %v2256, %v2255
      %v2262 = vpack.c.b16 %v2258, %v2257
      %vm2267 = vcmask 523264
      %v2269 = vsel %vm2267, %v2164, 0
      %v2272 = vsel %vm2267, %v2165, 0
      %v2275 = vsel %vm2267, %v2166, 0
      %v2278 = vsel %vm2267, %v2167, 0
      %v2281 = vsel %vm2267, %v2168, 0
      %v2284 = vsel %vm2267, %v2169, 0
      %v2287 = vsel %vm2267, %v2170, 0
      %v2290 = vsel %vm2267, %v2171, 0
      %v2293 = vsel %vm2267, %v2172, 0
      %v2296 = vsel %vm2267, %v2173, 0
      %v2299 = vsel %vm2267, %v2174, 0
      %v2302 = vsel %vm2267, %v2175, 0
      %v2305 = vsel %vm2267, %v2176, 0
      %v2308 = vsel %vm2267, %v2177, 0
      %v2311 = vsel %vm2267, %v2178, 0
      %v2314 = vsel %vm2267, %v2179, 0
      %v2317 = vsel %vm2267, %v2180, 0
      %v2320 = vsel %vm2267, %v2181, 0
      %v2323 = vsel %vm2267, %v2182, 0
      %v2326 = vsel %vm2267, %v2183, 0
      %v2329 = vsel %vm2267, %v2184, 0
      %v2332 = vsel %vm2267, %v2185, 0
      %v2335 = vsel %vm2267, %v2186, 0
      %v2338 = vsel %vm2267, %v2187, 0
      %v2341 = vsel %vm2267, %v2188, 0
      %v2344 = vsel %vm2267, %v2189, 0
      %v2347 = vsel %vm2267, %v2190, 0
      %v2350 = vsel %vm2267, %v2191, 0
      %v2353 = vsel %vm2267, %v2192, 0
      %v2356 = vsel %vm2267, %v2193, 0
      %v2359 = vsel %vm2267, %v2194, 0
      %v2362 = vsel %vm2267, %v2195, 0
      %v2365 = vsel %vm2267, %v2196, 0
      %v2368 = vsel %vm2267, %v2197, 0
      %v2371 = vsel %vm2267, %v2198, 0
      %v2374 = vsel %vm2267, %v2199, 0
      %v2377 = vsel %vm2267, %v2200, 0
      %v2380 = vsel %vm2267, %v2201, 0
      %v2383 = vsel %vm2267, %v2202, 0
      %v2386 = vsel %vm2267, %v2203, 0
      %v2389 = vsel %vm2267, %v2204, 0
      %v2392 = vsel %vm2267, %v2205, 0
      %v2395 = vsel %vm2267, %v2206, 0
      %v2398 = vsel %vm2267, %v2207, 0
      %v2401 = vsel %vm2267, %v2208, 0
      %v2404 = vsel %vm2267, %v2209, 0
      %v2407 = vsel %vm2267, %v2210, 0
      %v2410 = vsel %vm2267, %v2211, 0
      %v2413 = vsel %vm2267, %v2212, 0
      %v2416 = vsel %vm2267, %v2213, 0
      %v2419 = vsel %vm2267, %v2214, 0
      %v2422 = vsel %vm2267, %v2215, 0
      %v2425 = vsel %vm2267, %v2216, 0
      %v2428 = vsel %vm2267, %v2217, 0
      %v2431 = vsel %vm2267, %v2218, 0
      %v2434 = vsel %vm2267, %v2219, 0
      %v2437 = vsel %vm2267, %v2220, 0
      %v2440 = vsel %vm2267, %v2221, 0
      %v2443 = vsel %vm2267, %v2222, 0
      %v2446 = vsel %vm2267, %v2223, 0
      %v2449 = vsel %vm2267, %v2224, 0
      %v2452 = vsel %vm2267, %v2225, 0
      %v2455 = vsel %vm2267, %v2226, 0
      %v2458 = vsel %vm2267, %v2227, 0
      %2460 = vmatprep.subr.bf16.mxu0 0
      %2461 = vmatpush1.bf16.msra.mxu0 0
      %2462 = vmatprep.subr.bf16.mxu0 0
      %2463 = vmatpush1.bf16.msra.mxu0 0
      %2464 = vmatprep.subr.bf16.mxu0 0
      %2465 = vmatpush1.bf16.msra.mxu0 0
      %2466 = vmatprep.subr.bf16.mxu0 0
      %2467 = vmatpush1.bf16.msra.mxu0 0
      %2468 = vmatprep.subr.bf16.mxu0 0
      %2469 = vmatpush1.bf16.msra.mxu0 %v2262
      %2470 = vmatprep.subr.bf16.mxu0 0
      %2471 = vmatpush1.bf16.msra.mxu0 %v2261
      %2472 = vmatprep.subr.bf16.mxu0 0
      %2473 = vmatpush1.bf16.msra.mxu0 %v2260
      %2474 = vmatprep.subr.bf16.mxu0 0
      %2475 = vmatpush1.bf16.msra.mxu0 %v2259
      %2476 = vmatprep.subr.bf16.mxu0 0
      %2477 = vmatpush2.bf16.msra.mxu0 0
      %2478 = vmatprep.subr.bf16.mxu0 0
      %2479 = vmatpush2.bf16.msra.mxu0 0
      %2480 = vmatprep.subr.bf16.mxu0 0
      %2481 = vmatpush2.bf16.msra.mxu0 0
      %2482 = vmatprep.subr.bf16.mxu0 0
      %2483 = vmatpush2.bf16.msra.mxu0 0
      %2484 = vmatprep.subr.bf16.mxu0 0
      %2485 = vmatpush2.bf16.msra.mxu0 0
      %2486 = vmatprep.subr.bf16.mxu0 0
      %2487 = vmatpush2.bf16.msra.mxu0 0
      %2488 = vmatprep.subr.bf16.mxu0 0
      %2489 = vmatpush2.bf16.msra.mxu0 0
      %2490 = vmatprep.subr.bf16.mxu0 0
      %2491 = vmatpush2.bf16.msra.mxu0 0
      %2492 = vmatprep.mubr.bf16.mxu0 0
      %2493 = vmatmul.mubr.bf16.gmra.mxu0 %v2269
      %v2494 = vpop.f32.mrf.mxu0
      %v2495 = vadd.f32 %v2241, %v2494
      %v2496 = vpop.f32.mrf.mxu0
      %v2497 = vpop.f32.mrf.mxu0
      %v2498 = vadd.f32 %v2241, %v2497
      %v2499 = vpop.f32.mrf.mxu0
      %2500 = vmatprep.mubr.bf16.mxu0 0
      %2501 = vmatmul.mubr.bf16.gmra.mxu0 %v2272
      %v2502 = vpop.f32.mrf.mxu0
      %v2503 = vadd.f32 %v2241, %v2502
      %v2504 = vpop.f32.mrf.mxu0
      %v2505 = vpop.f32.mrf.mxu0
      %v2506 = vadd.f32 %v2241, %v2505
      %v2507 = vpop.f32.mrf.mxu0
      %2508 = vmatprep.mubr.bf16.mxu0 0
      %2509 = vmatmul.mubr.bf16.gmra.mxu0 %v2275
      %v2510 = vpop.f32.mrf.mxu0
      %v2511 = vadd.f32 %v2241, %v2510
      %v2512 = vpop.f32.mrf.mxu0
      %v2513 = vpop.f32.mrf.mxu0
      %v2514 = vadd.f32 %v2241, %v2513
      %v2515 = vpop.f32.mrf.mxu0
      %2516 = vmatprep.mubr.bf16.mxu0 0
      %2517 = vmatmul.mubr.bf16.gmra.mxu0 %v2278
      %v2518 = vpop.f32.mrf.mxu0
      %v2519 = vadd.f32 %v2241, %v2518
      %v2520 = vpop.f32.mrf.mxu0
      %v2521 = vpop.f32.mrf.mxu0
      %v2522 = vadd.f32 %v2241, %v2521
      %v2523 = vpop.f32.mrf.mxu0
      %2524 = vmatprep.mubr.bf16.mxu0 0
      %2525 = vmatmul.mubr.bf16.gmra.mxu0 %v2281
      %v2526 = vpop.f32.mrf.mxu0
      %v2527 = vadd.f32 %v2241, %v2526
      %v2528 = vpop.f32.mrf.mxu0
      %v2529 = vpop.f32.mrf.mxu0
      %v2530 = vadd.f32 %v2241, %v2529
      %v2531 = vpop.f32.mrf.mxu0
      %2532 = vmatprep.mubr.bf16.mxu0 0
      %2533 = vmatmul.mubr.bf16.gmra.mxu0 %v2284
      %v2534 = vpop.f32.mrf.mxu0
      %v2535 = vadd.f32 %v2241, %v2534
      %v2536 = vpop.f32.mrf.mxu0
      %v2537 = vpop.f32.mrf.mxu0
      %v2538 = vadd.f32 %v2241, %v2537
      %v2539 = vpop.f32.mrf.mxu0
      %2540 = vmatprep.mubr.bf16.mxu0 0
      %2541 = vmatmul.mubr.bf16.gmra.mxu0 %v2287
      %v2542 = vpop.f32.mrf.mxu0
      %v2543 = vadd.f32 %v2241, %v2542
      %v2544 = vpop.f32.mrf.mxu0
      %v2545 = vpop.f32.mrf.mxu0
      %v2546 = vadd.f32 %v2241, %v2545
      %v2547 = vpop.f32.mrf.mxu0
      %2548 = vmatprep.mubr.bf16.mxu0 0
      %2549 = vmatmul.mubr.bf16.gmra.mxu0 %v2290
      %v2550 = vpop.f32.mrf.mxu0
      %v2551 = vadd.f32 %v2241, %v2550
      %v2552 = vpop.f32.mrf.mxu0
      %v2553 = vpop.f32.mrf.mxu0
      %v2554 = vadd.f32 %v2241, %v2553
      %v2555 = vpop.f32.mrf.mxu0
      %2556 = vmatprep.mubr.bf16.mxu0 0
      %2557 = vmatmul.mubr.bf16.gmra.mxu0 %v2293
      %v2558 = vpop.f32.mrf.mxu0
      %v2559 = vadd.f32 %v2241, %v2558
      %v2560 = vpop.f32.mrf.mxu0
      %v2561 = vpop.f32.mrf.mxu0
      %v2562 = vadd.f32 %v2241, %v2561
      %v2563 = vpop.f32.mrf.mxu0
      %2564 = vmatprep.mubr.bf16.mxu0 0
      %2565 = vmatmul.mubr.bf16.gmra.mxu0 %v2296
      %v2566 = vpop.f32.mrf.mxu0
      %v2567 = vadd.f32 %v2241, %v2566
      %v2568 = vpop.f32.mrf.mxu0
      %v2569 = vpop.f32.mrf.mxu0
      %v2570 = vadd.f32 %v2241, %v2569
      %v2571 = vpop.f32.mrf.mxu0
      %2572 = vmatprep.mubr.bf16.mxu0 0
      %2573 = vmatmul.mubr.bf16.gmra.mxu0 %v2299
      %v2574 = vpop.f32.mrf.mxu0
      %v2575 = vadd.f32 %v2241, %v2574
      %v2576 = vpop.f32.mrf.mxu0
      %v2577 = vpop.f32.mrf.mxu0
      %v2578 = vadd.f32 %v2241, %v2577
      %v2579 = vpop.f32.mrf.mxu0
      %2580 = vmatprep.mubr.bf16.mxu0 0
      %2581 = vmatmul.mubr.bf16.gmra.mxu0 %v2302
      %v2582 = vpop.f32.mrf.mxu0
      %v2583 = vadd.f32 %v2241, %v2582
      %v2584 = vpop.f32.mrf.mxu0
      %v2585 = vpop.f32.mrf.mxu0
      %v2586 = vadd.f32 %v2241, %v2585
      %v2587 = vpop.f32.mrf.mxu0
      %2588 = vmatprep.mubr.bf16.mxu0 0
      %2589 = vmatmul.mubr.bf16.gmra.mxu0 %v2305
      %v2590 = vpop.f32.mrf.mxu0
      %v2591 = vadd.f32 %v2241, %v2590
      %v2592 = vpop.f32.mrf.mxu0
      %v2593 = vpop.f32.mrf.mxu0
      %v2594 = vadd.f32 %v2241, %v2593
      %v2595 = vpop.f32.mrf.mxu0
      %2596 = vmatprep.mubr.bf16.mxu0 0
      %2597 = vmatmul.mubr.bf16.gmra.mxu0 %v2308
      %v2598 = vpop.f32.mrf.mxu0
      %v2599 = vadd.f32 %v2241, %v2598
      %v2600 = vpop.f32.mrf.mxu0
      %v2601 = vpop.f32.mrf.mxu0
      %v2602 = vadd.f32 %v2241, %v2601
      %v2603 = vpop.f32.mrf.mxu0
      %2604 = vmatprep.mubr.bf16.mxu0 0
      %2605 = vmatmul.mubr.bf16.gmra.mxu0 %v2311
      %v2606 = vpop.f32.mrf.mxu0
      %v2607 = vadd.f32 %v2241, %v2606
      %v2608 = vpop.f32.mrf.mxu0
      %v2609 = vpop.f32.mrf.mxu0
      %v2610 = vadd.f32 %v2241, %v2609
      %v2611 = vpop.f32.mrf.mxu0
      %2612 = vmatprep.mubr.bf16.mxu0 0
      %2613 = vmatmul.mubr.bf16.gmra.mxu0 %v2314
      %v2614 = vpop.f32.mrf.mxu0
      %v2615 = vadd.f32 %v2241, %v2614
      %v2616 = vpop.f32.mrf.mxu0
      %v2617 = vpop.f32.mrf.mxu0
      %v2618 = vadd.f32 %v2241, %v2617
      %v2619 = vpop.f32.mrf.mxu0
      %2620 = vmatprep.mubr.bf16.mxu0 0
      %2621 = vmatmul.mubr.bf16.gmra.mxu0 %v2317
      %v2622 = vpop.f32.mrf.mxu0
      %v2623 = vadd.f32 %v2241, %v2622
      %v2624 = vpop.f32.mrf.mxu0
      %v2625 = vpop.f32.mrf.mxu0
      %v2626 = vadd.f32 %v2241, %v2625
      %v2627 = vpop.f32.mrf.mxu0
      %2628 = vmatprep.mubr.bf16.mxu0 0
      %2629 = vmatmul.mubr.bf16.gmra.mxu0 %v2320
      %v2630 = vpop.f32.mrf.mxu0
      %v2631 = vadd.f32 %v2241, %v2630
      %v2632 = vpop.f32.mrf.mxu0
      %v2633 = vpop.f32.mrf.mxu0
      %v2634 = vadd.f32 %v2241, %v2633
      %v2635 = vpop.f32.mrf.mxu0
      %2636 = vmatprep.mubr.bf16.mxu0 0
      %2637 = vmatmul.mubr.bf16.gmra.mxu0 %v2323
      %v2638 = vpop.f32.mrf.mxu0
      %v2639 = vadd.f32 %v2241, %v2638
      %v2640 = vpop.f32.mrf.mxu0
      %v2641 = vpop.f32.mrf.mxu0
      %v2642 = vadd.f32 %v2241, %v2641
      %v2643 = vpop.f32.mrf.mxu0
      %2644 = vmatprep.mubr.bf16.mxu0 0
      %2645 = vmatmul.mubr.bf16.gmra.mxu0 %v2326
      %v2646 = vpop.f32.mrf.mxu0
      %v2647 = vadd.f32 %v2241, %v2646
      %v2648 = vpop.f32.mrf.mxu0
      %v2649 = vpop.f32.mrf.mxu0
      %v2650 = vadd.f32 %v2241, %v2649
      %v2651 = vpop.f32.mrf.mxu0
      %2652 = vmatprep.mubr.bf16.mxu0 0
      %2653 = vmatmul.mubr.bf16.gmra.mxu0 %v2329
      %v2654 = vpop.f32.mrf.mxu0
      %v2655 = vadd.f32 %v2241, %v2654
      %v2656 = vpop.f32.mrf.mxu0
      %v2657 = vpop.f32.mrf.mxu0
      %v2658 = vadd.f32 %v2241, %v2657
      %v2659 = vpop.f32.mrf.mxu0
      %2660 = vmatprep.mubr.bf16.mxu0 0
      %2661 = vmatmul.mubr.bf16.gmra.mxu0 %v2332
      %v2662 = vpop.f32.mrf.mxu0
      %v2663 = vadd.f32 %v2241, %v2662
      %v2664 = vpop.f32.mrf.mxu0
      %v2665 = vpop.f32.mrf.mxu0
      %v2666 = vadd.f32 %v2241, %v2665
      %v2667 = vpop.f32.mrf.mxu0
      %2668 = vmatprep.mubr.bf16.mxu0 0
      %2669 = vmatmul.mubr.bf16.gmra.mxu0 %v2335
      %v2670 = vpop.f32.mrf.mxu0
      %v2671 = vadd.f32 %v2241, %v2670
      %v2672 = vpop.f32.mrf.mxu0
      %v2673 = vpop.f32.mrf.mxu0
      %v2674 = vadd.f32 %v2241, %v2673
      %v2675 = vpop.f32.mrf.mxu0
      %2676 = vmatprep.mubr.bf16.mxu0 0
      %2677 = vmatmul.mubr.bf16.gmra.mxu0 %v2338
      %v2678 = vpop.f32.mrf.mxu0
      %v2679 = vadd.f32 %v2241, %v2678
      %v2680 = vpop.f32.mrf.mxu0
      %v2681 = vpop.f32.mrf.mxu0
      %v2682 = vadd.f32 %v2241, %v2681
      %v2683 = vpop.f32.mrf.mxu0
      %2684 = vmatprep.mubr.bf16.mxu0 0
      %2685 = vmatmul.mubr.bf16.gmra.mxu0 %v2341
      %v2686 = vpop.f32.mrf.mxu0
      %v2687 = vadd.f32 %v2241, %v2686
      %v2688 = vpop.f32.mrf.mxu0
      %v2689 = vpop.f32.mrf.mxu0
      %v2690 = vadd.f32 %v2241, %v2689
      %v2691 = vpop.f32.mrf.mxu0
      %2692 = vmatprep.mubr.bf16.mxu0 0
      %2693 = vmatmul.mubr.bf16.gmra.mxu0 %v2344
      %v2694 = vpop.f32.mrf.mxu0
      %v2695 = vadd.f32 %v2241, %v2694
      %v2696 = vpop.f32.mrf.mxu0
      %v2697 = vpop.f32.mrf.mxu0
      %v2698 = vadd.f32 %v2241, %v2697
      %v2699 = vpop.f32.mrf.mxu0
      %2700 = vmatprep.mubr.bf16.mxu0 0
      %2701 = vmatmul.mubr.bf16.gmra.mxu0 %v2347
      %v2702 = vpop.f32.mrf.mxu0
      %v2703 = vadd.f32 %v2241, %v2702
      %v2704 = vpop.f32.mrf.mxu0
      %v2705 = vpop.f32.mrf.mxu0
      %v2706 = vadd.f32 %v2241, %v2705
      %v2707 = vpop.f32.mrf.mxu0
      %2708 = vmatprep.mubr.bf16.mxu0 0
      %2709 = vmatmul.mubr.bf16.gmra.mxu0 %v2350
      %v2710 = vpop.f32.mrf.mxu0
      %v2711 = vadd.f32 %v2241, %v2710
      %v2712 = vpop.f32.mrf.mxu0
      %v2713 = vpop.f32.mrf.mxu0
      %v2714 = vadd.f32 %v2241, %v2713
      %v2715 = vpop.f32.mrf.mxu0
      %2716 = vmatprep.mubr.bf16.mxu0 0
      %2717 = vmatmul.mubr.bf16.gmra.mxu0 %v2353
      %v2718 = vpop.f32.mrf.mxu0
      %v2719 = vadd.f32 %v2241, %v2718
      %v2720 = vpop.f32.mrf.mxu0
      %v2721 = vpop.f32.mrf.mxu0
      %v2722 = vadd.f32 %v2241, %v2721
      %v2723 = vpop.f32.mrf.mxu0
      %2724 = vmatprep.mubr.bf16.mxu0 0
      %2725 = vmatmul.mubr.bf16.gmra.mxu0 %v2356
      %v2726 = vpop.f32.mrf.mxu0
      %v2727 = vadd.f32 %v2241, %v2726
      %v2728 = vpop.f32.mrf.mxu0
      %v2729 = vpop.f32.mrf.mxu0
      %v2730 = vadd.f32 %v2241, %v2729
      %v2731 = vpop.f32.mrf.mxu0
      %2732 = vmatprep.mubr.bf16.mxu0 0
      %2733 = vmatmul.mubr.bf16.gmra.mxu0 %v2359
      %v2734 = vpop.f32.mrf.mxu0
      %v2735 = vadd.f32 %v2241, %v2734
      %v2736 = vpop.f32.mrf.mxu0
      %v2737 = vpop.f32.mrf.mxu0
      %v2738 = vadd.f32 %v2241, %v2737
      %v2739 = vpop.f32.mrf.mxu0
      %2740 = vmatprep.mubr.bf16.mxu0 0
      %2741 = vmatmul.mubr.bf16.gmra.mxu0 %v2362
      %v2742 = vpop.f32.mrf.mxu0
      %v2743 = vadd.f32 %v2241, %v2742
      %v2744 = vpop.f32.mrf.mxu0
      %v2745 = vpop.f32.mrf.mxu0
      %v2746 = vadd.f32 %v2241, %v2745
      %v2747 = vpop.f32.mrf.mxu0
      %2748 = vmatprep.mubr.bf16.mxu0 0
      %2749 = vmatmul.mubr.bf16.gmra.mxu0 %v2365
      %v2750 = vpop.f32.mrf.mxu0
      %v2751 = vadd.f32 %v2241, %v2750
      %v2752 = vpop.f32.mrf.mxu0
      %v2753 = vpop.f32.mrf.mxu0
      %v2754 = vadd.f32 %v2241, %v2753
      %v2755 = vpop.f32.mrf.mxu0
      %2756 = vmatprep.mubr.bf16.mxu0 0
      %2757 = vmatmul.mubr.bf16.gmra.mxu0 %v2368
      %v2758 = vpop.f32.mrf.mxu0
      %v2759 = vadd.f32 %v2241, %v2758
      %v2760 = vpop.f32.mrf.mxu0
      %v2761 = vpop.f32.mrf.mxu0
      %v2762 = vadd.f32 %v2241, %v2761
      %v2763 = vpop.f32.mrf.mxu0
      %2764 = vmatprep.mubr.bf16.mxu0 0
      %2765 = vmatmul.mubr.bf16.gmra.mxu0 %v2371
      %v2766 = vpop.f32.mrf.mxu0
      %v2767 = vadd.f32 %v2241, %v2766
      %v2768 = vpop.f32.mrf.mxu0
      %v2769 = vpop.f32.mrf.mxu0
      %v2770 = vadd.f32 %v2241, %v2769
      %v2771 = vpop.f32.mrf.mxu0
      %2772 = vmatprep.mubr.bf16.mxu0 0
      %2773 = vmatmul.mubr.bf16.gmra.mxu0 %v2374
      %v2774 = vpop.f32.mrf.mxu0
      %v2775 = vadd.f32 %v2241, %v2774
      %v2776 = vpop.f32.mrf.mxu0
      %v2777 = vpop.f32.mrf.mxu0
      %v2778 = vadd.f32 %v2241, %v2777
      %v2779 = vpop.f32.mrf.mxu0
      %2780 = vmatprep.mubr.bf16.mxu0 0
      %2781 = vmatmul.mubr.bf16.gmra.mxu0 %v2377
      %v2782 = vpop.f32.mrf.mxu0
      %v2783 = vadd.f32 %v2241, %v2782
      %v2784 = vpop.f32.mrf.mxu0
      %v2785 = vpop.f32.mrf.mxu0
      %v2786 = vadd.f32 %v2241, %v2785
      %v2787 = vpop.f32.mrf.mxu0
      %2788 = vmatprep.mubr.bf16.mxu0 0
      %2789 = vmatmul.mubr.bf16.gmra.mxu0 %v2380
      %v2790 = vpop.f32.mrf.mxu0
      %v2791 = vadd.f32 %v2241, %v2790
      %v2792 = vpop.f32.mrf.mxu0
      %v2793 = vpop.f32.mrf.mxu0
      %v2794 = vadd.f32 %v2241, %v2793
      %v2795 = vpop.f32.mrf.mxu0
      %2796 = vmatprep.mubr.bf16.mxu0 0
      %2797 = vmatmul.mubr.bf16.gmra.mxu0 %v2383
      %v2798 = vpop.f32.mrf.mxu0
      %v2799 = vadd.f32 %v2241, %v2798
      %v2800 = vpop.f32.mrf.mxu0
      %v2801 = vpop.f32.mrf.mxu0
      %v2802 = vadd.f32 %v2241, %v2801
      %v2803 = vpop.f32.mrf.mxu0
      %2804 = vmatprep.mubr.bf16.mxu0 0
      %2805 = vmatmul.mubr.bf16.gmra.mxu0 %v2386
      %v2806 = vpop.f32.mrf.mxu0
      %v2807 = vadd.f32 %v2241, %v2806
      %v2808 = vpop.f32.mrf.mxu0
      %v2809 = vpop.f32.mrf.mxu0
      %v2810 = vadd.f32 %v2241, %v2809
      %v2811 = vpop.f32.mrf.mxu0
      %2812 = vmatprep.mubr.bf16.mxu0 0
      %2813 = vmatmul.mubr.bf16.gmra.mxu0 %v2389
      %v2814 = vpop.f32.mrf.mxu0
      %v2815 = vadd.f32 %v2241, %v2814
      %v2816 = vpop.f32.mrf.mxu0
      %v2817 = vpop.f32.mrf.mxu0
      %v2818 = vadd.f32 %v2241, %v2817
      %v2819 = vpop.f32.mrf.mxu0
      %2820 = vmatprep.mubr.bf16.mxu0 0
      %2821 = vmatmul.mubr.bf16.gmra.mxu0 %v2392
      %v2822 = vpop.f32.mrf.mxu0
      %v2823 = vadd.f32 %v2241, %v2822
      %v2824 = vpop.f32.mrf.mxu0
      %v2825 = vpop.f32.mrf.mxu0
      %v2826 = vadd.f32 %v2241, %v2825
      %v2827 = vpop.f32.mrf.mxu0
      %2828 = vmatprep.mubr.bf16.mxu0 0
      %2829 = vmatmul.mubr.bf16.gmra.mxu0 %v2395
      %v2830 = vpop.f32.mrf.mxu0
      %v2831 = vadd.f32 %v2241, %v2830
      %v2832 = vpop.f32.mrf.mxu0
      %v2833 = vpop.f32.mrf.mxu0
      %v2834 = vadd.f32 %v2241, %v2833
      %v2835 = vpop.f32.mrf.mxu0
      %2836 = vmatprep.mubr.bf16.mxu0 0
      %2837 = vmatmul.mubr.bf16.gmra.mxu0 %v2398
      %v2838 = vpop.f32.mrf.mxu0
      %v2839 = vadd.f32 %v2241, %v2838
      %v2840 = vpop.f32.mrf.mxu0
      %v2841 = vpop.f32.mrf.mxu0
      %v2842 = vadd.f32 %v2241, %v2841
      %v2843 = vpop.f32.mrf.mxu0
      %2844 = vmatprep.mubr.bf16.mxu0 0
      %2845 = vmatmul.mubr.bf16.gmra.mxu0 %v2401
      %v2846 = vpop.f32.mrf.mxu0
      %v2847 = vadd.f32 %v2241, %v2846
      %v2848 = vpop.f32.mrf.mxu0
      %v2849 = vpop.f32.mrf.mxu0
      %v2850 = vadd.f32 %v2241, %v2849
      %v2851 = vpop.f32.mrf.mxu0
      %2852 = vmatprep.mubr.bf16.mxu0 0
      %2853 = vmatmul.mubr.bf16.gmra.mxu0 %v2404
      %v2854 = vpop.f32.mrf.mxu0
      %v2855 = vadd.f32 %v2241, %v2854
      %v2856 = vpop.f32.mrf.mxu0
      %v2857 = vpop.f32.mrf.mxu0
      %v2858 = vadd.f32 %v2241, %v2857
      %v2859 = vpop.f32.mrf.mxu0
      %2860 = vmatprep.mubr.bf16.mxu0 0
      %2861 = vmatmul.mubr.bf16.gmra.mxu0 %v2407
      %v2862 = vpop.f32.mrf.mxu0
      %v2863 = vadd.f32 %v2241, %v2862
      %v2864 = vpop.f32.mrf.mxu0
      %v2865 = vpop.f32.mrf.mxu0
      %v2866 = vadd.f32 %v2241, %v2865
      %v2867 = vpop.f32.mrf.mxu0
      %2868 = vmatprep.mubr.bf16.mxu0 0
      %2869 = vmatmul.mubr.bf16.gmra.mxu0 %v2410
      %v2870 = vpop.f32.mrf.mxu0
      %v2871 = vadd.f32 %v2241, %v2870
      %v2872 = vpop.f32.mrf.mxu0
      %v2873 = vpop.f32.mrf.mxu0
      %v2874 = vadd.f32 %v2241, %v2873
      %v2875 = vpop.f32.mrf.mxu0
      %2876 = vmatprep.mubr.bf16.mxu0 0
      %2877 = vmatmul.mubr.bf16.gmra.mxu0 %v2413
      %v2878 = vpop.f32.mrf.mxu0
      %v2879 = vadd.f32 %v2241, %v2878
      %v2880 = vpop.f32.mrf.mxu0
      %v2881 = vpop.f32.mrf.mxu0
      %v2882 = vadd.f32 %v2241, %v2881
      %v2883 = vpop.f32.mrf.mxu0
      %2884 = vmatprep.mubr.bf16.mxu0 0
      %2885 = vmatmul.mubr.bf16.gmra.mxu0 %v2416
      %v2886 = vpop.f32.mrf.mxu0
      %v2887 = vadd.f32 %v2241, %v2886
      %v2888 = vpop.f32.mrf.mxu0
      %v2889 = vpop.f32.mrf.mxu0
      %v2890 = vadd.f32 %v2241, %v2889
      %v2891 = vpop.f32.mrf.mxu0
      %2892 = vmatprep.mubr.bf16.mxu0 0
      %2893 = vmatmul.mubr.bf16.gmra.mxu0 %v2419
      %v2894 = vpop.f32.mrf.mxu0
      %v2895 = vadd.f32 %v2241, %v2894
      %v2896 = vpop.f32.mrf.mxu0
      %v2897 = vpop.f32.mrf.mxu0
      %v2898 = vadd.f32 %v2241, %v2897
      %v2899 = vpop.f32.mrf.mxu0
      %2900 = vmatprep.mubr.bf16.mxu0 0
      %2901 = vmatmul.mubr.bf16.gmra.mxu0 %v2422
      %v2902 = vpop.f32.mrf.mxu0
      %v2903 = vadd.f32 %v2241, %v2902
      %v2904 = vpop.f32.mrf.mxu0
      %v2905 = vpop.f32.mrf.mxu0
      %v2906 = vadd.f32 %v2241, %v2905
      %v2907 = vpop.f32.mrf.mxu0
      %2908 = vmatprep.mubr.bf16.mxu0 0
      %2909 = vmatmul.mubr.bf16.gmra.mxu0 %v2425
      %v2910 = vpop.f32.mrf.mxu0
      %v2911 = vadd.f32 %v2241, %v2910
      %v2912 = vpop.f32.mrf.mxu0
      %v2913 = vpop.f32.mrf.mxu0
      %v2914 = vadd.f32 %v2241, %v2913
      %v2915 = vpop.f32.mrf.mxu0
      %2916 = vmatprep.mubr.bf16.mxu0 0
      %2917 = vmatmul.mubr.bf16.gmra.mxu0 %v2428
      %v2918 = vpop.f32.mrf.mxu0
      %v2919 = vadd.f32 %v2241, %v2918
      %v2920 = vpop.f32.mrf.mxu0
      %v2921 = vpop.f32.mrf.mxu0
      %v2922 = vadd.f32 %v2241, %v2921
      %v2923 = vpop.f32.mrf.mxu0
      %2924 = vmatprep.mubr.bf16.mxu0 0
      %2925 = vmatmul.mubr.bf16.gmra.mxu0 %v2431
      %v2926 = vpop.f32.mrf.mxu0
      %v2927 = vadd.f32 %v2241, %v2926
      %v2928 = vpop.f32.mrf.mxu0
      %v2929 = vpop.f32.mrf.mxu0
      %v2930 = vadd.f32 %v2241, %v2929
      %v2931 = vpop.f32.mrf.mxu0
      %2932 = vmatprep.mubr.bf16.mxu0 0
      %2933 = vmatmul.mubr.bf16.gmra.mxu0 %v2434
      %v2934 = vpop.f32.mrf.mxu0
      %v2935 = vadd.f32 %v2241, %v2934
      %v2936 = vpop.f32.mrf.mxu0
      %v2937 = vpop.f32.mrf.mxu0
      %v2938 = vadd.f32 %v2241, %v2937
      %v2939 = vpop.f32.mrf.mxu0
      %2940 = vmatprep.mubr.bf16.mxu0 0
      %2941 = vmatmul.mubr.bf16.gmra.mxu0 %v2437
      %v2942 = vpop.f32.mrf.mxu0
      %v2943 = vadd.f32 %v2241, %v2942
      %v2944 = vpop.f32.mrf.mxu0
      %v2945 = vpop.f32.mrf.mxu0
      %v2946 = vadd.f32 %v2241, %v2945
      %v2947 = vpop.f32.mrf.mxu0
      %2948 = vmatprep.mubr.bf16.mxu0 0
      %2949 = vmatmul.mubr.bf16.gmra.mxu0 %v2440
      %v2950 = vpop.f32.mrf.mxu0
      %v2951 = vadd.f32 %v2241, %v2950
      %v2952 = vpop.f32.mrf.mxu0
      %v2953 = vpop.f32.mrf.mxu0
      %v2954 = vadd.f32 %v2241, %v2953
      %v2955 = vpop.f32.mrf.mxu0
      %2956 = vmatprep.mubr.bf16.mxu0 0
      %2957 = vmatmul.mubr.bf16.gmra.mxu0 %v2443
      %v2958 = vpop.f32.mrf.mxu0
      %v2959 = vadd.f32 %v2241, %v2958
      %v2960 = vpop.f32.mrf.mxu0
      %v2961 = vpop.f32.mrf.mxu0
      %v2962 = vadd.f32 %v2241, %v2961
      %v2963 = vpop.f32.mrf.mxu0
      %2964 = vmatprep.mubr.bf16.mxu0 0
      %2965 = vmatmul.mubr.bf16.gmra.mxu0 %v2446
      %v2966 = vpop.f32.mrf.mxu0
      %v2967 = vadd.f32 %v2241, %v2966
      %v2968 = vpop.f32.mrf.mxu0
      %v2969 = vpop.f32.mrf.mxu0
      %v2970 = vadd.f32 %v2241, %v2969
      %v2971 = vpop.f32.mrf.mxu0
      %2972 = vmatprep.mubr.bf16.mxu0 0
      %2973 = vmatmul.mubr.bf16.gmra.mxu0 %v2449
      %v2974 = vpop.f32.mrf.mxu0
      %v2975 = vadd.f32 %v2241, %v2974
      %v2976 = vpop.f32.mrf.mxu0
      %v2977 = vpop.f32.mrf.mxu0
      %v2978 = vadd.f32 %v2241, %v2977
      %v2979 = vpop.f32.mrf.mxu0
      %2980 = vmatprep.mubr.bf16.mxu0 0
      %2981 = vmatmul.mubr.bf16.gmra.mxu0 %v2452
      %v2982 = vpop.f32.mrf.mxu0
      %v2983 = vadd.f32 %v2241, %v2982
      %v2984 = vpop.f32.mrf.mxu0
      %v2985 = vpop.f32.mrf.mxu0
      %v2986 = vadd.f32 %v2241, %v2985
      %v2987 = vpop.f32.mrf.mxu0
      %2988 = vmatprep.mubr.bf16.mxu0 0
      %2989 = vmatmul.mubr.bf16.gmra.mxu0 %v2455
      %v2990 = vpop.f32.mrf.mxu0
      %v2991 = vadd.f32 %v2241, %v2990
      %v2992 = vpop.f32.mrf.mxu0
      %v2993 = vpop.f32.mrf.mxu0
      %v2994 = vadd.f32 %v2241, %v2993
      %v2995 = vpop.f32.mrf.mxu0
      %2996 = vmatprep.mubr.bf16.mxu0 0
      %2997 = vmatmul.mubr.bf16.gmra.mxu0 %v2458
      %v2998 = vpop.f32.mrf.mxu0
      %v2999 = vadd.f32 %v2241, %v2998
      %v3000 = vpop.f32.mrf.mxu0
      %v3001 = vpop.f32.mrf.mxu0
      %v3002 = vadd.f32 %v2241, %v3001
      %v3003 = vpop.f32.mrf.mxu0
      %3004 = vdwg.mxu0
      %v3005 = vxor.u32 %v2495, 2147483648
      %v3006 = vxor.u32 %v2498, 2147483648
      %v3007 = vxor.u32 %v2503, 2147483648
      %v3008 = vxor.u32 %v2506, 2147483648
      %v3009 = vxor.u32 %v2511, 2147483648
      %v3010 = vxor.u32 %v2514, 2147483648
      %v3011 = vxor.u32 %v2519, 2147483648
      %v3012 = vxor.u32 %v2522, 2147483648
      %v3013 = vxor.u32 %v2527, 2147483648
      %v3014 = vxor.u32 %v2530, 2147483648
      %v3015 = vxor.u32 %v2535, 2147483648
      %v3016 = vxor.u32 %v2538, 2147483648
      %v3017 = vxor.u32 %v2543, 2147483648
      %v3018 = vxor.u32 %v2546, 2147483648
      %v3019 = vxor.u32 %v2551, 2147483648
      %v3020 = vxor.u32 %v2554, 2147483648
      %v3021 = vxor.u32 %v2559, 2147483648
      %v3022 = vxor.u32 %v2562, 2147483648
      %v3023 = vxor.u32 %v2567, 2147483648
      %v3024 = vxor.u32 %v2570, 2147483648
      %v3025 = vxor.u32 %v2575, 2147483648
      %v3026 = vxor.u32 %v2578, 2147483648
      %v3027 = vxor.u32 %v2583, 2147483648
      %v3028 = vxor.u32 %v2586, 2147483648
      %v3029 = vxor.u32 %v2591, 2147483648
      %v3030 = vxor.u32 %v2594, 2147483648
      %v3031 = vxor.u32 %v2599, 2147483648
      %v3032 = vxor.u32 %v2602, 2147483648
      %v3033 = vxor.u32 %v2607, 2147483648
      %v3034 = vxor.u32 %v2610, 2147483648
      %v3035 = vxor.u32 %v2615, 2147483648
      %v3036 = vxor.u32 %v2618, 2147483648
      %v3037 = vxor.u32 %v2623, 2147483648
      %v3038 = vxor.u32 %v2626, 2147483648
      %v3039 = vxor.u32 %v2631, 2147483648
      %v3040 = vxor.u32 %v2634, 2147483648
      %v3041 = vxor.u32 %v2639, 2147483648
      %v3042 = vxor.u32 %v2642, 2147483648
      %v3043 = vxor.u32 %v2647, 2147483648
      %v3044 = vxor.u32 %v2650, 2147483648
      %v3045 = vxor.u32 %v2655, 2147483648
      %v3046 = vxor.u32 %v2658, 2147483648
      %v3047 = vxor.u32 %v2663, 2147483648
      %v3048 = vxor.u32 %v2666, 2147483648
      %v3049 = vxor.u32 %v2671, 2147483648
      %v3050 = vxor.u32 %v2674, 2147483648
      %v3051 = vxor.u32 %v2679, 2147483648
      %v3052 = vxor.u32 %v2682, 2147483648
      %v3053 = vxor.u32 %v2687, 2147483648
      %v3054 = vxor.u32 %v2690, 2147483648
      %v3055 = vxor.u32 %v2695, 2147483648
      %v3056 = vxor.u32 %v2698, 2147483648
      %v3057 = vxor.u32 %v2703, 2147483648
      %v3058 = vxor.u32 %v2706, 2147483648
      %v3059 = vxor.u32 %v2711, 2147483648
      %v3060 = vxor.u32 %v2714, 2147483648
      %v3061 = vxor.u32 %v2719, 2147483648
      %v3062 = vxor.u32 %v2722, 2147483648
      %v3063 = vxor.u32 %v2727, 2147483648
      %v3064 = vxor.u32 %v2730, 2147483648
      %v3065 = vxor.u32 %v2735, 2147483648
      %v3066 = vxor.u32 %v2738, 2147483648
      %v3067 = vxor.u32 %v2743, 2147483648
      %v3068 = vxor.u32 %v2746, 2147483648
      %v3069 = vxor.u32 %v2751, 2147483648
      %v3070 = vxor.u32 %v2754, 2147483648
      %v3071 = vxor.u32 %v2759, 2147483648
      %v3072 = vxor.u32 %v2762, 2147483648
      %v3073 = vxor.u32 %v2767, 2147483648
      %v3074 = vxor.u32 %v2770, 2147483648
      %v3075 = vxor.u32 %v2775, 2147483648
      %v3076 = vxor.u32 %v2778, 2147483648
      %v3077 = vxor.u32 %v2783, 2147483648
      %v3078 = vxor.u32 %v2786, 2147483648
      %v3079 = vxor.u32 %v2791, 2147483648
      %v3080 = vxor.u32 %v2794, 2147483648
      %v3081 = vxor.u32 %v2799, 2147483648
      %v3082 = vxor.u32 %v2802, 2147483648
      %v3083 = vxor.u32 %v2807, 2147483648
      %v3084 = vxor.u32 %v2810, 2147483648
      %v3085 = vxor.u32 %v2815, 2147483648
      %v3086 = vxor.u32 %v2818, 2147483648
      %v3087 = vxor.u32 %v2823, 2147483648
      %v3088 = vxor.u32 %v2826, 2147483648
      %v3089 = vxor.u32 %v2831, 2147483648
      %v3090 = vxor.u32 %v2834, 2147483648
      %v3091 = vxor.u32 %v2839, 2147483648
      %v3092 = vxor.u32 %v2842, 2147483648
      %v3093 = vxor.u32 %v2847, 2147483648
      %v3094 = vxor.u32 %v2850, 2147483648
      %v3095 = vxor.u32 %v2855, 2147483648
      %v3096 = vxor.u32 %v2858, 2147483648
      %v3097 = vxor.u32 %v2863, 2147483648
      %v3098 = vxor.u32 %v2866, 2147483648
      %v3099 = vxor.u32 %v2871, 2147483648
      %v3100 = vxor.u32 %v2874, 2147483648
      %v3101 = vxor.u32 %v2879, 2147483648
      %v3102 = vxor.u32 %v2882, 2147483648
      %v3103 = vxor.u32 %v2887, 2147483648
      %v3104 = vxor.u32 %v2890, 2147483648
      %v3105 = vxor.u32 %v2895, 2147483648
      %v3106 = vxor.u32 %v2898, 2147483648
      %v3107 = vxor.u32 %v2903, 2147483648
      %v3108 = vxor.u32 %v2906, 2147483648
      %v3109 = vxor.u32 %v2911, 2147483648
      %v3110 = vxor.u32 %v2914, 2147483648
      %v3111 = vxor.u32 %v2919, 2147483648
      %v3112 = vxor.u32 %v2922, 2147483648
      %v3113 = vxor.u32 %v2927, 2147483648
      %v3114 = vxor.u32 %v2930, 2147483648
      %v3115 = vxor.u32 %v2935, 2147483648
      %v3116 = vxor.u32 %v2938, 2147483648
      %v3117 = vxor.u32 %v2943, 2147483648
      %v3118 = vxor.u32 %v2946, 2147483648
      %v3119 = vxor.u32 %v2951, 2147483648
      %v3120 = vxor.u32 %v2954, 2147483648
      %v3121 = vxor.u32 %v2959, 2147483648
      %v3122 = vxor.u32 %v2962, 2147483648
      %v3123 = vxor.u32 %v2967, 2147483648
      %v3124 = vxor.u32 %v2970, 2147483648
      %v3125 = vxor.u32 %v2975, 2147483648
      %v3126 = vxor.u32 %v2978, 2147483648
      %v3127 = vxor.u32 %v2983, 2147483648
      %v3128 = vxor.u32 %v2986, 2147483648
      %v3129 = vxor.u32 %v2991, 2147483648
      %v3130 = vxor.u32 %v2994, 2147483648
      %v3131 = vxor.u32 %v2999, 2147483648
      %v3132 = vxor.u32 %v3002, 2147483648
      %v3133 = vmul.f32 %v3005, 1.442695
      %v3134 = vpow.pop %v3133
      %v3135 = vmul.f32 %v3006, 1.442695
      %v3136 = vpow.pop %v3135
      %v3137 = vmul.f32 %v3007, 1.442695
      %v3138 = vpow.pop %v3137
      %v3139 = vmul.f32 %v3008, 1.442695
      %v3140 = vpow.pop %v3139
      %v3141 = vmul.f32 %v3009, 1.442695
      %v3142 = vpow.pop %v3141
      %v3143 = vmul.f32 %v3010, 1.442695
      %v3144 = vpow.pop %v3143
      %v3145 = vmul.f32 %v3011, 1.442695
      %v3146 = vpow.pop %v3145
      %v3147 = vmul.f32 %v3012, 1.442695
      %v3148 = vpow.pop %v3147
      %v3149 = vmul.f32 %v3013, 1.442695
      %v3150 = vpow.pop %v3149
      %v3151 = vmul.f32 %v3014, 1.442695
      %v3152 = vpow.pop %v3151
      %v3153 = vmul.f32 %v3015, 1.442695
      %v3154 = vpow.pop %v3153
      %v3155 = vmul.f32 %v3016, 1.442695
      %v3156 = vpow.pop %v3155
      %v3157 = vmul.f32 %v3017, 1.442695
      %v3158 = vpow.pop %v3157
      %v3159 = vmul.f32 %v3018, 1.442695
      %v3160 = vpow.pop %v3159
      %v3161 = vmul.f32 %v3019, 1.442695
      %v3162 = vpow.pop %v3161
      %v3163 = vmul.f32 %v3020, 1.442695
      %v3164 = vpow.pop %v3163
      %v3165 = vmul.f32 %v3021, 1.442695
      %v3166 = vpow.pop %v3165
      %v3167 = vmul.f32 %v3022, 1.442695
      %v3168 = vpow.pop %v3167
      %v3169 = vmul.f32 %v3023, 1.442695
      %v3170 = vpow.pop %v3169
      %v3171 = vmul.f32 %v3024, 1.442695
      %v3172 = vpow.pop %v3171
      %v3173 = vmul.f32 %v3025, 1.442695
      %v3174 = vpow.pop %v3173
      %v3175 = vmul.f32 %v3026, 1.442695
      %v3176 = vpow.pop %v3175
      %v3177 = vmul.f32 %v3027, 1.442695
      %v3178 = vpow.pop %v3177
      %v3179 = vmul.f32 %v3028, 1.442695
      %v3180 = vpow.pop %v3179
      %v3181 = vmul.f32 %v3029, 1.442695
      %v3182 = vpow.pop %v3181
      %v3183 = vmul.f32 %v3030, 1.442695
      %v3184 = vpow.pop %v3183
      %v3185 = vmul.f32 %v3031, 1.442695
      %v3186 = vpow.pop %v3185
      %v3187 = vmul.f32 %v3032, 1.442695
      %v3188 = vpow.pop %v3187
      %v3189 = vmul.f32 %v3033, 1.442695
      %v3190 = vpow.pop %v3189
      %v3191 = vmul.f32 %v3034, 1.442695
      %v3192 = vpow.pop %v3191
      %v3193 = vmul.f32 %v3035, 1.442695
      %v3194 = vpow.pop %v3193
      %v3195 = vmul.f32 %v3036, 1.442695
      %v3196 = vpow.pop %v3195
      %v3197 = vmul.f32 %v3037, 1.442695
      %v3198 = vpow.pop %v3197
      %v3199 = vmul.f32 %v3038, 1.442695
      %v3200 = vpow.pop %v3199
      %v3201 = vmul.f32 %v3039, 1.442695
      %v3202 = vpow.pop %v3201
      %v3203 = vmul.f32 %v3040, 1.442695
      %v3204 = vpow.pop %v3203
      %v3205 = vmul.f32 %v3041, 1.442695
      %v3206 = vpow.pop %v3205
      %v3207 = vmul.f32 %v3042, 1.442695
      %v3208 = vpow.pop %v3207
      %v3209 = vmul.f32 %v3043, 1.442695
      %v3210 = vpow.pop %v3209
      %v3211 = vmul.f32 %v3044, 1.442695
      %v3212 = vpow.pop %v3211
      %v3213 = vmul.f32 %v3045, 1.442695
      %v3214 = vpow.pop %v3213
      %v3215 = vmul.f32 %v3046, 1.442695
      %v3216 = vpow.pop %v3215
      %v3217 = vmul.f32 %v3047, 1.442695
      %v3218 = vpow.pop %v3217
      %v3219 = vmul.f32 %v3048, 1.442695
      %v3220 = vpow.pop %v3219
      %v3221 = vmul.f32 %v3049, 1.442695
      %v3222 = vpow.pop %v3221
      %v3223 = vmul.f32 %v3050, 1.442695
      %v3224 = vpow.pop %v3223
      %v3225 = vmul.f32 %v3051, 1.442695
      %v3226 = vpow.pop %v3225
      %v3227 = vmul.f32 %v3052, 1.442695
      %v3228 = vpow.pop %v3227
      %v3229 = vmul.f32 %v3053, 1.442695
      %v3230 = vpow.pop %v3229
      %v3231 = vmul.f32 %v3054, 1.442695
      %v3232 = vpow.pop %v3231
      %v3233 = vmul.f32 %v3055, 1.442695
      %v3234 = vpow.pop %v3233
      %v3235 = vmul.f32 %v3056, 1.442695
      %v3236 = vpow.pop %v3235
      %v3237 = vmul.f32 %v3057, 1.442695
      %v3238 = vpow.pop %v3237
      %v3239 = vmul.f32 %v3058, 1.442695
      %v3240 = vpow.pop %v3239
      %v3241 = vmul.f32 %v3059, 1.442695
      %v3242 = vpow.pop %v3241
      %v3243 = vmul.f32 %v3060, 1.442695
      %v3244 = vpow.pop %v3243
      %v3245 = vmul.f32 %v3061, 1.442695
      %v3246 = vpow.pop %v3245
      %v3247 = vmul.f32 %v3062, 1.442695
      %v3248 = vpow.pop %v3247
      %v3249 = vmul.f32 %v3063, 1.442695
      %v3250 = vpow.pop %v3249
      %v3251 = vmul.f32 %v3064, 1.442695
      %v3252 = vpow.pop %v3251
      %v3253 = vmul.f32 %v3065, 1.442695
      %v3254 = vpow.pop %v3253
      %v3255 = vmul.f32 %v3066, 1.442695
      %v3256 = vpow.pop %v3255
      %v3257 = vmul.f32 %v3067, 1.442695
      %v3258 = vpow.pop %v3257
      %v3259 = vmul.f32 %v3068, 1.442695
      %v3260 = vpow.pop %v3259
      %v3261 = vmul.f32 %v3069, 1.442695
      %v3262 = vpow.pop %v3261
      %v3263 = vmul.f32 %v3070, 1.442695
      %v3264 = vpow.pop %v3263
      %v3265 = vmul.f32 %v3071, 1.442695
      %v3266 = vpow.pop %v3265
      %v3267 = vmul.f32 %v3072, 1.442695
      %v3268 = vpow.pop %v3267
      %v3269 = vmul.f32 %v3073, 1.442695
      %v3270 = vpow.pop %v3269
      %v3271 = vmul.f32 %v3074, 1.442695
      %v3272 = vpow.pop %v3271
      %v3273 = vmul.f32 %v3075, 1.442695
      %v3274 = vpow.pop %v3273
      %v3275 = vmul.f32 %v3076, 1.442695
      %v3276 = vpow.pop %v3275
      %v3277 = vmul.f32 %v3077, 1.442695
      %v3278 = vpow.pop %v3277
      %v3279 = vmul.f32 %v3078, 1.442695
      %v3280 = vpow.pop %v3279
      %v3281 = vmul.f32 %v3079, 1.442695
      %v3282 = vpow.pop %v3281
      %v3283 = vmul.f32 %v3080, 1.442695
      %v3284 = vpow.pop %v3283
      %v3285 = vmul.f32 %v3081, 1.442695
      %v3286 = vpow.pop %v3285
      %v3287 = vmul.f32 %v3082, 1.442695
      %v3288 = vpow.pop %v3287
      %v3289 = vmul.f32 %v3083, 1.442695
      %v3290 = vpow.pop %v3289
      %v3291 = vmul.f32 %v3084, 1.442695
      %v3292 = vpow.pop %v3291
      %v3293 = vmul.f32 %v3085, 1.442695
      %v3294 = vpow.pop %v3293
      %v3295 = vmul.f32 %v3086, 1.442695
      %v3296 = vpow.pop %v3295
      %v3297 = vmul.f32 %v3087, 1.442695
      %v3298 = vpow.pop %v3297
      %v3299 = vmul.f32 %v3088, 1.442695
      %v3300 = vpow.pop %v3299
      %v3301 = vmul.f32 %v3089, 1.442695
      %v3302 = vpow.pop %v3301
      %v3303 = vmul.f32 %v3090, 1.442695
      %v3304 = vpow.pop %v3303
      %v3305 = vmul.f32 %v3091, 1.442695
      %v3306 = vpow.pop %v3305
      %v3307 = vmul.f32 %v3092, 1.442695
      %v3308 = vpow.pop %v3307
      %v3309 = vmul.f32 %v3093, 1.442695
      %v3310 = vpow.pop %v3309
      %v3311 = vmul.f32 %v3094, 1.442695
      %v3312 = vpow.pop %v3311
      %v3313 = vmul.f32 %v3095, 1.442695
      %v3314 = vpow.pop %v3313
      %v3315 = vmul.f32 %v3096, 1.442695
      %v3316 = vpow.pop %v3315
      %v3317 = vmul.f32 %v3097, 1.442695
      %v3318 = vpow.pop %v3317
      %v3319 = vmul.f32 %v3098, 1.442695
      %v3320 = vpow.pop %v3319
      %v3321 = vmul.f32 %v3099, 1.442695
      %v3322 = vpow.pop %v3321
      %v3323 = vmul.f32 %v3100, 1.442695
      %v3324 = vpow.pop %v3323
      %v3325 = vmul.f32 %v3101, 1.442695
      %v3326 = vpow.pop %v3325
      %v3327 = vmul.f32 %v3102, 1.442695
      %v3328 = vpow.pop %v3327
      %v3329 = vmul.f32 %v3103, 1.442695
      %v3330 = vpow.pop %v3329
      %v3331 = vmul.f32 %v3104, 1.442695
      %v3332 = vpow.pop %v3331
      %v3333 = vmul.f32 %v3105, 1.442695
      %v3334 = vpow.pop %v3333
      %v3335 = vmul.f32 %v3106, 1.442695
      %v3336 = vpow.pop %v3335
      %v3337 = vmul.f32 %v3107, 1.442695
      %v3338 = vpow.pop %v3337
      %v3339 = vmul.f32 %v3108, 1.442695
      %v3340 = vpow.pop %v3339
      %v3341 = vmul.f32 %v3109, 1.442695
      %v3342 = vpow.pop %v3341
      %v3343 = vmul.f32 %v3110, 1.442695
      %v3344 = vpow.pop %v3343
      %v3345 = vmul.f32 %v3111, 1.442695
      %v3346 = vpow.pop %v3345
      %v3347 = vmul.f32 %v3112, 1.442695
      %v3348 = vpow.pop %v3347
      %v3349 = vmul.f32 %v3113, 1.442695
      %v3350 = vpow.pop %v3349
      %v3351 = vmul.f32 %v3114, 1.442695
      %v3352 = vpow.pop %v3351
      %v3353 = vmul.f32 %v3115, 1.442695
      %v3354 = vpow.pop %v3353
      %v3355 = vmul.f32 %v3116, 1.442695
      %v3356 = vpow.pop %v3355
      %v3357 = vmul.f32 %v3117, 1.442695
      %v3358 = vpow.pop %v3357
      %v3359 = vmul.f32 %v3118, 1.442695
      %v3360 = vpow.pop %v3359
      %v3361 = vmul.f32 %v3119, 1.442695
      %v3362 = vpow.pop %v3361
      %v3363 = vmul.f32 %v3120, 1.442695
      %v3364 = vpow.pop %v3363
      %v3365 = vmul.f32 %v3121, 1.442695
      %v3366 = vpow.pop %v3365
      %v3367 = vmul.f32 %v3122, 1.442695
      %v3368 = vpow.pop %v3367
      %v3369 = vmul.f32 %v3123, 1.442695
      %v3370 = vpow.pop %v3369
      %v3371 = vmul.f32 %v3124, 1.442695
      %v3372 = vpow.pop %v3371
      %v3373 = vmul.f32 %v3125, 1.442695
      %v3374 = vpow.pop %v3373
      %v3375 = vmul.f32 %v3126, 1.442695
      %v3376 = vpow.pop %v3375
      %v3377 = vmul.f32 %v3127, 1.442695
      %v3378 = vpow.pop %v3377
      %v3379 = vmul.f32 %v3128, 1.442695
      %v3380 = vpow.pop %v3379
      %v3381 = vmul.f32 %v3129, 1.442695
      %v3382 = vpow.pop %v3381
      %v3383 = vmul.f32 %v3130, 1.442695
      %v3384 = vpow.pop %v3383
      %v3385 = vmul.f32 %v3131, 1.442695
      %v3386 = vpow.pop %v3385
      %v3387 = vmul.f32 %v3132, 1.442695
      %v3388 = vpow.pop %v3387
      %v3389 = vadd.f32 %v3134, 1.0
      %v3390 = vadd.f32 %v3136, 1.0
      %v3391 = vadd.f32 %v3138, 1.0
      %v3392 = vadd.f32 %v3140, 1.0
      %v3393 = vadd.f32 %v3142, 1.0
      %v3394 = vadd.f32 %v3144, 1.0
      %v3395 = vadd.f32 %v3146, 1.0
      %v3396 = vadd.f32 %v3148, 1.0
      %v3397 = vadd.f32 %v3150, 1.0
      %v3398 = vadd.f32 %v3152, 1.0
      %v3399 = vadd.f32 %v3154, 1.0
      %v3400 = vadd.f32 %v3156, 1.0
      %v3401 = vadd.f32 %v3158, 1.0
      %v3402 = vadd.f32 %v3160, 1.0
      %v3403 = vadd.f32 %v3162, 1.0
      %v3404 = vadd.f32 %v3164, 1.0
      %v3405 = vadd.f32 %v3166, 1.0
      %v3406 = vadd.f32 %v3168, 1.0
      %v3407 = vadd.f32 %v3170, 1.0
      %v3408 = vadd.f32 %v3172, 1.0
      %v3409 = vadd.f32 %v3174, 1.0
      %v3410 = vadd.f32 %v3176, 1.0
      %v3411 = vadd.f32 %v3178, 1.0
      %v3412 = vadd.f32 %v3180, 1.0
      %v3413 = vadd.f32 %v3182, 1.0
      %v3414 = vadd.f32 %v3184, 1.0
      %v3415 = vadd.f32 %v3186, 1.0
      %v3416 = vadd.f32 %v3188, 1.0
      %v3417 = vadd.f32 %v3190, 1.0
      %v3418 = vadd.f32 %v3192, 1.0
      %v3419 = vadd.f32 %v3194, 1.0
      %v3420 = vadd.f32 %v3196, 1.0
      %v3421 = vadd.f32 %v3198, 1.0
      %v3422 = vadd.f32 %v3200, 1.0
      %v3423 = vadd.f32 %v3202, 1.0
      %v3424 = vadd.f32 %v3204, 1.0
      %v3425 = vadd.f32 %v3206, 1.0
      %v3426 = vadd.f32 %v3208, 1.0
      %v3427 = vadd.f32 %v3210, 1.0
      %v3428 = vadd.f32 %v3212, 1.0
      %v3429 = vadd.f32 %v3214, 1.0
      %v3430 = vadd.f32 %v3216, 1.0
      %v3431 = vadd.f32 %v3218, 1.0
      %v3432 = vadd.f32 %v3220, 1.0
      %v3433 = vadd.f32 %v3222, 1.0
      %v3434 = vadd.f32 %v3224, 1.0
      %v3435 = vadd.f32 %v3226, 1.0
      %v3436 = vadd.f32 %v3228, 1.0
      %v3437 = vadd.f32 %v3230, 1.0
      %v3438 = vadd.f32 %v3232, 1.0
      %v3439 = vadd.f32 %v3234, 1.0
      %v3440 = vadd.f32 %v3236, 1.0
      %v3441 = vadd.f32 %v3238, 1.0
      %v3442 = vadd.f32 %v3240, 1.0
      %v3443 = vadd.f32 %v3242, 1.0
      %v3444 = vadd.f32 %v3244, 1.0
      %v3445 = vadd.f32 %v3246, 1.0
      %v3446 = vadd.f32 %v3248, 1.0
      %v3447 = vadd.f32 %v3250, 1.0
      %v3448 = vadd.f32 %v3252, 1.0
      %v3449 = vadd.f32 %v3254, 1.0
      %v3450 = vadd.f32 %v3256, 1.0
      %v3451 = vadd.f32 %v3258, 1.0
      %v3452 = vadd.f32 %v3260, 1.0
      %v3453 = vadd.f32 %v3262, 1.0
      %v3454 = vadd.f32 %v3264, 1.0
      %v3455 = vadd.f32 %v3266, 1.0
      %v3456 = vadd.f32 %v3268, 1.0
      %v3457 = vadd.f32 %v3270, 1.0
      %v3458 = vadd.f32 %v3272, 1.0
      %v3459 = vadd.f32 %v3274, 1.0
      %v3460 = vadd.f32 %v3276, 1.0
      %v3461 = vadd.f32 %v3278, 1.0
      %v3462 = vadd.f32 %v3280, 1.0
      %v3463 = vadd.f32 %v3282, 1.0
      %v3464 = vadd.f32 %v3284, 1.0
      %v3465 = vadd.f32 %v3286, 1.0
      %v3466 = vadd.f32 %v3288, 1.0
      %v3467 = vadd.f32 %v3290, 1.0
      %v3468 = vadd.f32 %v3292, 1.0
      %v3469 = vadd.f32 %v3294, 1.0
      %v3470 = vadd.f32 %v3296, 1.0
      %v3471 = vadd.f32 %v3298, 1.0
      %v3472 = vadd.f32 %v3300, 1.0
      %v3473 = vadd.f32 %v3302, 1.0
      %v3474 = vadd.f32 %v3304, 1.0
      %v3475 = vadd.f32 %v3306, 1.0
      %v3476 = vadd.f32 %v3308, 1.0
      %v3477 = vadd.f32 %v3310, 1.0
      %v3478 = vadd.f32 %v3312, 1.0
      %v3479 = vadd.f32 %v3314, 1.0
      %v3480 = vadd.f32 %v3316, 1.0
      %v3481 = vadd.f32 %v3318, 1.0
      %v3482 = vadd.f32 %v3320, 1.0
      %v3483 = vadd.f32 %v3322, 1.0
      %v3484 = vadd.f32 %v3324, 1.0
      %v3485 = vadd.f32 %v3326, 1.0
      %v3486 = vadd.f32 %v3328, 1.0
      %v3487 = vadd.f32 %v3330, 1.0
      %v3488 = vadd.f32 %v3332, 1.0
      %v3489 = vadd.f32 %v3334, 1.0
      %v3490 = vadd.f32 %v3336, 1.0
      %v3491 = vadd.f32 %v3338, 1.0
      %v3492 = vadd.f32 %v3340, 1.0
      %v3493 = vadd.f32 %v3342, 1.0
      %v3494 = vadd.f32 %v3344, 1.0
      %v3495 = vadd.f32 %v3346, 1.0
      %v3496 = vadd.f32 %v3348, 1.0
      %v3497 = vadd.f32 %v3350, 1.0
      %v3498 = vadd.f32 %v3352, 1.0
      %v3499 = vadd.f32 %v3354, 1.0
      %v3500 = vadd.f32 %v3356, 1.0
      %v3501 = vadd.f32 %v3358, 1.0
      %v3502 = vadd.f32 %v3360, 1.0
      %v3503 = vadd.f32 %v3362, 1.0
      %v3504 = vadd.f32 %v3364, 1.0
      %v3505 = vadd.f32 %v3366, 1.0
      %v3506 = vadd.f32 %v3368, 1.0
      %v3507 = vadd.f32 %v3370, 1.0
      %v3508 = vadd.f32 %v3372, 1.0
      %v3509 = vadd.f32 %v3374, 1.0
      %v3510 = vadd.f32 %v3376, 1.0
      %v3511 = vadd.f32 %v3378, 1.0
      %v3512 = vadd.f32 %v3380, 1.0
      %v3513 = vadd.f32 %v3382, 1.0
      %v3514 = vadd.f32 %v3384, 1.0
      %v3515 = vadd.f32 %v3386, 1.0
      %v3516 = vadd.f32 %v3388, 1.0
      %v3517 = vrcp.pop %v3389
      %v3518 = vmul.f32 1.0, %v3517
      %v3519 = vrcp.pop %v3390
      %v3520 = vmul.f32 1.0, %v3519
      %v3521 = vrcp.pop %v3391
      %v3522 = vmul.f32 1.0, %v3521
      %v3523 = vrcp.pop %v3392
      %v3524 = vmul.f32 1.0, %v3523
      %v3525 = vrcp.pop %v3393
      %v3526 = vmul.f32 1.0, %v3525
      %v3527 = vrcp.pop %v3394
      %v3528 = vmul.f32 1.0, %v3527
      %v3529 = vrcp.pop %v3395
      %v3530 = vmul.f32 1.0, %v3529
      %v3531 = vrcp.pop %v3396
      %v3532 = vmul.f32 1.0, %v3531
      %v3533 = vrcp.pop %v3397
      %v3534 = vmul.f32 1.0, %v3533
      %v3535 = vrcp.pop %v3398
      %v3536 = vmul.f32 1.0, %v3535
      %v3537 = vrcp.pop %v3399
      %v3538 = vmul.f32 1.0, %v3537
      %v3539 = vrcp.pop %v3400
      %v3540 = vmul.f32 1.0, %v3539
      %v3541 = vrcp.pop %v3401
      %v3542 = vmul.f32 1.0, %v3541
      %v3543 = vrcp.pop %v3402
      %v3544 = vmul.f32 1.0, %v3543
      %v3545 = vrcp.pop %v3403
      %v3546 = vmul.f32 1.0, %v3545
      %v3547 = vrcp.pop %v3404
      %v3548 = vmul.f32 1.0, %v3547
      %v3549 = vrcp.pop %v3405
      %v3550 = vmul.f32 1.0, %v3549
      %v3551 = vrcp.pop %v3406
      %v3552 = vmul.f32 1.0, %v3551
      %v3553 = vrcp.pop %v3407
      %v3554 = vmul.f32 1.0, %v3553
      %v3555 = vrcp.pop %v3408
      %v3556 = vmul.f32 1.0, %v3555
      %v3557 = vrcp.pop %v3409
      %v3558 = vmul.f32 1.0, %v3557
      %v3559 = vrcp.pop %v3410
      %v3560 = vmul.f32 1.0, %v3559
      %v3561 = vrcp.pop %v3411
      %v3562 = vmul.f32 1.0, %v3561
      %v3563 = vrcp.pop %v3412
      %v3564 = vmul.f32 1.0, %v3563
      %v3565 = vrcp.pop %v3413
      %v3566 = vmul.f32 1.0, %v3565
      %v3567 = vrcp.pop %v3414
      %v3568 = vmul.f32 1.0, %v3567
      %v3569 = vrcp.pop %v3415
      %v3570 = vmul.f32 1.0, %v3569
      %v3571 = vrcp.pop %v3416
      %v3572 = vmul.f32 1.0, %v3571
      %v3573 = vrcp.pop %v3417
      %v3574 = vmul.f32 1.0, %v3573
      %v3575 = vrcp.pop %v3418
      %v3576 = vmul.f32 1.0, %v3575
      %v3577 = vrcp.pop %v3419
      %v3578 = vmul.f32 1.0, %v3577
      %v3579 = vrcp.pop %v3420
      %v3580 = vmul.f32 1.0, %v3579
      %v3581 = vrcp.pop %v3421
      %v3582 = vmul.f32 1.0, %v3581
      %v3583 = vrcp.pop %v3422
      %v3584 = vmul.f32 1.0, %v3583
      %v3585 = vrcp.pop %v3423
      %v3586 = vmul.f32 1.0, %v3585
      %v3587 = vrcp.pop %v3424
      %v3588 = vmul.f32 1.0, %v3587
      %v3589 = vrcp.pop %v3425
      %v3590 = vmul.f32 1.0, %v3589
      %v3591 = vrcp.pop %v3426
      %v3592 = vmul.f32 1.0, %v3591
      %v3593 = vrcp.pop %v3427
      %v3594 = vmul.f32 1.0, %v3593
      %v3595 = vrcp.pop %v3428
      %v3596 = vmul.f32 1.0, %v3595
      %v3597 = vrcp.pop %v3429
      %v3598 = vmul.f32 1.0, %v3597
      %v3599 = vrcp.pop %v3430
      %v3600 = vmul.f32 1.0, %v3599
      %v3601 = vrcp.pop %v3431
      %v3602 = vmul.f32 1.0, %v3601
      %v3603 = vrcp.pop %v3432
      %v3604 = vmul.f32 1.0, %v3603
      %v3605 = vrcp.pop %v3433
      %v3606 = vmul.f32 1.0, %v3605
      %v3607 = vrcp.pop %v3434
      %v3608 = vmul.f32 1.0, %v3607
      %v3609 = vrcp.pop %v3435
      %v3610 = vmul.f32 1.0, %v3609
      %v3611 = vrcp.pop %v3436
      %v3612 = vmul.f32 1.0, %v3611
      %v3613 = vrcp.pop %v3437
      %v3614 = vmul.f32 1.0, %v3613
      %v3615 = vrcp.pop %v3438
      %v3616 = vmul.f32 1.0, %v3615
      %v3617 = vrcp.pop %v3439
      %v3618 = vmul.f32 1.0, %v3617
      %v3619 = vrcp.pop %v3440
      %v3620 = vmul.f32 1.0, %v3619
      %v3621 = vrcp.pop %v3441
      %v3622 = vmul.f32 1.0, %v3621
      %v3623 = vrcp.pop %v3442
      %v3624 = vmul.f32 1.0, %v3623
      %v3625 = vrcp.pop %v3443
      %v3626 = vmul.f32 1.0, %v3625
      %v3627 = vrcp.pop %v3444
      %v3628 = vmul.f32 1.0, %v3627
      %v3629 = vrcp.pop %v3445
      %v3630 = vmul.f32 1.0, %v3629
      %v3631 = vrcp.pop %v3446
      %v3632 = vmul.f32 1.0, %v3631
      %v3633 = vrcp.pop %v3447
      %v3634 = vmul.f32 1.0, %v3633
      %v3635 = vrcp.pop %v3448
      %v3636 = vmul.f32 1.0, %v3635
      %v3637 = vrcp.pop %v3449
      %v3638 = vmul.f32 1.0, %v3637
      %v3639 = vrcp.pop %v3450
      %v3640 = vmul.f32 1.0, %v3639
      %v3641 = vrcp.pop %v3451
      %v3642 = vmul.f32 1.0, %v3641
      %v3643 = vrcp.pop %v3452
      %v3644 = vmul.f32 1.0, %v3643
      %v3645 = vrcp.pop %v3453
      %v3646 = vmul.f32 1.0, %v3645
      %v3647 = vrcp.pop %v3454
      %v3648 = vmul.f32 1.0, %v3647
      %v3649 = vrcp.pop %v3455
      %v3650 = vmul.f32 1.0, %v3649
      %v3651 = vrcp.pop %v3456
      %v3652 = vmul.f32 1.0, %v3651
      %v3653 = vrcp.pop %v3457
      %v3654 = vmul.f32 1.0, %v3653
      %v3655 = vrcp.pop %v3458
      %v3656 = vmul.f32 1.0, %v3655
      %v3657 = vrcp.pop %v3459
      %v3658 = vmul.f32 1.0, %v3657
      %v3659 = vrcp.pop %v3460
      %v3660 = vmul.f32 1.0, %v3659
      %v3661 = vrcp.pop %v3461
      %v3662 = vmul.f32 1.0, %v3661
      %v3663 = vrcp.pop %v3462
      %v3664 = vmul.f32 1.0, %v3663
      %v3665 = vrcp.pop %v3463
      %v3666 = vmul.f32 1.0, %v3665
      %v3667 = vrcp.pop %v3464
      %v3668 = vmul.f32 1.0, %v3667
      %v3669 = vrcp.pop %v3465
      %v3670 = vmul.f32 1.0, %v3669
      %v3671 = vrcp.pop %v3466
      %v3672 = vmul.f32 1.0, %v3671
      %v3673 = vrcp.pop %v3467
      %v3674 = vmul.f32 1.0, %v3673
      %v3675 = vrcp.pop %v3468
      %v3676 = vmul.f32 1.0, %v3675
      %v3677 = vrcp.pop %v3469
      %v3678 = vmul.f32 1.0, %v3677
      %v3679 = vrcp.pop %v3470
      %v3680 = vmul.f32 1.0, %v3679
      %v3681 = vrcp.pop %v3471
      %v3682 = vmul.f32 1.0, %v3681
      %v3683 = vrcp.pop %v3472
      %v3684 = vmul.f32 1.0, %v3683
      %v3685 = vrcp.pop %v3473
      %v3686 = vmul.f32 1.0, %v3685
      %v3687 = vrcp.pop %v3474
      %v3688 = vmul.f32 1.0, %v3687
      %v3689 = vrcp.pop %v3475
      %v3690 = vmul.f32 1.0, %v3689
      %v3691 = vrcp.pop %v3476
      %v3692 = vmul.f32 1.0, %v3691
      %v3693 = vrcp.pop %v3477
      %v3694 = vmul.f32 1.0, %v3693
      %v3695 = vrcp.pop %v3478
      %v3696 = vmul.f32 1.0, %v3695
      %v3697 = vrcp.pop %v3479
      %v3698 = vmul.f32 1.0, %v3697
      %v3699 = vrcp.pop %v3480
      %v3700 = vmul.f32 1.0, %v3699
      %v3701 = vrcp.pop %v3481
      %v3702 = vmul.f32 1.0, %v3701
      %v3703 = vrcp.pop %v3482
      %v3704 = vmul.f32 1.0, %v3703
      %v3705 = vrcp.pop %v3483
      %v3706 = vmul.f32 1.0, %v3705
      %v3707 = vrcp.pop %v3484
      %v3708 = vmul.f32 1.0, %v3707
      %v3709 = vrcp.pop %v3485
      %v3710 = vmul.f32 1.0, %v3709
      %v3711 = vrcp.pop %v3486
      %v3712 = vmul.f32 1.0, %v3711
      %v3713 = vrcp.pop %v3487
      %v3714 = vmul.f32 1.0, %v3713
      %v3715 = vrcp.pop %v3488
      %v3716 = vmul.f32 1.0, %v3715
      %v3717 = vrcp.pop %v3489
      %v3718 = vmul.f32 1.0, %v3717
      %v3719 = vrcp.pop %v3490
      %v3720 = vmul.f32 1.0, %v3719
      %v3721 = vrcp.pop %v3491
      %v3722 = vmul.f32 1.0, %v3721
      %v3723 = vrcp.pop %v3492
      %v3724 = vmul.f32 1.0, %v3723
      %v3725 = vrcp.pop %v3493
      %v3726 = vmul.f32 1.0, %v3725
      %v3727 = vrcp.pop %v3494
      %v3728 = vmul.f32 1.0, %v3727
      %v3729 = vrcp.pop %v3495
      %v3730 = vmul.f32 1.0, %v3729
      %v3731 = vrcp.pop %v3496
      %v3732 = vmul.f32 1.0, %v3731
      %v3733 = vrcp.pop %v3497
      %v3734 = vmul.f32 1.0, %v3733
      %v3735 = vrcp.pop %v3498
      %v3736 = vmul.f32 1.0, %v3735
      %v3737 = vrcp.pop %v3499
      %v3738 = vmul.f32 1.0, %v3737
      %v3739 = vrcp.pop %v3500
      %v3740 = vmul.f32 1.0, %v3739
      %v3741 = vrcp.pop %v3501
      %v3742 = vmul.f32 1.0, %v3741
      %v3743 = vrcp.pop %v3502
      %v3744 = vmul.f32 1.0, %v3743
      %v3745 = vrcp.pop %v3503
      %v3746 = vmul.f32 1.0, %v3745
      %v3747 = vrcp.pop %v3504
      %v3748 = vmul.f32 1.0, %v3747
      %v3749 = vrcp.pop %v3505
      %v3750 = vmul.f32 1.0, %v3749
      %v3751 = vrcp.pop %v3506
      %v3752 = vmul.f32 1.0, %v3751
      %v3753 = vrcp.pop %v3507
      %v3754 = vmul.f32 1.0, %v3753
      %v3755 = vrcp.pop %v3508
      %v3756 = vmul.f32 1.0, %v3755
      %v3757 = vrcp.pop %v3509
      %v3758 = vmul.f32 1.0, %v3757
      %v3759 = vrcp.pop %v3510
      %v3760 = vmul.f32 1.0, %v3759
      %v3761 = vrcp.pop %v3511
      %v3762 = vmul.f32 1.0, %v3761
      %v3763 = vrcp.pop %v3512
      %v3764 = vmul.f32 1.0, %v3763
      %v3765 = vrcp.pop %v3513
      %v3766 = vmul.f32 1.0, %v3765
      %v3767 = vrcp.pop %v3514
      %v3768 = vmul.f32 1.0, %v3767
      %v3769 = vrcp.pop %v3515
      %v3770 = vmul.f32 1.0, %v3769
      %v3771 = vrcp.pop %v3516
      %v3772 = vmul.f32 1.0, %v3771
      %3773 = vst.msk [vmem:[%s280] sm:$0xff] %vm490, %v3518
      %3774 = vst.msk [vmem:[%s280 + $0x8] sm:$0xff] %vm490, %v3520
      %3775 = vst.msk [vmem:[%s280 + $0x10] sm:$0xff] %vm490, %v3522
      %3776 = vst.msk [vmem:[%s280 + $0x18] sm:$0xff] %vm490, %v3524
      %3777 = vst.msk [vmem:[%s280 + $0x20] sm:$0xff] %vm490, %v3526
      %3778 = vst.msk [vmem:[%s280 + $0x28] sm:$0xff] %vm490, %v3528
      %3779 = vst.msk [vmem:[%s280 + $0x30] sm:$0xff] %vm490, %v3530
      %3780 = vst.msk [vmem:[%s280 + $0x38] sm:$0xff] %vm490, %v3532
      %3781 = vst.msk [vmem:[%s280 + $0x40] sm:$0xff] %vm490, %v3534
      %3782 = vst.msk [vmem:[%s280 + $0x48] sm:$0xff] %vm490, %v3536
      %3783 = vst.msk [vmem:[%s280 + $0x50] sm:$0xff] %vm490, %v3538
      %3784 = vst.msk [vmem:[%s280 + $0x58] sm:$0xff] %vm490, %v3540
      %3785 = vst.msk [vmem:[%s280 + $0x60] sm:$0xff] %vm490, %v3542
      %3786 = vst.msk [vmem:[%s280 + $0x68] sm:$0xff] %vm490, %v3544
      %3787 = vst.msk [vmem:[%s280 + $0x70] sm:$0xff] %vm490, %v3546
      %3788 = vst.msk [vmem:[%s280 + $0x78] sm:$0xff] %vm490, %v3548
      %3789 = vst.msk [vmem:[%s280 + $0x80] sm:$0xff] %vm490, %v3550
      %3790 = vst.msk [vmem:[%s280 + $0x88] sm:$0xff] %vm490, %v3552
      %3791 = vst.msk [vmem:[%s280 + $0x90] sm:$0xff] %vm490, %v3554
      %3792 = vst.msk [vmem:[%s280 + $0x98] sm:$0xff] %vm490, %v3556
      %3793 = vst.msk [vmem:[%s280 + $0xa0] sm:$0xff] %vm490, %v3558
      %3794 = vst.msk [vmem:[%s280 + $0xa8] sm:$0xff] %vm490, %v3560
      %3795 = vst.msk [vmem:[%s280 + $0xb0] sm:$0xff] %vm490, %v3562
      %3796 = vst.msk [vmem:[%s280 + $0xb8] sm:$0xff] %vm490, %v3564
      %3797 = vst.msk [vmem:[%s280 + $0xc0] sm:$0xff] %vm490, %v3566
      %3798 = vst.msk [vmem:[%s280 + $0xc8] sm:$0xff] %vm490, %v3568
      %3799 = vst.msk [vmem:[%s280 + $0xd0] sm:$0xff] %vm490, %v3570
      %3800 = vst.msk [vmem:[%s280 + $0xd8] sm:$0xff] %vm490, %v3572
      %3801 = vst.msk [vmem:[%s280 + $0xe0] sm:$0xff] %vm490, %v3574
      %3802 = vst.msk [vmem:[%s280 + $0xe8] sm:$0xff] %vm490, %v3576
      %3803 = vst.msk [vmem:[%s280 + $0xf0] sm:$0xff] %vm490, %v3578
      %3804 = vst.msk [vmem:[%s280 + $0xf8] sm:$0xff] %vm490, %v3580
      %3805 = vst.msk [vmem:[%s280 + $0x100] sm:$0xff] %vm490, %v3582
      %3806 = vst.msk [vmem:[%s280 + $0x108] sm:$0xff] %vm490, %v3584
      %3807 = vst.msk [vmem:[%s280 + $0x110] sm:$0xff] %vm490, %v3586
      %3808 = vst.msk [vmem:[%s280 + $0x118] sm:$0xff] %vm490, %v3588
      %3809 = vst.msk [vmem:[%s280 + $0x120] sm:$0xff] %vm490, %v3590
      %3810 = vst.msk [vmem:[%s280 + $0x128] sm:$0xff] %vm490, %v3592
      %3811 = vst.msk [vmem:[%s280 + $0x130] sm:$0xff] %vm490, %v3594
      %3812 = vst.msk [vmem:[%s280 + $0x138] sm:$0xff] %vm490, %v3596
      %3813 = vst.msk [vmem:[%s280 + $0x140] sm:$0xff] %vm490, %v3598
      %3814 = vst.msk [vmem:[%s280 + $0x148] sm:$0xff] %vm490, %v3600
      %3815 = vst.msk [vmem:[%s280 + $0x150] sm:$0xff] %vm490, %v3602
      %3816 = vst.msk [vmem:[%s280 + $0x158] sm:$0xff] %vm490, %v3604
      %3817 = vst.msk [vmem:[%s280 + $0x160] sm:$0xff] %vm490, %v3606
      %3818 = vst.msk [vmem:[%s280 + $0x168] sm:$0xff] %vm490, %v3608
      %3819 = vst.msk [vmem:[%s280 + $0x170] sm:$0xff] %vm490, %v3610
      %3820 = vst.msk [vmem:[%s280 + $0x178] sm:$0xff] %vm490, %v3612
      %3821 = vst.msk [vmem:[%s280 + $0x180] sm:$0xff] %vm490, %v3614
      %3822 = vst.msk [vmem:[%s280 + $0x188] sm:$0xff] %vm490, %v3616
      %3823 = vst.msk [vmem:[%s280 + $0x190] sm:$0xff] %vm490, %v3618
      %3824 = vst.msk [vmem:[%s280 + $0x198] sm:$0xff] %vm490, %v3620
      %3825 = vst.msk [vmem:[%s280 + $0x1a0] sm:$0xff] %vm490, %v3622
      %3826 = vst.msk [vmem:[%s280 + $0x1a8] sm:$0xff] %vm490, %v3624
      %3827 = vst.msk [vmem:[%s280 + $0x1b0] sm:$0xff] %vm490, %v3626
      %3828 = vst.msk [vmem:[%s280 + $0x1b8] sm:$0xff] %vm490, %v3628
      %3829 = vst.msk [vmem:[%s280 + $0x1c0] sm:$0xff] %vm490, %v3630
      %3830 = vst.msk [vmem:[%s280 + $0x1c8] sm:$0xff] %vm490, %v3632
      %3831 = vst.msk [vmem:[%s280 + $0x1d0] sm:$0xff] %vm490, %v3634
      %3832 = vst.msk [vmem:[%s280 + $0x1d8] sm:$0xff] %vm490, %v3636
      %3833 = vst.msk [vmem:[%s280 + $0x1e0] sm:$0xff] %vm490, %v3638
      %3834 = vst.msk [vmem:[%s280 + $0x1e8] sm:$0xff] %vm490, %v3640
      %3835 = vst.msk [vmem:[%s280 + $0x1f0] sm:$0xff] %vm490, %v3642
      %3836 = vst.msk [vmem:[%s280 + $0x1f8] sm:$0xff] %vm490, %v3644
      %3837 = vst.msk [vmem:[%s280 + $0x200] sm:$0xff] %vm490, %v3646
      %3838 = vst.msk [vmem:[%s280 + $0x208] sm:$0xff] %vm490, %v3648
      %3839 = vst.msk [vmem:[%s280 + $0x210] sm:$0xff] %vm490, %v3650
      %3840 = vst.msk [vmem:[%s280 + $0x218] sm:$0xff] %vm490, %v3652
      %3841 = vst.msk [vmem:[%s280 + $0x220] sm:$0xff] %vm490, %v3654
      %3842 = vst.msk [vmem:[%s280 + $0x228] sm:$0xff] %vm490, %v3656
      %3843 = vst.msk [vmem:[%s280 + $0x230] sm:$0xff] %vm490, %v3658
      %3844 = vst.msk [vmem:[%s280 + $0x238] sm:$0xff] %vm490, %v3660
      %3845 = vst.msk [vmem:[%s280 + $0x240] sm:$0xff] %vm490, %v3662
      %3846 = vst.msk [vmem:[%s280 + $0x248] sm:$0xff] %vm490, %v3664
      %3847 = vst.msk [vmem:[%s280 + $0x250] sm:$0xff] %vm490, %v3666
      %3848 = vst.msk [vmem:[%s280 + $0x258] sm:$0xff] %vm490, %v3668
      %3849 = vst.msk [vmem:[%s280 + $0x260] sm:$0xff] %vm490, %v3670
      %3850 = vst.msk [vmem:[%s280 + $0x268] sm:$0xff] %vm490, %v3672
      %3851 = vst.msk [vmem:[%s280 + $0x270] sm:$0xff] %vm490, %v3674
      %3852 = vst.msk [vmem:[%s280 + $0x278] sm:$0xff] %vm490, %v3676
      %3853 = vst.msk [vmem:[%s280 + $0x280] sm:$0xff] %vm490, %v3678
      %3854 = vst.msk [vmem:[%s280 + $0x288] sm:$0xff] %vm490, %v3680
      %3855 = vst.msk [vmem:[%s280 + $0x290] sm:$0xff] %vm490, %v3682
      %3856 = vst.msk [vmem:[%s280 + $0x298] sm:$0xff] %vm490, %v3684
      %3857 = vst.msk [vmem:[%s280 + $0x2a0] sm:$0xff] %vm490, %v3686
      %3858 = vst.msk [vmem:[%s280 + $0x2a8] sm:$0xff] %vm490, %v3688
      %3859 = vst.msk [vmem:[%s280 + $0x2b0] sm:$0xff] %vm490, %v3690
      %3860 = vst.msk [vmem:[%s280 + $0x2b8] sm:$0xff] %vm490, %v3692
      %3861 = vst.msk [vmem:[%s280 + $0x2c0] sm:$0xff] %vm490, %v3694
      %3862 = vst.msk [vmem:[%s280 + $0x2c8] sm:$0xff] %vm490, %v3696
      %3863 = vst.msk [vmem:[%s280 + $0x2d0] sm:$0xff] %vm490, %v3698
      %3864 = vst.msk [vmem:[%s280 + $0x2d8] sm:$0xff] %vm490, %v3700
      %3865 = vst.msk [vmem:[%s280 + $0x2e0] sm:$0xff] %vm490, %v3702
      %3866 = vst.msk [vmem:[%s280 + $0x2e8] sm:$0xff] %vm490, %v3704
      %3867 = vst.msk [vmem:[%s280 + $0x2f0] sm:$0xff] %vm490, %v3706
      %3868 = vst.msk [vmem:[%s280 + $0x2f8] sm:$0xff] %vm490, %v3708
      %3869 = vst.msk [vmem:[%s280 + $0x300] sm:$0xff] %vm490, %v3710
      %3870 = vst.msk [vmem:[%s280 + $0x308] sm:$0xff] %vm490, %v3712
      %3871 = vst.msk [vmem:[%s280 + $0x310] sm:$0xff] %vm490, %v3714
      %3872 = vst.msk [vmem:[%s280 + $0x318] sm:$0xff] %vm490, %v3716
      %3873 = vst.msk [vmem:[%s280 + $0x320] sm:$0xff] %vm490, %v3718
      %3874 = vst.msk [vmem:[%s280 + $0x328] sm:$0xff] %vm490, %v3720
      %3875 = vst.msk [vmem:[%s280 + $0x330] sm:$0xff] %vm490, %v3722
      %3876 = vst.msk [vmem:[%s280 + $0x338] sm:$0xff] %vm490, %v3724
      %3877 = vst.msk [vmem:[%s280 + $0x340] sm:$0xff] %vm490, %v3726
      %3878 = vst.msk [vmem:[%s280 + $0x348] sm:$0xff] %vm490, %v3728
      %3879 = vst.msk [vmem:[%s280 + $0x350] sm:$0xff] %vm490, %v3730
      %3880 = vst.msk [vmem:[%s280 + $0x358] sm:$0xff] %vm490, %v3732
      %3881 = vst.msk [vmem:[%s280 + $0x360] sm:$0xff] %vm490, %v3734
      %3882 = vst.msk [vmem:[%s280 + $0x368] sm:$0xff] %vm490, %v3736
      %3883 = vst.msk [vmem:[%s280 + $0x370] sm:$0xff] %vm490, %v3738
      %3884 = vst.msk [vmem:[%s280 + $0x378] sm:$0xff] %vm490, %v3740
      %3885 = vst.msk [vmem:[%s280 + $0x380] sm:$0xff] %vm490, %v3742
      %3886 = vst.msk [vmem:[%s280 + $0x388] sm:$0xff] %vm490, %v3744
      %3887 = vst.msk [vmem:[%s280 + $0x390] sm:$0xff] %vm490, %v3746
      %3888 = vst.msk [vmem:[%s280 + $0x398] sm:$0xff] %vm490, %v3748
      %3889 = vst.msk [vmem:[%s280 + $0x3a0] sm:$0xff] %vm490, %v3750
      %3890 = vst.msk [vmem:[%s280 + $0x3a8] sm:$0xff] %vm490, %v3752
      %3891 = vst.msk [vmem:[%s280 + $0x3b0] sm:$0xff] %vm490, %v3754
      %3892 = vst.msk [vmem:[%s280 + $0x3b8] sm:$0xff] %vm490, %v3756
      %3893 = vst.msk [vmem:[%s280 + $0x3c0] sm:$0xff] %vm490, %v3758
      %3894 = vst.msk [vmem:[%s280 + $0x3c8] sm:$0xff] %vm490, %v3760
      %3895 = vst.msk [vmem:[%s280 + $0x3d0] sm:$0xff] %vm490, %v3762
      %3896 = vst.msk [vmem:[%s280 + $0x3d8] sm:$0xff] %vm490, %v3764
      %3897 = vst.msk [vmem:[%s280 + $0x3e0] sm:$0xff] %vm490, %v3766
      %3898 = vst.msk [vmem:[%s280 + $0x3e8] sm:$0xff] %vm490, %v3768
      %3899 = vst.msk [vmem:[%s280 + $0x3f0] sm:$0xff] %vm490, %v3770
      %3900 = vst.msk [vmem:[%s280 + $0x3f8] sm:$0xff] %vm490, %v3772
      %s3901 = smul.u32 128, %s18
      %p3902 = scmp.lt.s32.totalorder %s3901, 255
      %s3903 = scalar_select %p3902, %s3901, 255
      %s3904 = smul.addr %s3903, 8
      %s3905 = scalar_lea.vmem %s7, %s3904
      // Predicated region
      $region49: #{dnn_forward.1} parent=47 // pred_check
        %p3906 = pneg %p188
      $region50: #{dnn_forward.1} parent=47 // pred_check_branch
        %3908 = sbr.rel (%p3906) target = $region52
      $region51: #{dnn_forward.1} parent=47 // pred_region
        %s3909 = smul.u32 128, %s18
      $region52: #{dnn_forward.1} parent=47 // pred_fallthru
        _
    $region48: #{dnn_forward.1} parent=5 // pred_fallthru
      _
    %p3910 = scmp.le.s32.totalorder 2, %s13
    // Predicated region
    $region53: #{dnn_forward.1} parent=5 // pred_check
      %p3911 = pneg %p3910
    $region54: #{dnn_forward.1} parent=5 // pred_check_branch
      %3913 = sbr.rel (%p3911) target = $region56
    $region55: #{dnn_forward.1} parent=5 // pred_region
      %s3914 = ssub.s32 %s13, 2
      // Predicated region
      $region57: #{dnn_forward.1} parent=55 // pred_check
        %p3915 = pneg %p194
      $region58: #{dnn_forward.1} parent=55 // pred_check_branch
        %3917 = sbr.rel (%p3915) target = $region60
      $region59: #{dnn_forward.1} parent=55 // pred_region
        %s3918 = smul.u32 128, %s19
        %p3919 = scmp.lt.s32.totalorder %s3918, 255
        %s3920 = scalar_select %p3919, %s3918, 255
        %s3921 = smul.addr %s3920, 8
        %s3922 = scalar_lea.vmem %s7, %s3921
      $region60: #{dnn_forward.1} parent=55 // pred_fallthru
        _
    $region56: #{dnn_forward.1} parent=5 // pred_fallthru
      _
  $region6: #{dnn_forward.1} parent=0 // loop_footer
    %s17 = sadd.s32 1, %s13
  $region7: #{dnn_forward.1} parent=0 // loop_footer_branch
    %12 = sbr.rel target = $region3
  $region8: #{dnn_forward.1} parent=0 // loop_exit
    _

</llo_original>
